<compile_context>
chip_gen: v5e
topology: v5e:2x2
jax: 0.10.0
libtpu: 0.0.40
codegen_flags: <defaults>
</compile_context>

<pallas_src>
import math

import jax
import jax.numpy as jnp
from jax.experimental import pallas as pl
from jax.experimental.pallas import tpu as pltpu


NEG_SLOPE = 0.01          # torch.nn.functional.leaky_relu default negative_slope
LANE = 128                # vreg lane width
HIDDEN_REAL = [128, 350, 600, 350]   # fixed hidden widths from the PyTorch module


def _round_up(n, m):
    return ((n + m - 1) // m) * m


def _ceil_div(a, b):
    return -(-a // b)


# --------------------------------------------------------------------------- #
# Kernel
# --------------------------------------------------------------------------- #
def make_mlp_kernel(out_widths):
    """Build the fused 5-layer MLP kernel for the given padded output widths."""

    def mlp_kernel(x_ref, w1_ref, w2_ref, w3_ref, w4_ref, w5_ref, b_ref, o_ref):
        w_refs = (w1_ref, w2_ref, w3_ref, w4_ref, w5_ref)
        h = x_ref[...]                                  # bf16 (m_tile, 128)
        y = None
        for i, (w_ref, width) in enumerate(zip(w_refs, out_widths)):
            # bf16 x bf16 matmul on the MXU, f32 accumulation.
            y = jnp.dot(h, w_ref[...], preferred_element_type=jnp.float32)
            # f32 bias add from the packed slab (static, lane-aligned slice).
            y = y + b_ref[i:i + 1, :width]
            if i < 4:
                # leaky_relu as a single vmax (0.01*y > y iff y < 0).
                y = jnp.maximum(y, NEG_SLOPE * y)
                h = y.astype(jnp.bfloat16)              # bf16 only at dot input
        o_ref[...] = y                                  # f32, lane-dense store
    return mlp_kernel


# --------------------------------------------------------------------------- #
# Parameter preparation (done once, amortized across forward calls)
# --------------------------------------------------------------------------- #
def prepare_params(params, num_in_positions, num_actions):
    """Pad weights/biases to 128 multiples, cast weights to bf16, pack biases."""
    dims_real = [num_in_positions] + HIDDEN_REAL + [num_actions]
    dims_pad = [_round_up(d, LANE) for d in dims_real]

    ws = []
    b_slab = jnp.zeros((8, max(dims_pad[1:])), jnp.float32)
    for i in range(5):
        w = params[f"w{i + 1}"]                   # (in_real, out_real), f32
        b = params[f"b{i + 1}"]                   # (1, out_real), f32
        wp = jnp.zeros((dims_pad[i], dims_pad[i + 1]), jnp.float32)
        wp = wp.at[:w.shape[0], :w.shape[1]].set(w)
        ws.append(wp.astype(jnp.bfloat16))
        b_slab = b_slab.at[i, :b.shape[1]].set(b[0])

    return {"weights": tuple(ws), "bias_slab": b_slab, "dims_pad": dims_pad}


# --------------------------------------------------------------------------- #
# pallas_call builder
# --------------------------------------------------------------------------- #
def _build_forward(dims_pad, weight_shapes, bias_shape, m_tile, num_tiles,
                   single_buffer_weights):
    d_in_pad, d_out_pad = dims_pad[0], dims_pad[-1]

    # Weights / bias slab: constant block index -> fetched once, stays
    # VMEM-resident across batch tiles.  Buffered(1) drops the (dead) second
    # pipeline buffer (~1.2 MiB of VMEM headroom for larger tiles on v7x).
    resident = {"pipeline_mode": pl.Buffered(1)} if single_buffer_weights else {}

    x_spec = pl.BlockSpec((m_tile, d_in_pad), lambda i: (i, 0))
    w_specs = [pl.BlockSpec(s, lambda i: (0, 0), **resident) for s in weight_shapes]
    b_spec = pl.BlockSpec(bias_shape, lambda i: (0, 0), **resident)
    o_spec = pl.BlockSpec((m_tile, d_out_pad), lambda i: (i, 0))

    return pl.pallas_call(
        make_mlp_kernel(tuple(dims_pad[1:])),
        out_shape=jax.ShapeDtypeStruct((num_tiles * m_tile, d_out_pad), jnp.float32),
        grid=(num_tiles,),
        in_specs=[x_spec] + w_specs + [b_spec],
        out_specs=o_spec,
        compiler_params=pltpu.CompilerParams(
            dimension_semantics=("parallel",),   # batch tiles split across TCs (v7x)
            vmem_limit_bytes=32 << 20,           # inside v7x's 64 MiB physical VMEM
        ),
    )


# --------------------------------------------------------------------------- #
# Forward wrapper
# --------------------------------------------------------------------------- #
def network_forward(x, prepared, num_actions, *, tile_m=512):
    """Run the 5-layer MLP forward pass as one Pallas TPU kernel.

    x:        (batch, num_in_positions) float32
    prepared: output of prepare_params()
    Returns   (batch, num_actions) float32
    """
    weights = prepared["weights"]
    b_slab = prepared["bias_slab"]
    dims_pad = prepared["dims_pad"]
    d_in_pad = dims_pad[0]

    batch = x.shape[0]
    # Balanced batch tiling: ceil(batch/tile_m) near-equal sublane-rounded
    # tiles instead of padding batch up to a multiple of tile_m.
    num_tiles = _ceil_div(batch, tile_m)
    m_tile = _round_up(_ceil_div(batch, num_tiles), 8)
    batch_pad = num_tiles * m_tile

    # bf16 cast BEFORE padding; jnp.pad avoids an f32 scatter intermediate.
    xp = jnp.pad(x.astype(jnp.bfloat16),
                 ((0, batch_pad - batch), (0, d_in_pad - x.shape[1])))

    weight_shapes = tuple(w.shape for w in weights)
    try:
        fwd = _build_forward(dims_pad, weight_shapes, b_slab.shape,
                             m_tile, num_tiles, single_buffer_weights=True)
        out = fwd(xp, *weights, b_slab)
    except Exception:
        # Fallback: default double-buffered weight specs (perf-only difference).
        fwd = _build_forward(dims_pad, weight_shapes, b_slab.shape,
                             m_tile, num_tiles, single_buffer_weights=False)
        out = fwd(xp, *weights, b_slab)

    # TODO(synk): output is mostly padding (121/128 lanes); a bf16 out store
    # would halve writeback at very large batches (argmax-safe).
    return out[:batch, :num_actions]


# --------------------------------------------------------------------------- #
# Init + references
# --------------------------------------------------------------------------- #
def init_params(key, num_in_positions, num_actions):
    """Deterministic init mimicking torch.nn.Linear's default U(-1/sqrt(fan_in), +).

    Weights stored as (in, out) == PyTorch (out, in) transposed; biases (1, out).
    """
    dims = [num_in_positions] + HIDDEN_REAL + [num_actions]
    params = {}
    for i in range(5):
        fan_in, fan_out = dims[i], dims[i + 1]
        key, kw, kb = jax.random.split(key, 3)
        bound = 1.0 / math.sqrt(fan_in)
        params[f"w{i + 1}"] = jax.random.uniform(
            kw, (fan_in, fan_out), jnp.float32, minval=-bound, maxval=bound)
        params[f"b{i + 1}"] = jax.random.uniform(
            kb, (1, fan_out), jnp.float32, minval=-bound, maxval=bound)
    return params


def reference_forward_f32(x, params):
    """Pure-f32 JAX reference (exact PyTorch semantics)."""
    h = x
    for i in range(1, 5):
        h = h @ params[f"w{i}"] + params[f"b{i}"]
        h = jnp.where(h > 0, h, NEG_SLOPE * h)
    return h @ params["w5"] + params["b5"]


def reference_forward_bf16(x, params):
    """JAX reference matching the kernel's bf16-dot / f32-accumulate numerics."""
    h = x
    for i in range(1, 6):
        y = jnp.dot(h.astype(jnp.bfloat16),
                    params[f"w{i}"].astype(jnp.bfloat16),
                    preferred_element_type=jnp.float32)
        y = y + params[f"b{i}"]
        if i < 5:
            h = jnp.where(y > 0, y, NEG_SLOPE * y)
    return y


# --------------------------------------------------------------------------- #
# Main
# --------------------------------------------------------------------------- #
if __name__ == "__main__":
    # Connect-4-style board: 7 cols x 6 rows -> 42 input positions, 7 actions.
    num_cols, num_rows = 7, 6
    num_in_positions = num_cols * num_rows   # 42
    num_actions = num_cols                   # 7
    batch_size = 2

    key = jax.random.PRNGKey(0)
    key, kx = jax.random.split(key)
    x = jax.random.normal(kx, (batch_size, num_in_positions), jnp.float32)

    params = init_params(key, num_in_positions, num_actions)
    prepared = prepare_params(params, num_in_positions, num_actions)

    out = network_forward(x, prepared, num_actions)
    out = jax.block_until_ready(out)

    ref16 = reference_forward_bf16(x, params)
    ref32 = reference_forward_f32(x, params)
    assert out.shape == (batch_size, num_actions)
    assert jnp.allclose(out, ref16, atol=2e-3, rtol=2e-3), "mismatch vs bf16 reference"
    assert jnp.allclose(out, ref32, atol=5e-2, rtol=5e-2), "mismatch vs f32 reference"

    # Medium batch: single balanced tile of 264 rows (was 2x256 = 512 rows).
    x2 = jax.random.normal(jax.random.PRNGKey(1), (260, num_in_positions), jnp.float32)
    out2 = jax.block_until_ready(network_forward(x2, prepared, num_actions))
    ref2 = reference_forward_bf16(x2, params)
    assert out2.shape == (260, num_actions)
    assert jnp.allclose(out2, ref2, atol=2e-3, rtol=2e-3), "mismatch (batched) vs bf16 reference"

    # Large batch: exercises the multi-tile balanced grid (3 tiles of 400 rows).
    x3 = jax.random.normal(jax.random.PRNGKey(2), (1200, num_in_positions), jnp.float32)
    out3 = jax.block_until_ready(network_forward(x3, prepared, num_actions))
    ref3 = reference_forward_bf16(x3, params)
    assert out3.shape == (1200, num_actions)
    assert jnp.allclose(out3, ref3, atol=2e-3, rtol=2e-3), "mismatch (large batch) vs bf16 reference"

    print("KERNEL_OK")
</pallas_src>

<mosaic_0001>
module attributes {stable_mosaic.version = 11 : i64} {
  func.func @mlp_kernel(%arg0: i32, %arg1: memref<8x128xbf16, #tpu.memory_space<vmem>>, %arg2: memref<128x128xbf16, #tpu.memory_space<vmem>>, %arg3: memref<128x384xbf16, #tpu.memory_space<vmem>>, %arg4: memref<384x640xbf16, #tpu.memory_space<vmem>>, %arg5: memref<640x384xbf16, #tpu.memory_space<vmem>>, %arg6: memref<384x128xbf16, #tpu.memory_space<vmem>>, %arg7: memref<8x640xf32, #tpu.memory_space<vmem>>, %arg8: memref<8x128xf32, #tpu.memory_space<vmem>>) attributes {dimension_semantics = [#tpu.dimension_semantics<parallel>], iteration_bounds = array<i64: 1>, scalar_prefetch = 0 : i64, scratch_operands = 0 : i64, tpu.core_type = #tpu.core_type<tc>, window_params = [{transform_indices = @transform_0, window_bounds = array<i64: 8, 128>}, {pipeline_mode = #tpu.pipeline_mode<synchronous>, transform_indices = @transform_1, window_bounds = array<i64: 128, 128>}, {pipeline_mode = #tpu.pipeline_mode<synchronous>, transform_indices = @transform_2, window_bounds = array<i64: 128, 384>}, {pipeline_mode = #tpu.pipeline_mode<synchronous>, transform_indices = @transform_3, window_bounds = array<i64: 384, 640>}, {pipeline_mode = #tpu.pipeline_mode<synchronous>, transform_indices = @transform_4, window_bounds = array<i64: 640, 384>}, {pipeline_mode = #tpu.pipeline_mode<synchronous>, transform_indices = @transform_5, window_bounds = array<i64: 384, 128>}, {pipeline_mode = #tpu.pipeline_mode<synchronous>, transform_indices = @transform_6, window_bounds = array<i64: 8, 640>}, {transform_indices = @transform_7, window_bounds = array<i64: 8, 128>}]} {
    %c0 = arith.constant 0 : index
    %c0_0 = arith.constant 0 : index
    %0 = vector.load %arg1[%c0, %c0_0] : memref<8x128xbf16, #tpu.memory_space<vmem>>, vector<8x128xbf16>
    %c0_1 = arith.constant 0 : index
    %c0_2 = arith.constant 0 : index
    %1 = vector.load %arg2[%c0_1, %c0_2] : memref<128x128xbf16, #tpu.memory_space<vmem>>, vector<128x128xbf16>
    %cst = arith.constant dense<0.000000e+00> : vector<8x128xf32>
    %2 = tpu.matmul %0, %1, %cst {dimension_numbers = #tpu.dot_dimension_numbers<[1], [0], [0], [1], [0, 0, 1, 1], [], []>} : vector<8x128xbf16>, vector<128x128xbf16>, vector<8x128xf32> -> vector<8x128xf32>
    %c0_3 = arith.constant 0 : index
    %c0_4 = arith.constant 0 : index
    %3 = vector.load %arg7[%c0_3, %c0_4] : memref<8x640xf32, #tpu.memory_space<vmem>>, vector<1x128xf32>
    %4 = vector.broadcast %3 : vector<1x128xf32> to vector<8x128xf32>
    %5 = arith.addf %2, %4 : vector<8x128xf32>
    %cst_5 = arith.constant 0.00999999977 : f32
    %6 = vector.broadcast %cst_5 : f32 to vector<8x128xf32>
    %7 = arith.mulf %6, %5 : vector<8x128xf32>
    %8 = arith.maximumf %5, %7 : vector<8x128xf32>
    %9 = arith.truncf %8 : vector<8x128xf32> to vector<8x128xbf16>
    %c0_6 = arith.constant 0 : index
    %c0_7 = arith.constant 0 : index
    %10 = vector.load %arg3[%c0_6, %c0_7] : memref<128x384xbf16, #tpu.memory_space<vmem>>, vector<128x384xbf16>
    %cst_8 = arith.constant dense<0.000000e+00> : vector<8x384xf32>
    %11 = tpu.matmul %9, %10, %cst_8 {dimension_numbers = #tpu.dot_dimension_numbers<[1], [0], [0], [1], [0, 0, 1, 1], [], []>} : vector<8x128xbf16>, vector<128x384xbf16>, vector<8x384xf32> -> vector<8x384xf32>
    %c1 = arith.constant 1 : index
    %c0_9 = arith.constant 0 : index
    %12 = vector.load %arg7[%c1, %c0_9] : memref<8x640xf32, #tpu.memory_space<vmem>>, vector<1x384xf32>
    %13 = vector.broadcast %12 : vector<1x384xf32> to vector<8x384xf32>
    %14 = arith.addf %11, %13 : vector<8x384xf32>
    %cst_10 = arith.constant 0.00999999977 : f32
    %15 = vector.broadcast %cst_10 : f32 to vector<8x384xf32>
    %16 = arith.mulf %15, %14 : vector<8x384xf32>
    %17 = arith.maximumf %14, %16 : vector<8x384xf32>
    %18 = arith.truncf %17 : vector<8x384xf32> to vector<8x384xbf16>
    %c0_11 = arith.constant 0 : index
    %c0_12 = arith.constant 0 : index
    %19 = vector.load %arg4[%c0_11, %c0_12] : memref<384x640xbf16, #tpu.memory_space<vmem>>, vector<384x640xbf16>
    %cst_13 = arith.constant dense<0.000000e+00> : vector<8x640xf32>
    %20 = tpu.matmul %18, %19, %cst_13 {dimension_numbers = #tpu.dot_dimension_numbers<[1], [0], [0], [1], [0, 0, 1, 1], [], []>} : vector<8x384xbf16>, vector<384x640xbf16>, vector<8x640xf32> -> vector<8x640xf32>
    %c2 = arith.constant 2 : index
    %c0_14 = arith.constant 0 : index
    %21 = vector.load %arg7[%c2, %c0_14] : memref<8x640xf32, #tpu.memory_space<vmem>>, vector<1x640xf32>
    %22 = vector.broadcast %21 : vector<1x640xf32> to vector<8x640xf32>
    %23 = arith.addf %20, %22 : vector<8x640xf32>
    %cst_15 = arith.constant 0.00999999977 : f32
    %24 = vector.broadcast %cst_15 : f32 to vector<8x640xf32>
    %25 = arith.mulf %24, %23 : vector<8x640xf32>
    %26 = arith.maximumf %23, %25 : vector<8x640xf32>
    %27 = arith.truncf %26 : vector<8x640xf32> to vector<8x640xbf16>
    %c0_16 = arith.constant 0 : index
    %c0_17 = arith.constant 0 : index
    %28 = vector.load %arg5[%c0_16, %c0_17] : memref<640x384xbf16, #tpu.memory_space<vmem>>, vector<640x384xbf16>
    %cst_18 = arith.constant dense<0.000000e+00> : vector<8x384xf32>
    %29 = tpu.matmul %27, %28, %cst_18 {dimension_numbers = #tpu.dot_dimension_numbers<[1], [0], [0], [1], [0, 0, 1, 1], [], []>} : vector<8x640xbf16>, vector<640x384xbf16>, vector<8x384xf32> -> vector<8x384xf32>
    %c3 = arith.constant 3 : index
    %c0_19 = arith.constant 0 : index
    %30 = vector.load %arg7[%c3, %c0_19] : memref<8x640xf32, #tpu.memory_space<vmem>>, vector<1x384xf32>
    %31 = vector.broadcast %30 : vector<1x384xf32> to vector<8x384xf32>
    %32 = arith.addf %29, %31 : vector<8x384xf32>
    %cst_20 = arith.constant 0.00999999977 : f32
    %33 = vector.broadcast %cst_20 : f32 to vector<8x384xf32>
    %34 = arith.mulf %33, %32 : vector<8x384xf32>
    %35 = arith.maximumf %32, %34 : vector<8x384xf32>
    %36 = arith.truncf %35 : vector<8x384xf32> to vector<8x384xbf16>
    %c0_21 = arith.constant 0 : index
    %c0_22 = arith.constant 0 : index
    %37 = vector.load %arg6[%c0_21, %c0_22] : memref<384x128xbf16, #tpu.memory_space<vmem>>, vector<384x128xbf16>
    %cst_23 = arith.constant dense<0.000000e+00> : vector<8x128xf32>
    %38 = tpu.matmul %36, %37, %cst_23 {dimension_numbers = #tpu.dot_dimension_numbers<[1], [0], [0], [1], [0, 0, 1, 1], [], []>} : vector<8x384xbf16>, vector<384x128xbf16>, vector<8x128xf32> -> vector<8x128xf32>
    %c4 = arith.constant 4 : index
    %c0_24 = arith.constant 0 : index
    %39 = vector.load %arg7[%c4, %c0_24] : memref<8x640xf32, #tpu.memory_space<vmem>>, vector<1x128xf32>
    %40 = vector.broadcast %39 : vector<1x128xf32> to vector<8x128xf32>
    %41 = arith.addf %38, %40 : vector<8x128xf32>
    %c0_25 = arith.constant 0 : index
    %c0_26 = arith.constant 0 : index
    %42 = vector.load %arg8[%c0_25, %c0_26] : memref<8x128xf32, #tpu.memory_space<vmem>>, vector<8x128xf32>
    tpu.vector_store %arg8[%c0_25, %c0_26], %41 {strides = array<i32>} : memref<8x128xf32, #tpu.memory_space<vmem>>, vector<8x128xf32>,
    return
  }
  func.func @transform_0(%arg0: i32) -> (i32, i32) {
    %c0_i32 = arith.constant 0 : i32
    %c0_i32_0 = arith.constant 0 : i32
    return %arg0, %c0_i32 : i32, i32
  }
  func.func @transform_1(%arg0: i32) -> (i32, i32) {
    %c0_i32 = arith.constant 0 : i32
    %c0_i32_0 = arith.constant 0 : i32
    %c0_i32_1 = arith.constant 0 : i32
    return %c0_i32, %c0_i32_0 : i32, i32
  }
  func.func @transform_2(%arg0: i32) -> (i32, i32) {
    %c0_i32 = arith.constant 0 : i32
    %c0_i32_0 = arith.constant 0 : i32
    %c0_i32_1 = arith.constant 0 : i32
    return %c0_i32, %c0_i32_0 : i32, i32
  }
  func.func @transform_3(%arg0: i32) -> (i32, i32) {
    %c0_i32 = arith.constant 0 : i32
    %c0_i32_0 = arith.constant 0 : i32
    %c0_i32_1 = arith.constant 0 : i32
    return %c0_i32, %c0_i32_0 : i32, i32
  }
  func.func @transform_4(%arg0: i32) -> (i32, i32) {
    %c0_i32 = arith.constant 0 : i32
    %c0_i32_0 = arith.constant 0 : i32
    %c0_i32_1 = arith.constant 0 : i32
    return %c0_i32, %c0_i32_0 : i32, i32
  }
  func.func @transform_5(%arg0: i32) -> (i32, i32) {
    %c0_i32 = arith.constant 0 : i32
    %c0_i32_0 = arith.constant 0 : i32
    %c0_i32_1 = arith.constant 0 : i32
    return %c0_i32, %c0_i32_0 : i32, i32
  }
  func.func @transform_6(%arg0: i32) -> (i32, i32) {
    %c0_i32 = arith.constant 0 : i32
    %c0_i32_0 = arith.constant 0 : i32
    %c0_i32_1 = arith.constant 0 : i32
    return %c0_i32, %c0_i32_0 : i32, i32
  }
  func.func @transform_7(%arg0: i32) -> (i32, i32) {
    %c0_i32 = arith.constant 0 : i32
    %c0_i32_0 = arith.constant 0 : i32
    return %arg0, %c0_i32 : i32, i32
  }
}

module attributes {stable_mosaic.version = 11 : i64} {
  func.func @mlp_kernel(%arg0: i32, %arg1: memref<8x128xbf16, #tpu.memory_space<vmem>>, %arg2: memref<128x128xbf16, #tpu.memory_space<vmem>>, %arg3: memref<128x384xbf16, #tpu.memory_space<vmem>>, %arg4: memref<384x640xbf16, #tpu.memory_space<vmem>>, %arg5: memref<640x384xbf16, #tpu.memory_space<vmem>>, %arg6: memref<384x128xbf16, #tpu.memory_space<vmem>>, %arg7: memref<8x640xf32, #tpu.memory_space<vmem>>, %arg8: memref<8x128xf32, #tpu.memory_space<vmem>>) attributes {dimension_semantics = [#tpu.dimension_semantics<parallel>], iteration_bounds = array<i64: 1>, scalar_prefetch = 0 : i64, scratch_operands = 0 : i64, tpu.core_type = #tpu.core_type<tc>, window_params = [{transform_indices = @transform_0, window_bounds = array<i64: 8, 128>}, {pipeline_mode = #tpu.pipeline_mode<synchronous>, transform_indices = @transform_1, window_bounds = array<i64: 128, 128>}, {pipeline_mode = #tpu.pipeline_mode<synchronous>, transform_indices = @transform_2, window_bounds = array<i64: 128, 384>}, {pipeline_mode = #tpu.pipeline_mode<synchronous>, transform_indices = @transform_3, window_bounds = array<i64: 384, 640>}, {pipeline_mode = #tpu.pipeline_mode<synchronous>, transform_indices = @transform_4, window_bounds = array<i64: 640, 384>}, {pipeline_mode = #tpu.pipeline_mode<synchronous>, transform_indices = @transform_5, window_bounds = array<i64: 384, 128>}, {pipeline_mode = #tpu.pipeline_mode<synchronous>, transform_indices = @transform_6, window_bounds = array<i64: 8, 640>}, {transform_indices = @transform_7, window_bounds = array<i64: 8, 128>}]} {
    %c0 = arith.constant 0 : index
    %c0_0 = arith.constant 0 : index
    %0 = vector.load %arg1[%c0, %c0_0] : memref<8x128xbf16, #tpu.memory_space<vmem>>, vector<8x128xbf16>
    %c0_1 = arith.constant 0 : index
    %c0_2 = arith.constant 0 : index
    %1 = vector.load %arg2[%c0_1, %c0_2] : memref<128x128xbf16, #tpu.memory_space<vmem>>, vector<128x128xbf16>
    %cst = arith.constant dense<0.000000e+00> : vector<8x128xf32>
    %2 = tpu.matmul %0, %1, %cst {dimension_numbers = #tpu.dot_dimension_numbers<[1], [0], [0], [1], [0, 0, 1, 1], [], []>} : vector<8x128xbf16>, vector<128x128xbf16>, vector<8x128xf32> -> vector<8x128xf32>
    %c0_3 = arith.constant 0 : index
    %c0_4 = arith.constant 0 : index
    %3 = vector.load %arg7[%c0_3, %c0_4] : memref<8x640xf32, #tpu.memory_space<vmem>>, vector<1x128xf32>
    %4 = vector.broadcast %3 : vector<1x128xf32> to vector<8x128xf32>
    %5 = arith.addf %2, %4 : vector<8x128xf32>
    %cst_5 = arith.constant 0.00999999977 : f32
    %6 = vector.broadcast %cst_5 : f32 to vector<8x128xf32>
    %7 = arith.mulf %6, %5 : vector<8x128xf32>
    %8 = arith.maximumf %5, %7 : vector<8x128xf32>
    %9 = arith.truncf %8 : vector<8x128xf32> to vector<8x128xbf16>
    %c0_6 = arith.constant 0 : index
    %c0_7 = arith.constant 0 : index
    %10 = vector.load %arg3[%c0_6, %c0_7] : memref<128x384xbf16, #tpu.memory_space<vmem>>, vector<128x384xbf16>
    %cst_8 = arith.constant dense<0.000000e+00> : vector<8x384xf32>
    %11 = tpu.matmul %9, %10, %cst_8 {dimension_numbers = #tpu.dot_dimension_numbers<[1], [0], [0], [1], [0, 0, 1, 1], [], []>} : vector<8x128xbf16>, vector<128x384xbf16>, vector<8x384xf32> -> vector<8x384xf32>
    %c1 = arith.constant 1 : index
    %c0_9 = arith.constant 0 : index
    %12 = vector.load %arg7[%c1, %c0_9] : memref<8x640xf32, #tpu.memory_space<vmem>>, vector<1x384xf32>
    %13 = vector.broadcast %12 : vector<1x384xf32> to vector<8x384xf32>
    %14 = arith.addf %11, %13 : vector<8x384xf32>
    %cst_10 = arith.constant 0.00999999977 : f32
    %15 = vector.broadcast %cst_10 : f32 to vector<8x384xf32>
    %16 = arith.mulf %15, %14 : vector<8x384xf32>
    %17 = arith.maximumf %14, %16 : vector<8x384xf32>
    %18 = arith.truncf %17 : vector<8x384xf32> to vector<8x384xbf16>
    %c0_11 = arith.constant 0 : index
    %c0_12 = arith.constant 0 : index
    %19 = vector.load %arg4[%c0_11, %c0_12] : memref<384x640xbf16, #tpu.memory_space<vmem>>, vector<384x640xbf16>
    %cst_13 = arith.constant dense<0.000000e+00> : vector<8x640xf32>
    %20 = tpu.matmul %18, %19, %cst_13 {dimension_numbers = #tpu.dot_dimension_numbers<[1], [0], [0], [1], [0, 0, 1, 1], [], []>} : vector<8x384xbf16>, vector<384x640xbf16>, vector<8x640xf32> -> vector<8x640xf32>
    %c2 = arith.constant 2 : index
    %c0_14 = arith.constant 0 : index
    %21 = vector.load %arg7[%c2, %c0_14] : memref<8x640xf32, #tpu.memory_space<vmem>>, vector<1x640xf32>
    %22 = vector.broadcast %21 : vector<1x640xf32> to vector<8x640xf32>
    %23 = arith.addf %20, %22 : vector<8x640xf32>
    %cst_15 = arith.constant 0.00999999977 : f32
    %24 = vector.broadcast %cst_15 : f32 to vector<8x640xf32>
    %25 = arith.mulf %24, %23 : vector<8x640xf32>
    %26 = arith.maximumf %23, %25 : vector<8x640xf32>
    %27 = arith.truncf %26 : vector<8x640xf32> to vector<8x640xbf16>
    %c0_16 = arith.constant 0 : index
    %c0_17 = arith.constant 0 : index
    %28 = vector.load %arg5[%c0_16, %c0_17] : memref<640x384xbf16, #tpu.memory_space<vmem>>, vector<640x384xbf16>
    %cst_18 = arith.constant dense<0.000000e+00> : vector<8x384xf32>
    %29 = tpu.matmul %27, %28, %cst_18 {dimension_numbers = #tpu.dot_dimension_numbers<[1], [0], [0], [1], [0, 0, 1, 1], [], []>} : vector<8x640xbf16>, vector<640x384xbf16>, vector<8x384xf32> -> vector<8x384xf32>
    %c3 = arith.constant 3 : index
    %c0_19 = arith.constant 0 : index
    %30 = vector.load %arg7[%c3, %c0_19] : memref<8x640xf32, #tpu.memory_space<vmem>>, vector<1x384xf32>
    %31 = vector.broadcast %30 : vector<1x384xf32> to vector<8x384xf32>
    %32 = arith.addf %29, %31 : vector<8x384xf32>
    %cst_20 = arith.constant 0.00999999977 : f32
    %33 = vector.broadcast %cst_20 : f32 to vector<8x384xf32>
    %34 = arith.mulf %33, %32 : vector<8x384xf32>
    %35 = arith.maximumf %32, %34 : vector<8x384xf32>
    %36 = arith.truncf %35 : vector<8x384xf32> to vector<8x384xbf16>
    %c0_21 = arith.constant 0 : index
    %c0_22 = arith.constant 0 : index
    %37 = vector.load %arg6[%c0_21, %c0_22] : memref<384x128xbf16, #tpu.memory_space<vmem>>, vector<384x128xbf16>
    %cst_23 = arith.constant dense<0.000000e+00> : vector<8x128xf32>
    %38 = tpu.matmul %36, %37, %cst_23 {dimension_numbers = #tpu.dot_dimension_numbers<[1], [0], [0], [1], [0, 0, 1, 1], [], []>} : vector<8x384xbf16>, vector<384x128xbf16>, vector<8x128xf32> -> vector<8x128xf32>
    %c4 = arith.constant 4 : index
    %c0_24 = arith.constant 0 : index
    %39 = vector.load %arg7[%c4, %c0_24] : memref<8x640xf32, #tpu.memory_space<vmem>>, vector<1x128xf32>
    %40 = vector.broadcast %39 : vector<1x128xf32> to vector<8x128xf32>
    %41 = arith.addf %38, %40 : vector<8x128xf32>
    %c0_25 = arith.constant 0 : index
    %c0_26 = arith.constant 0 : index
    %42 = vector.load %arg8[%c0_25, %c0_26] : memref<8x128xf32, #tpu.memory_space<vmem>>, vector<8x128xf32>
    tpu.vector_store %arg8[%c0_25, %c0_26], %41 {strides = array<i32>} : memref<8x128xf32, #tpu.memory_space<vmem>>, vector<8x128xf32>,
    return
  }
  func.func @transform_0(%arg0: i32) -> (i32, i32) {
    %c0_i32 = arith.constant 0 : i32
    %c0_i32_0 = arith.constant 0 : i32
    return %arg0, %c0_i32 : i32, i32
  }
  func.func @transform_1(%arg0: i32) -> (i32, i32) {
    %c0_i32 = arith.constant 0 : i32
    %c0_i32_0 = arith.constant 0 : i32
    %c0_i32_1 = arith.constant 0 : i32
    return %c0_i32, %c0_i32_0 : i32, i32
  }
  func.func @transform_2(%arg0: i32) -> (i32, i32) {
    %c0_i32 = arith.constant 0 : i32
    %c0_i32_0 = arith.constant 0 : i32
    %c0_i32_1 = arith.constant 0 : i32
    return %c0_i32, %c0_i32_0 : i32, i32
  }
  func.func @transform_3(%arg0: i32) -> (i32, i32) {
    %c0_i32 = arith.constant 0 : i32
    %c0_i32_0 = arith.constant 0 : i32
    %c0_i32_1 = arith.constant 0 : i32
    return %c0_i32, %c0_i32_0 : i32, i32
  }
  func.func @transform_4(%arg0: i32) -> (i32, i32) {
    %c0_i32 = arith.constant 0 : i32
    %c0_i32_0 = arith.constant 0 : i32
    %c0_i32_1 = arith.constant 0 : i32
    return %c0_i32, %c0_i32_0 : i32, i32
  }
  func.func @transform_5(%arg0: i32) -> (i32, i32) {
    %c0_i32 = arith.constant 0 : i32
    %c0_i32_0 = arith.constant 0 : i32
    %c0_i32_1 = arith.constant 0 : i32
    return %c0_i32, %c0_i32_0 : i32, i32
  }
  func.func @transform_6(%arg0: i32) -> (i32, i32) {
    %c0_i32 = arith.constant 0 : i32
    %c0_i32_0 = arith.constant 0 : i32
    %c0_i32_1 = arith.constant 0 : i32
    return %c0_i32, %c0_i32_0 : i32, i32
  }
  func.func @transform_7(%arg0: i32) -> (i32, i32) {
    %c0_i32 = arith.constant 0 : i32
    %c0_i32_0 = arith.constant 0 : i32
    return %arg0, %c0_i32 : i32, i32
  }
}

</mosaic_0001>

<llo_original>
// kernel: tpu_custom_call.1
$region0: #{tpu_custom_call.1}
  #allocation0 [shape = 'u32[]', space=smem, size = 0x4, offset = 0x4, fixed_abs, tag = 'smem constant byte address 0x4 - core index']
  #allocation1 [shape = 'u32[72,128]{1,0:T(1,128)}', space=vmem, size = 0x9000, scoped, tag = 'internal scratch']
  %s0 = inlined_call_operand.hbm [shape: bf16[8,128], index: 0, kind: input, shape index: {}]
  %s1 = inlined_call_operand.hbm [shape: bf16[128,128], index: 1, kind: input, shape index: {}]
  %s2 = inlined_call_operand.hbm [shape: bf16[128,384], index: 2, kind: input, shape index: {}]
  %s3 = inlined_call_operand.hbm [shape: bf16[384,640], index: 3, kind: input, shape index: {}]
  %s4 = inlined_call_operand.hbm [shape: bf16[640,384], index: 4, kind: input, shape index: {}]
  %s5 = inlined_call_operand.hbm [shape: bf16[384,128], index: 5, kind: input, shape index: {}]
  %s6 = inlined_call_operand.hbm [shape: f32[8,640], index: 6, kind: input, shape index: {}]
  %s7 = inlined_call_operand.hbm [shape: f32[8,128], index: 7, kind: output, shape index: {}]
  %s8 = sld [smem:[#allocation0]]
  $region66: #{tpu_custom_call.1} parent=0
    _
  %s10 = ssub.s32 1, %s8
  %s11 = scalar_select 0, %s10, %s8
  $region1: #{tpu_custom_call.1} parent=0
    #allocation2 [shape = 'u8[2048]{0}', space=vmem, size = 0x800, scoped, tag = 'input window, operand 0, single buffered']
    #allocation3 [shape = 's32[1]{0}', space=sflag, size = 0x4, scoped, tag = 'scoped memory for tpu_custom_call.1']
    #allocation4 [shape = 's32[1]{0}', space=sflag, size = 0x4, scoped, tag = 'scoped memory for tpu_custom_call.1']
    #allocation5 [shape = 'u8[32768]{0}', space=vmem, size = 0x8000, scoped, tag = 'input window, operand 1, single buffered']
    #allocation6 [shape = 's32[1]{0}', space=sflag, size = 0x4, scoped, tag = 'scoped memory for tpu_custom_call.1']
    #allocation7 [shape = 'u8[98304]{0}', space=vmem, size = 0x18000, scoped, tag = 'input window, operand 2, single buffered']
    #allocation8 [shape = 'u8[491520]{0}', space=vmem, size = 0x78000, scoped, tag = 'input window, operand 3, single buffered']
    #allocation9 [shape = 's32[1]{0}', space=sflag, size = 0x4, scoped, tag = 'scoped memory for tpu_custom_call.1']
    #allocation10 [shape = 'u8[491520]{0}', space=vmem, size = 0x78000, scoped, tag = 'input window, operand 4, single buffered']
    #allocation11 [shape = 'u8[98304]{0}', space=vmem, size = 0x18000, scoped, tag = 'input window, operand 5, single buffered']
    #allocation12 [shape = 's32[1]{0}', space=sflag, size = 0x4, scoped, tag = 'scoped memory for tpu_custom_call.1']
    #allocation13 [shape = 'u8[20480]{0}', space=vmem, size = 0x5000, scoped, tag = 'input window, operand 6, single buffered']
    #allocation14 [shape = 'u8[4096]{0}', space=vmem, size = 0x1000, scoped, tag = 'output window, operand 0, single buffered']
    %12 = vsyncpa [#allocation3], 0
    %13 = vsyncpa [#allocation6], 0
    %14 = vsyncpa [#allocation9], 0
    %15 = vsyncpa [#allocation12], 0
    %16 = vsyncpa [#allocation4], 0
    // Predicated region
    $region2: #{tpu_custom_call.1} parent=1 // pred_check
      _
    $region3: #{tpu_custom_call.1} parent=1 // pred_check_branch
      %18 = sbr.rel (0) target = $region5
    $region4: #{tpu_custom_call.1} parent=1 // pred_region
      %20 = vsyncadd [#allocation3], 0
      %s22 = sshll.u32 %s0, 4
      %s23 = int_to_ptr.hbm [resolvable:$true] %s22
      %s24 = sshll.u32 [#allocation2], 4
      %s25 = int_to_ptr.vmem [resolvable:$true] %s24
      %27 = dma.hbm_to_vmem [thread:$0]  %s23, 64, %s25, [#allocation3]
    $region5: #{tpu_custom_call.1} parent=1 // pred_fallthru
      _
    // Predicated region
    $region6: #{tpu_custom_call.1} parent=1 // pred_check
      _
    $region7: #{tpu_custom_call.1} parent=1 // pred_check_branch
      %29 = sbr.rel (0) target = $region9
    $region8: #{tpu_custom_call.1} parent=1 // pred_region
      %31 = vsyncadd [#allocation6], 0
      %s32 = sshll.u32 %s1, 4
      %s33 = int_to_ptr.hbm [resolvable:$true] %s32
      %s34 = sshll.u32 [#allocation5], 4
      %s35 = int_to_ptr.vmem [resolvable:$true] %s34
      %40 = dma.hbm_to_vmem [thread:$0]  %s33, 1024, %s35, [#allocation6], 64, 64, 4
    $region9: #{tpu_custom_call.1} parent=1 // pred_fallthru
      _
    // Predicated region
    $region10: #{tpu_custom_call.1} parent=1 // pred_check
      _
    $region11: #{tpu_custom_call.1} parent=1 // pred_check_branch
      %42 = sbr.rel (0) target = $region13
    $region12: #{tpu_custom_call.1} parent=1 // pred_region
      %44 = vsyncadd [#allocation6], 0
      %s45 = sshll.u32 %s2, 4
      %s46 = int_to_ptr.hbm [resolvable:$true] %s45
      %s47 = sshll.u32 [#allocation7], 4
      %s48 = int_to_ptr.vmem [resolvable:$true] %s47
      %53 = dma.hbm_to_vmem [thread:$0]  %s46, 3072, %s48, [#allocation6], 192, 192, 12
    $region13: #{tpu_custom_call.1} parent=1 // pred_fallthru
      _
    // Predicated region
    $region14: #{tpu_custom_call.1} parent=1 // pred_check
      _
    $region15: #{tpu_custom_call.1} parent=1 // pred_check_branch
      %55 = sbr.rel (0) target = $region17
    $region16: #{tpu_custom_call.1} parent=1 // pred_region
      %57 = vsyncadd [#allocation9], 0
      %s58 = sshll.u32 %s3, 4
      %s59 = int_to_ptr.hbm [resolvable:$true] %s58
      %s60 = sshll.u32 [#allocation8], 4
      %s61 = int_to_ptr.vmem [resolvable:$true] %s60
      %66 = dma.hbm_to_vmem [thread:$0]  %s59, 15360, %s61, [#allocation9], 320, 320, 20
    $region17: #{tpu_custom_call.1} parent=1 // pred_fallthru
      _
    // Predicated region
    $region18: #{tpu_custom_call.1} parent=1 // pred_check
      _
    $region19: #{tpu_custom_call.1} parent=1 // pred_check_branch
      %68 = sbr.rel (0) target = $region21
    $region20: #{tpu_custom_call.1} parent=1 // pred_region
      %70 = vsyncadd [#allocation9], 0
      %s71 = sshll.u32 %s4, 4
      %s72 = int_to_ptr.hbm [resolvable:$true] %s71
      %s73 = sshll.u32 [#allocation10], 4
      %s74 = int_to_ptr.vmem [resolvable:$true] %s73
      %79 = dma.hbm_to_vmem [thread:$0]  %s72, 15360, %s74, [#allocation9], 192, 192, 12
    $region21: #{tpu_custom_call.1} parent=1 // pred_fallthru
      _
    // Predicated region
    $region22: #{tpu_custom_call.1} parent=1 // pred_check
      _
    $region23: #{tpu_custom_call.1} parent=1 // pred_check_branch
      %81 = sbr.rel (0) target = $region25
    $region24: #{tpu_custom_call.1} parent=1 // pred_region
      %83 = vsyncadd [#allocation12], 0
      %s84 = sshll.u32 %s5, 4
      %s85 = int_to_ptr.hbm [resolvable:$true] %s84
      %s86 = sshll.u32 [#allocation11], 4
      %s87 = int_to_ptr.vmem [resolvable:$true] %s86
      %92 = dma.hbm_to_vmem [thread:$0]  %s85, 3072, %s87, [#allocation12], 64, 64, 4
    $region25: #{tpu_custom_call.1} parent=1 // pred_fallthru
      _
    // Predicated region
    $region26: #{tpu_custom_call.1} parent=1 // pred_check
      _
    $region27: #{tpu_custom_call.1} parent=1 // pred_check_branch
      %94 = sbr.rel (0) target = $region29
    $region28: #{tpu_custom_call.1} parent=1 // pred_region
      %96 = vsyncadd [#allocation12], 0
      %s98 = sshll.u32 %s6, 4
      %s99 = int_to_ptr.hbm [resolvable:$true] %s98
      %s100 = sshll.u32 [#allocation13], 4
      %s101 = int_to_ptr.vmem [resolvable:$true] %s100
      %103 = dma.hbm_to_vmem [thread:$0]  %s99, 640, %s101, [#allocation12]
    $region29: #{tpu_custom_call.1} parent=1 // pred_fallthru
      _
    // Predicated region
    $region30: #{tpu_custom_call.1} parent=1 // pred_check
      _
    $region31: #{tpu_custom_call.1} parent=1 // pred_check_branch
      %105 = sbr.rel (0) target = $region33
    $region32: #{tpu_custom_call.1} parent=1 // pred_region
      %107 = dma.done [#allocation3], 64
    $region33: #{tpu_custom_call.1} parent=1 // pred_fallthru
      _
    // Predicated region
    $region34: #{tpu_custom_call.1} parent=1 // pred_check
      _
    $region35: #{tpu_custom_call.1} parent=1 // pred_check_branch
      %109 = sbr.rel (0) target = $region37
    $region36: #{tpu_custom_call.1} parent=1 // pred_region
      %111 = dma.done [#allocation6], 1024
    $region37: #{tpu_custom_call.1} parent=1 // pred_fallthru
      _
    // Predicated region
    $region38: #{tpu_custom_call.1} parent=1 // pred_check
      _
    $region39: #{tpu_custom_call.1} parent=1 // pred_check_branch
      %113 = sbr.rel (0) target = $region41
    $region40: #{tpu_custom_call.1} parent=1 // pred_region
      %115 = dma.done [#allocation6], 3072
    $region41: #{tpu_custom_call.1} parent=1 // pred_fallthru
      _
    // Predicated region
    $region42: #{tpu_custom_call.1} parent=1 // pred_check
      _
    $region43: #{tpu_custom_call.1} parent=1 // pred_check_branch
      %117 = sbr.rel (0) target = $region45
    $region44: #{tpu_custom_call.1} parent=1 // pred_region
      %119 = dma.done [#allocation9], 15360
    $region45: #{tpu_custom_call.1} parent=1 // pred_fallthru
      _
    // Predicated region
    $region46: #{tpu_custom_call.1} parent=1 // pred_check
      _
    $region47: #{tpu_custom_call.1} parent=1 // pred_check_branch
      %121 = sbr.rel (0) target = $region49
    $region48: #{tpu_custom_call.1} parent=1 // pred_region
      %123 = dma.done [#allocation9], 15360
    $region49: #{tpu_custom_call.1} parent=1 // pred_fallthru
      _
    // Predicated region
    $region50: #{tpu_custom_call.1} parent=1 // pred_check
      _
    $region51: #{tpu_custom_call.1} parent=1 // pred_check_branch
      %125 = sbr.rel (0) target = $region53
    $region52: #{tpu_custom_call.1} parent=1 // pred_region
      %127 = dma.done [#allocation12], 3072
    $region53: #{tpu_custom_call.1} parent=1 // pred_fallthru
      _
    // Predicated region
    $region54: #{tpu_custom_call.1} parent=1 // pred_check
      _
    $region55: #{tpu_custom_call.1} parent=1 // pred_check_branch
      %129 = sbr.rel (0) target = $region57
    $region56: #{tpu_custom_call.1} parent=1 // pred_region
      %131 = dma.done [#allocation12], 640
    $region57: #{tpu_custom_call.1} parent=1 // pred_fallthru
      _
    %v132 = vld [vmem:[#allocation2] sm:$0xf]
    %v133 = vld [vmem:[#allocation5] sm:$0xf]
    %v134 = vld [vmem:[#allocation5 + $0x4] sm:$0xf]
    %v135 = vld [vmem:[#allocation5 + $0x8] sm:$0xf]
    %v136 = vld [vmem:[#allocation5 + $0xc] sm:$0xf]
    %v137 = vld [vmem:[#allocation5 + $0x10] sm:$0xf]
    %v138 = vld [vmem:[#allocation5 + $0x14] sm:$0xf]
    %v139 = vld [vmem:[#allocation5 + $0x18] sm:$0xf]
    %v140 = vld [vmem:[#allocation5 + $0x1c] sm:$0xf]
    %v141 = vld [vmem:[#allocation5 + $0x20] sm:$0xf]
    %v142 = vld [vmem:[#allocation5 + $0x24] sm:$0xf]
    %v143 = vld [vmem:[#allocation5 + $0x28] sm:$0xf]
    %v144 = vld [vmem:[#allocation5 + $0x2c] sm:$0xf]
    %v145 = vld [vmem:[#allocation5 + $0x30] sm:$0xf]
    %v146 = vld [vmem:[#allocation5 + $0x34] sm:$0xf]
    %v147 = vld [vmem:[#allocation5 + $0x38] sm:$0xf]
    %v148 = vld [vmem:[#allocation5 + $0x3c] sm:$0xf]
    %v149 = vld [vmem:[#allocation13] ss:$0 sm:$0xff]
    %v166 = vunpack.c.l.b16 %v133
    %v167 = vunpack.c.l.b16 %v134
    %v168 = vunpack.c.l.b16 %v135
    %v169 = vunpack.c.l.b16 %v136
    %v170 = vunpack.c.l.b16 %v137
    %v171 = vunpack.c.l.b16 %v138
    %v172 = vunpack.c.l.b16 %v139
    %v173 = vunpack.c.l.b16 %v140
    %v174 = vunpack.c.l.b16 %v141
    %v175 = vunpack.c.l.b16 %v142
    %v176 = vunpack.c.l.b16 %v143
    %v177 = vunpack.c.l.b16 %v144
    %v178 = vunpack.c.l.b16 %v145
    %v179 = vunpack.c.l.b16 %v146
    %v180 = vunpack.c.l.b16 %v147
    %v181 = vunpack.c.l.b16 %v148
    %v182 = vpack.c.b16 %v167, %v166
    %v183 = vpack.c.b16 %v169, %v168
    %v184 = vpack.c.b16 %v171, %v170
    %v185 = vpack.c.b16 %v173, %v172
    %v186 = vpack.c.b16 %v175, %v174
    %v187 = vpack.c.b16 %v177, %v176
    %v188 = vpack.c.b16 %v179, %v178
    %v189 = vpack.c.b16 %v181, %v180
    %198 = vmatpush.bf16.msra.mxu0 %v189
    %199 = vmatpush.bf16.msra.mxu0 %v188
    %200 = vmatpush.bf16.msra.mxu0 %v187
    %201 = vmatpush.bf16.msra.mxu0 %v186
    %202 = vmatpush.bf16.msra.mxu0 %v185
    %203 = vmatpush.bf16.msra.mxu0 %v184
    %204 = vmatpush.bf16.msra.mxu0 %v183
    %205 = vmatpush.bf16.msra.mxu0 %v182
    %206 = vmatmul.bf16.gmra.mxu0 %v132
    %v207 = vpop.f32.mrf.mxu0
    %v208 = vadd.f32 %v149, %v207
    %v209 = vpop.f32.mrf.mxu0
    %210 = vdwg.mxu0
    %v211 = vmul.f32 %v208, 0.01
    %v212 = vmax.f32 %v208, %v211
    %v213 = vpack.c.bf16 %v212, %v212
    %v214 = vld [vmem:[#allocation7] sm:$0xff]
    %v215 = vld [vmem:[#allocation7 + $0x8] sm:$0xf]
    %v216 = vld [vmem:[#allocation7 + $0xc] sm:$0xff]
    %v217 = vld [vmem:[#allocation7 + $0x14] sm:$0xf]
    %v218 = vld [vmem:[#allocation7 + $0x18] sm:$0xff]
    %v219 = vld [vmem:[#allocation7 + $0x20] sm:$0xf]
    %v220 = vld [vmem:[#allocation7 + $0x24] sm:$0xff]
    %v221 = vld [vmem:[#allocation7 + $0x2c] sm:$0xf]
    %v222 = vld [vmem:[#allocation7 + $0x30] sm:$0xff]
    %v223 = vld [vmem:[#allocation7 + $0x38] sm:$0xf]
    %v224 = vld [vmem:[#allocation7 + $0x3c] sm:$0xff]
    %v225 = vld [vmem:[#allocation7 + $0x44] sm:$0xf]
    %v226 = vld [vmem:[#allocation7 + $0x48] sm:$0xff]
    %v227 = vld [vmem:[#allocation7 + $0x50] sm:$0xf]
    %v228 = vld [vmem:[#allocation7 + $0x54] sm:$0xff]
    %v229 = vld [vmem:[#allocation7 + $0x5c] sm:$0xf]
    %v230 = vld [vmem:[#allocation7 + $0x60] sm:$0xff]
    %v231 = vld [vmem:[#allocation7 + $0x68] sm:$0xf]
    %v232 = vld [vmem:[#allocation7 + $0x6c] sm:$0xff]
    %v233 = vld [vmem:[#allocation7 + $0x74] sm:$0xf]
    %v234 = vld [vmem:[#allocation7 + $0x78] sm:$0xff]
    %v235 = vld [vmem:[#allocation7 + $0x80] sm:$0xf]
    %v236 = vld [vmem:[#allocation7 + $0x84] sm:$0xff]
    %v237 = vld [vmem:[#allocation7 + $0x8c] sm:$0xf]
    %v238 = vld [vmem:[#allocation7 + $0x90] sm:$0xff]
    %v239 = vld [vmem:[#allocation7 + $0x98] sm:$0xf]
    %v240 = vld [vmem:[#allocation7 + $0x9c] sm:$0xff]
    %v241 = vld [vmem:[#allocation7 + $0xa4] sm:$0xf]
    %v242 = vld [vmem:[#allocation7 + $0xa8] sm:$0xff]
    %v243 = vld [vmem:[#allocation7 + $0xb0] sm:$0xf]
    %v244 = vld [vmem:[#allocation7 + $0xb4] sm:$0xff]
    %v245 = vld [vmem:[#allocation7 + $0xbc] sm:$0xf]
    %s246 = scalar_lea.vmem [#allocation13], 1
    %v247 = vld [vmem:[%s246] ss:$8 sm:$0x7]
    %v249 = vperm.slane %v247, 0
    %v250 = vperm.slane %v247, 1
    %v251 = vperm.slane %v247, 2
    %v287 = vunpack.c.l.b16 %v214
    %v288 = vunpack.c.h.b16 %v214
    %v289 = vunpack.c.l.b16 %v215
    %v290 = vunpack.c.l.b16 %v216
    %v291 = vunpack.c.h.b16 %v216
    %v292 = vunpack.c.l.b16 %v217
    %v293 = vunpack.c.l.b16 %v218
    %v294 = vunpack.c.h.b16 %v218
    %v295 = vunpack.c.l.b16 %v219
    %v296 = vunpack.c.l.b16 %v220
    %v297 = vunpack.c.h.b16 %v220
    %v298 = vunpack.c.l.b16 %v221
    %v299 = vunpack.c.l.b16 %v222
    %v300 = vunpack.c.h.b16 %v222
    %v301 = vunpack.c.l.b16 %v223
    %v302 = vunpack.c.l.b16 %v224
    %v303 = vunpack.c.h.b16 %v224
    %v304 = vunpack.c.l.b16 %v225
    %v305 = vunpack.c.l.b16 %v226
    %v306 = vunpack.c.h.b16 %v226
    %v307 = vunpack.c.l.b16 %v227
    %v308 = vunpack.c.l.b16 %v228
    %v309 = vunpack.c.h.b16 %v228
    %v310 = vunpack.c.l.b16 %v229
    %v311 = vunpack.c.l.b16 %v230
    %v312 = vunpack.c.h.b16 %v230
    %v313 = vunpack.c.l.b16 %v231
    %v314 = vunpack.c.l.b16 %v232
    %v315 = vunpack.c.h.b16 %v232
    %v316 = vunpack.c.l.b16 %v233
    %v317 = vunpack.c.l.b16 %v234
    %v318 = vunpack.c.h.b16 %v234
    %v319 = vunpack.c.l.b16 %v235
    %v320 = vunpack.c.l.b16 %v236
    %v321 = vunpack.c.h.b16 %v236
    %v322 = vunpack.c.l.b16 %v237
    %v323 = vunpack.c.l.b16 %v238
    %v324 = vunpack.c.h.b16 %v238
    %v325 = vunpack.c.l.b16 %v239
    %v326 = vunpack.c.l.b16 %v240
    %v327 = vunpack.c.h.b16 %v240
    %v328 = vunpack.c.l.b16 %v241
    %v329 = vunpack.c.l.b16 %v242
    %v330 = vunpack.c.h.b16 %v242
    %v331 = vunpack.c.l.b16 %v243
    %v332 = vunpack.c.l.b16 %v244
    %v333 = vunpack.c.h.b16 %v244
    %v334 = vunpack.c.l.b16 %v245
    %v335 = vpack.c.b16 %v290, %v287
    %v336 = vpack.c.b16 %v291, %v288
    %v337 = vpack.c.b16 %v292, %v289
    %v338 = vpack.c.b16 %v296, %v293
    %v339 = vpack.c.b16 %v297, %v294
    %v340 = vpack.c.b16 %v298, %v295
    %v341 = vpack.c.b16 %v302, %v299
    %v342 = vpack.c.b16 %v303, %v300
    %v343 = vpack.c.b16 %v304, %v301
    %v344 = vpack.c.b16 %v308, %v305
    %v345 = vpack.c.b16 %v309, %v306
    %v346 = vpack.c.b16 %v310, %v307
    %v347 = vpack.c.b16 %v314, %v311
    %v348 = vpack.c.b16 %v315, %v312
    %v349 = vpack.c.b16 %v316, %v313
    %v350 = vpack.c.b16 %v320, %v317
    %v351 = vpack.c.b16 %v321, %v318
    %v352 = vpack.c.b16 %v322, %v319
    %v353 = vpack.c.b16 %v326, %v323
    %v354 = vpack.c.b16 %v327, %v324
    %v355 = vpack.c.b16 %v328, %v325
    %v356 = vpack.c.b16 %v332, %v329
    %v357 = vpack.c.b16 %v333, %v330
    %v358 = vpack.c.b16 %v334, %v331
    %383 = vmatpush.bf16.msra.mxu0 %v356
    %384 = vmatpush.bf16.msra.mxu0 %v353
    %385 = vmatpush.bf16.msra.mxu0 %v350
    %386 = vmatpush.bf16.msra.mxu0 %v347
    %387 = vmatpush.bf16.msra.mxu0 %v344
    %388 = vmatpush.bf16.msra.mxu0 %v341
    %389 = vmatpush.bf16.msra.mxu0 %v338
    %390 = vmatpush.bf16.msra.mxu0 %v335
    %391 = vmatmul.bf16.gmra.mxu0 %v213
    %v392 = vpop.f32.mrf.mxu0
    %v393 = vadd.f32 %v249, %v392
    %v394 = vpop.f32.mrf.mxu0
    %395 = vdwg.mxu0
    %396 = vmatpush.bf16.msra.mxu0 %v357
    %397 = vmatpush.bf16.msra.mxu0 %v354
    %398 = vmatpush.bf16.msra.mxu0 %v351
    %399 = vmatpush.bf16.msra.mxu0 %v348
    %400 = vmatpush.bf16.msra.mxu0 %v345
    %401 = vmatpush.bf16.msra.mxu0 %v342
    %402 = vmatpush.bf16.msra.mxu0 %v339
    %403 = vmatpush.bf16.msra.mxu0 %v336
    %404 = vmatmul.bf16.gmra.mxu0 %v213
    %v405 = vpop.f32.mrf.mxu0
    %v406 = vadd.f32 %v250, %v405
    %v407 = vpop.f32.mrf.mxu0
    %408 = vdwg.mxu0
    %409 = vmatpush.bf16.msra.mxu0 %v358
    %410 = vmatpush.bf16.msra.mxu0 %v355
    %411 = vmatpush.bf16.msra.mxu0 %v352
    %412 = vmatpush.bf16.msra.mxu0 %v349
    %413 = vmatpush.bf16.msra.mxu0 %v346
    %414 = vmatpush.bf16.msra.mxu0 %v343
    %415 = vmatpush.bf16.msra.mxu0 %v340
    %416 = vmatpush.bf16.msra.mxu0 %v337
    %417 = vmatmul.bf16.gmra.mxu0 %v213
    %v418 = vpop.f32.mrf.mxu0
    %v419 = vadd.f32 %v251, %v418
    %v420 = vpop.f32.mrf.mxu0
    %421 = vdwg.mxu0
    %v422 = vmul.f32 %v393, 0.01
    %v423 = vmul.f32 %v406, 0.01
    %v424 = vmul.f32 %v419, 0.01
    %v425 = vmax.f32 %v393, %v422
    %v426 = vmax.f32 %v406, %v423
    %v427 = vmax.f32 %v419, %v424
    %v428 = vpack.c.bf16 %v425, %v425
    %v429 = vpack.c.bf16 %v426, %v426
    %v430 = vpack.c.bf16 %v427, %v427
    %v431 = vld [vmem:[#allocation8] sm:$0xff]
    %v432 = vld [vmem:[#allocation8 + $0x8] sm:$0xff]
    %v433 = vld [vmem:[#allocation8 + $0x10] sm:$0xf]
    %v434 = vld [vmem:[#allocation8 + $0x14] sm:$0xff]
    %v435 = vld [vmem:[#allocation8 + $0x1c] sm:$0xff]
    %v436 = vld [vmem:[#allocation8 + $0x24] sm:$0xf]
    %v437 = vld [vmem:[#allocation8 + $0x28] sm:$0xff]
    %v438 = vld [vmem:[#allocation8 + $0x30] sm:$0xff]
    %v439 = vld [vmem:[#allocation8 + $0x38] sm:$0xf]
    %v440 = vld [vmem:[#allocation8 + $0x3c] sm:$0xff]
    %v441 = vld [vmem:[#allocation8 + $0x44] sm:$0xff]
    %v442 = vld [vmem:[#allocation8 + $0x4c] sm:$0xf]
    %v443 = vld [vmem:[#allocation8 + $0x50] sm:$0xff]
    %v444 = vld [vmem:[#allocation8 + $0x58] sm:$0xff]
    %v445 = vld [vmem:[#allocation8 + $0x60] sm:$0xf]
    %v446 = vld [vmem:[#allocation8 + $0x64] sm:$0xff]
    %v447 = vld [vmem:[#allocation8 + $0x6c] sm:$0xff]
    %v448 = vld [vmem:[#allocation8 + $0x74] sm:$0xf]
    %v449 = vld [vmem:[#allocation8 + $0x78] sm:$0xff]
    %v450 = vld [vmem:[#allocation8 + $0x80] sm:$0xff]
    %v451 = vld [vmem:[#allocation8 + $0x88] sm:$0xf]
    %v452 = vld [vmem:[#allocation8 + $0x8c] sm:$0xff]
    %v453 = vld [vmem:[#allocation8 + $0x94] sm:$0xff]
    %v454 = vld [vmem:[#allocation8 + $0x9c] sm:$0xf]
    %v455 = vld [vmem:[#allocation8 + $0xa0] sm:$0xff]
    %v456 = vld [vmem:[#allocation8 + $0xa8] sm:$0xff]
    %v457 = vld [vmem:[#allocation8 + $0xb0] sm:$0xf]
    %v458 = vld [vmem:[#allocation8 + $0xb4] sm:$0xff]
    %v459 = vld [vmem:[#allocation8 + $0xbc] sm:$0xff]
    %v460 = vld [vmem:[#allocation8 + $0xc4] sm:$0xf]
    %v461 = vld [vmem:[#allocation8 + $0xc8] sm:$0xff]
    %v462 = vld [vmem:[#allocation8 + $0xd0] sm:$0xff]
    %v463 = vld [vmem:[#allocation8 + $0xd8] sm:$0xf]
    %v464 = vld [vmem:[#allocation8 + $0xdc] sm:$0xff]
    %v465 = vld [vmem:[#allocation8 + $0xe4] sm:$0xff]
    %v466 = vld [vmem:[#allocation8 + $0xec] sm:$0xf]
    %v467 = vld [vmem:[#allocation8 + $0xf0] sm:$0xff]
    %v468 = vld [vmem:[#allocation8 + $0xf8] sm:$0xff]
    %v469 = vld [vmem:[#allocation8 + $0x100] sm:$0xf]
    %v470 = vld [vmem:[#allocation8 + $0x104] sm:$0xff]
    %v471 = vld [vmem:[#allocation8 + $0x10c] sm:$0xff]
    %v472 = vld [vmem:[#allocation8 + $0x114] sm:$0xf]
    %v473 = vld [vmem:[#allocation8 + $0x118] sm:$0xff]
    %v474 = vld [vmem:[#allocation8 + $0x120] sm:$0xff]
    %v475 = vld [vmem:[#allocation8 + $0x128] sm:$0xf]
    %v476 = vld [vmem:[#allocation8 + $0x12c] sm:$0xff]
    %v477 = vld [vmem:[#allocation8 + $0x134] sm:$0xff]
    %v478 = vld [vmem:[#allocation8 + $0x13c] sm:$0xf]
    %v479 = vld [vmem:[#allocation8 + $0x140] sm:$0xff]
    %v480 = vld [vmem:[#allocation8 + $0x148] sm:$0xff]
    %v481 = vld [vmem:[#allocation8 + $0x150] sm:$0xf]
    %v482 = vld [vmem:[#allocation8 + $0x154] sm:$0xff]
    %v483 = vld [vmem:[#allocation8 + $0x15c] sm:$0xff]
    %v484 = vld [vmem:[#allocation8 + $0x164] sm:$0xf]
    %v485 = vld [vmem:[#allocation8 + $0x168] sm:$0xff]
    %v486 = vld [vmem:[#allocation8 + $0x170] sm:$0xff]
    %v487 = vld [vmem:[#allocation8 + $0x178] sm:$0xf]
    %v488 = vld [vmem:[#allocation8 + $0x17c] sm:$0xff]
    %v489 = vld [vmem:[#allocation8 + $0x184] sm:$0xff]
    %v490 = vld [vmem:[#allocation8 + $0x18c] sm:$0xf]
    %v491 = vld [vmem:[#allocation8 + $0x190] sm:$0xff]
    %v492 = vld [vmem:[#allocation8 + $0x198] sm:$0xff]
    %v493 = vld [vmem:[#allocation8 + $0x1a0] sm:$0xf]
    %v494 = vld [vmem:[#allocation8 + $0x1a4] sm:$0xff]
    %v495 = vld [vmem:[#allocation8 + $0x1ac] sm:$0xff]
    %v496 = vld [vmem:[#allocation8 + $0x1b4] sm:$0xf]
    %v497 = vld [vmem:[#allocation8 + $0x1b8] sm:$0xff]
    %v498 = vld [vmem:[#allocation8 + $0x1c0] sm:$0xff]
    %v499 = vld [vmem:[#allocation8 + $0x1c8] sm:$0xf]
    %v500 = vld [vmem:[#allocation8 + $0x1cc] sm:$0xff]
    %v501 = vld [vmem:[#allocation8 + $0x1d4] sm:$0xff]
    %v502 = vld [vmem:[#allocation8 + $0x1dc] sm:$0xf]
    %v503 = vld [vmem:[#allocation8 + $0x1e0] sm:$0xff]
    %v504 = vld [vmem:[#allocation8 + $0x1e8] sm:$0xff]
    %v505 = vld [vmem:[#allocation8 + $0x1f0] sm:$0xf]
    %v506 = vld [vmem:[#allocation8 + $0x1f4] sm:$0xff]
    %v507 = vld [vmem:[#allocation8 + $0x1fc] sm:$0xff]
    %v508 = vld [vmem:[#allocation8 + $0x204] sm:$0xf]
    %v509 = vld [vmem:[#allocation8 + $0x208] sm:$0xff]
    %v510 = vld [vmem:[#allocation8 + $0x210] sm:$0xff]
    %v511 = vld [vmem:[#allocation8 + $0x218] sm:$0xf]
    %v512 = vld [vmem:[#allocation8 + $0x21c] sm:$0xff]
    %v513 = vld [vmem:[#allocation8 + $0x224] sm:$0xff]
    %v514 = vld [vmem:[#allocation8 + $0x22c] sm:$0xf]
    %v515 = vld [vmem:[#allocation8 + $0x230] sm:$0xff]
    %v516 = vld [vmem:[#allocation8 + $0x238] sm:$0xff]
    %v517 = vld [vmem:[#allocation8 + $0x240] sm:$0xf]
    %v518 = vld [vmem:[#allocation8 + $0x244] sm:$0xff]
    %v519 = vld [vmem:[#allocation8 + $0x24c] sm:$0xff]
    %v520 = vld [vmem:[#allocation8 + $0x254] sm:$0xf]
    %v521 = vld [vmem:[#allocation8 + $0x258] sm:$0xff]
    %v522 = vld [vmem:[#allocation8 + $0x260] sm:$0xff]
    %v523 = vld [vmem:[#allocation8 + $0x268] sm:$0xf]
    %v524 = vld [vmem:[#allocation8 + $0x26c] sm:$0xff]
    %v525 = vld [vmem:[#allocation8 + $0x274] sm:$0xff]
    %v526 = vld [vmem:[#allocation8 + $0x27c] sm:$0xf]
    %v527 = vld [vmem:[#allocation8 + $0x280] sm:$0xff]
    %v528 = vld [vmem:[#allocation8 + $0x288] sm:$0xff]
    %v529 = vld [vmem:[#allocation8 + $0x290] sm:$0xf]
    %v530 = vld [vmem:[#allocation8 + $0x294] sm:$0xff]
    %v531 = vld [vmem:[#allocation8 + $0x29c] sm:$0xff]
    %v532 = vld [vmem:[#allocation8 + $0x2a4] sm:$0xf]
    %v533 = vld [vmem:[#allocation8 + $0x2a8] sm:$0xff]
    %v534 = vld [vmem:[#allocation8 + $0x2b0] sm:$0xff]
    %v535 = vld [vmem:[#allocation8 + $0x2b8] sm:$0xf]
    %v536 = vld [vmem:[#allocation8 + $0x2bc] sm:$0xff]
    %v537 = vld [vmem:[#allocation8 + $0x2c4] sm:$0xff]
    %v538 = vld [vmem:[#allocation8 + $0x2cc] sm:$0xf]
    %v539 = vld [vmem:[#allocation8 + $0x2d0] sm:$0xff]
    %v540 = vld [vmem:[#allocation8 + $0x2d8] sm:$0xff]
    %v541 = vld [vmem:[#allocation8 + $0x2e0] sm:$0xf]
    %v542 = vld [vmem:[#allocation8 + $0x2e4] sm:$0xff]
    %v543 = vld [vmem:[#allocation8 + $0x2ec] sm:$0xff]
    %v544 = vld [vmem:[#allocation8 + $0x2f4] sm:$0xf]
    %v545 = vld [vmem:[#allocation8 + $0x2f8] sm:$0xff]
    %v546 = vld [vmem:[#allocation8 + $0x300] sm:$0xff]
    %v547 = vld [vmem:[#allocation8 + $0x308] sm:$0xf]
    %v548 = vld [vmem:[#allocation8 + $0x30c] sm:$0xff]
    %v549 = vld [vmem:[#allocation8 + $0x314] sm:$0xff]
    %v550 = vld [vmem:[#allocation8 + $0x31c] sm:$0xf]
    %v551 = vld [vmem:[#allocation8 + $0x320] sm:$0xff]
    %v552 = vld [vmem:[#allocation8 + $0x328] sm:$0xff]
    %v553 = vld [vmem:[#allocation8 + $0x330] sm:$0xf]
    %v554 = vld [vmem:[#allocation8 + $0x334] sm:$0xff]
    %v555 = vld [vmem:[#allocation8 + $0x33c] sm:$0xff]
    %v556 = vld [vmem:[#allocation8 + $0x344] sm:$0xf]
    %v557 = vld [vmem:[#allocation8 + $0x348] sm:$0xff]
    %v558 = vld [vmem:[#allocation8 + $0x350] sm:$0xff]
    %v559 = vld [vmem:[#allocation8 + $0x358] sm:$0xf]
    %v560 = vld [vmem:[#allocation8 + $0x35c] sm:$0xff]
    %v561 = vld [vmem:[#allocation8 + $0x364] sm:$0xff]
    %v562 = vld [vmem:[#allocation8 + $0x36c] sm:$0xf]
    %v563 = vld [vmem:[#allocation8 + $0x370] sm:$0xff]
    %v564 = vld [vmem:[#allocation8 + $0x378] sm:$0xff]
    %v565 = vld [vmem:[#allocation8 + $0x380] sm:$0xf]
    %v566 = vld [vmem:[#allocation8 + $0x384] sm:$0xff]
    %v567 = vld [vmem:[#allocation8 + $0x38c] sm:$0xff]
    %v568 = vld [vmem:[#allocation8 + $0x394] sm:$0xf]
    %v569 = vld [vmem:[#allocation8 + $0x398] sm:$0xff]
    %v570 = vld [vmem:[#allocation8 + $0x3a0] sm:$0xff]
    %v571 = vld [vmem:[#allocation8 + $0x3a8] sm:$0xf]
    %v572 = vld [vmem:[#allocation8 + $0x3ac] sm:$0xff]
    %v573 = vld [vmem:[#allocation8 + $0x3b4] sm:$0xff]
    %v574 = vld [vmem:[#allocation8 + $0x3bc] sm:$0xf]
    %s575 = scalar_lea.vmem [#allocation13], 2
    %v576 = vld [vmem:[%s575] ss:$8 sm:$0xf]
    %v577 = vld [vmem:[%s575] ss:$8 sm:$0x10]
    %v578 = vor.u32 %v576, %v577
    %v580 = vperm.slane %v578, 0
    %v581 = vperm.slane %v578, 1
    %v582 = vperm.slane %v578, 2
    %v583 = vperm.slane %v578, 3
    %v584 = vperm.slane %v578, 4
    %v734 = vunpack.c.l.b16 %v431
    %v735 = vunpack.c.h.b16 %v431
    %v736 = vunpack.c.l.b16 %v432
    %v737 = vunpack.c.h.b16 %v432
    %v738 = vunpack.c.l.b16 %v433
    %v739 = vunpack.c.l.b16 %v434
    %v740 = vunpack.c.h.b16 %v434
    %v741 = vunpack.c.l.b16 %v435
    %v742 = vunpack.c.h.b16 %v435
    %v743 = vunpack.c.l.b16 %v436
    %v744 = vunpack.c.l.b16 %v437
    %v745 = vunpack.c.h.b16 %v437
    %v746 = vunpack.c.l.b16 %v438
    %v747 = vunpack.c.h.b16 %v438
    %v748 = vunpack.c.l.b16 %v439
    %v749 = vunpack.c.l.b16 %v440
    %v750 = vunpack.c.h.b16 %v440
    %v751 = vunpack.c.l.b16 %v441
    %v752 = vunpack.c.h.b16 %v441
    %v753 = vunpack.c.l.b16 %v442
    %v754 = vunpack.c.l.b16 %v443
    %v755 = vunpack.c.h.b16 %v443
    %v756 = vunpack.c.l.b16 %v444
    %v757 = vunpack.c.h.b16 %v444
    %v758 = vunpack.c.l.b16 %v445
    %v759 = vunpack.c.l.b16 %v446
    %v760 = vunpack.c.h.b16 %v446
    %v761 = vunpack.c.l.b16 %v447
    %v762 = vunpack.c.h.b16 %v447
    %v763 = vunpack.c.l.b16 %v448
    %v764 = vunpack.c.l.b16 %v449
    %v765 = vunpack.c.h.b16 %v449
    %v766 = vunpack.c.l.b16 %v450
    %v767 = vunpack.c.h.b16 %v450
    %v768 = vunpack.c.l.b16 %v451
    %v769 = vunpack.c.l.b16 %v452
    %v770 = vunpack.c.h.b16 %v452
    %v771 = vunpack.c.l.b16 %v453
    %v772 = vunpack.c.h.b16 %v453
    %v773 = vunpack.c.l.b16 %v454
    %v774 = vunpack.c.l.b16 %v455
    %v775 = vunpack.c.h.b16 %v455
    %v776 = vunpack.c.l.b16 %v456
    %v777 = vunpack.c.h.b16 %v456
    %v778 = vunpack.c.l.b16 %v457
    %v779 = vunpack.c.l.b16 %v458
    %v780 = vunpack.c.h.b16 %v458
    %v781 = vunpack.c.l.b16 %v459
    %v782 = vunpack.c.h.b16 %v459
    %v783 = vunpack.c.l.b16 %v460
    %v784 = vunpack.c.l.b16 %v461
    %v785 = vunpack.c.h.b16 %v461
    %v786 = vunpack.c.l.b16 %v462
    %v787 = vunpack.c.h.b16 %v462
    %v788 = vunpack.c.l.b16 %v463
    %v789 = vunpack.c.l.b16 %v464
    %v790 = vunpack.c.h.b16 %v464
    %v791 = vunpack.c.l.b16 %v465
    %v792 = vunpack.c.h.b16 %v465
    %v793 = vunpack.c.l.b16 %v466
    %v794 = vunpack.c.l.b16 %v467
    %v795 = vunpack.c.h.b16 %v467
    %v796 = vunpack.c.l.b16 %v468
    %v797 = vunpack.c.h.b16 %v468
    %v798 = vunpack.c.l.b16 %v469
    %v799 = vunpack.c.l.b16 %v470
    %v800 = vunpack.c.h.b16 %v470
    %v801 = vunpack.c.l.b16 %v471
    %v802 = vunpack.c.h.b16 %v471
    %v803 = vunpack.c.l.b16 %v472
    %v804 = vunpack.c.l.b16 %v473
    %v805 = vunpack.c.h.b16 %v473
    %v806 = vunpack.c.l.b16 %v474
    %v807 = vunpack.c.h.b16 %v474
    %v808 = vunpack.c.l.b16 %v475
    %v809 = vunpack.c.l.b16 %v476
    %v810 = vunpack.c.h.b16 %v476
    %v811 = vunpack.c.l.b16 %v477
    %v812 = vunpack.c.h.b16 %v477
    %v813 = vunpack.c.l.b16 %v478
    %v814 = vunpack.c.l.b16 %v479
    %v815 = vunpack.c.h.b16 %v479
    %v816 = vunpack.c.l.b16 %v480
    %v817 = vunpack.c.h.b16 %v480
    %v818 = vunpack.c.l.b16 %v481
    %v819 = vunpack.c.l.b16 %v482
    %v820 = vunpack.c.h.b16 %v482
    %v821 = vunpack.c.l.b16 %v483
    %v822 = vunpack.c.h.b16 %v483
    %v823 = vunpack.c.l.b16 %v484
    %v824 = vunpack.c.l.b16 %v485
    %v825 = vunpack.c.h.b16 %v485
    %v826 = vunpack.c.l.b16 %v486
    %v827 = vunpack.c.h.b16 %v486
    %v828 = vunpack.c.l.b16 %v487
    %v829 = vunpack.c.l.b16 %v488
    %v830 = vunpack.c.h.b16 %v488
    %v831 = vunpack.c.l.b16 %v489
    %v832 = vunpack.c.h.b16 %v489
    %v833 = vunpack.c.l.b16 %v490
    %v834 = vunpack.c.l.b16 %v491
    %v835 = vunpack.c.h.b16 %v491
    %v836 = vunpack.c.l.b16 %v492
    %v837 = vunpack.c.h.b16 %v492
    %v838 = vunpack.c.l.b16 %v493
    %v839 = vunpack.c.l.b16 %v494
    %v840 = vunpack.c.h.b16 %v494
    %v841 = vunpack.c.l.b16 %v495
    %v842 = vunpack.c.h.b16 %v495
    %v843 = vunpack.c.l.b16 %v496
    %v844 = vunpack.c.l.b16 %v497
    %v845 = vunpack.c.h.b16 %v497
    %v846 = vunpack.c.l.b16 %v498
    %v847 = vunpack.c.h.b16 %v498
    %v848 = vunpack.c.l.b16 %v499
    %v849 = vunpack.c.l.b16 %v500
    %v850 = vunpack.c.h.b16 %v500
    %v851 = vunpack.c.l.b16 %v501
    %v852 = vunpack.c.h.b16 %v501
    %v853 = vunpack.c.l.b16 %v502
    %v854 = vunpack.c.l.b16 %v503
    %v855 = vunpack.c.h.b16 %v503
    %v856 = vunpack.c.l.b16 %v504
    %v857 = vunpack.c.h.b16 %v504
    %v858 = vunpack.c.l.b16 %v505
    %v859 = vunpack.c.l.b16 %v506
    %v860 = vunpack.c.h.b16 %v506
    %v861 = vunpack.c.l.b16 %v507
    %v862 = vunpack.c.h.b16 %v507
    %v863 = vunpack.c.l.b16 %v508
    %v864 = vunpack.c.l.b16 %v509
    %v865 = vunpack.c.h.b16 %v509
    %v866 = vunpack.c.l.b16 %v510
    %v867 = vunpack.c.h.b16 %v510
    %v868 = vunpack.c.l.b16 %v511
    %v869 = vunpack.c.l.b16 %v512
    %v870 = vunpack.c.h.b16 %v512
    %v871 = vunpack.c.l.b16 %v513
    %v872 = vunpack.c.h.b16 %v513
    %v873 = vunpack.c.l.b16 %v514
    %v874 = vunpack.c.l.b16 %v515
    %v875 = vunpack.c.h.b16 %v515
    %v876 = vunpack.c.l.b16 %v516
    %v877 = vunpack.c.h.b16 %v516
    %v878 = vunpack.c.l.b16 %v517
    %v879 = vunpack.c.l.b16 %v518
    %v880 = vunpack.c.h.b16 %v518
    %v881 = vunpack.c.l.b16 %v519
    %v882 = vunpack.c.h.b16 %v519
    %v883 = vunpack.c.l.b16 %v520
    %v884 = vunpack.c.l.b16 %v521
    %v885 = vunpack.c.h.b16 %v521
    %v886 = vunpack.c.l.b16 %v522
    %v887 = vunpack.c.h.b16 %v522
    %v888 = vunpack.c.l.b16 %v523
    %v889 = vunpack.c.l.b16 %v524
    %v890 = vunpack.c.h.b16 %v524
    %v891 = vunpack.c.l.b16 %v525
    %v892 = vunpack.c.h.b16 %v525
    %v893 = vunpack.c.l.b16 %v526
    %v894 = vunpack.c.l.b16 %v527
    %v895 = vunpack.c.h.b16 %v527
    %v896 = vunpack.c.l.b16 %v528
    %v897 = vunpack.c.h.b16 %v528
    %v898 = vunpack.c.l.b16 %v529
    %v899 = vunpack.c.l.b16 %v530
    %v900 = vunpack.c.h.b16 %v530
    %v901 = vunpack.c.l.b16 %v531
    %v902 = vunpack.c.h.b16 %v531
    %v903 = vunpack.c.l.b16 %v532
    %v904 = vunpack.c.l.b16 %v533
    %v905 = vunpack.c.h.b16 %v533
    %v906 = vunpack.c.l.b16 %v534
    %v907 = vunpack.c.h.b16 %v534
    %v908 = vunpack.c.l.b16 %v535
    %v909 = vunpack.c.l.b16 %v536
    %v910 = vunpack.c.h.b16 %v536
    %v911 = vunpack.c.l.b16 %v537
    %v912 = vunpack.c.h.b16 %v537
    %v913 = vunpack.c.l.b16 %v538
    %v914 = vunpack.c.l.b16 %v539
    %v915 = vunpack.c.h.b16 %v539
    %v916 = vunpack.c.l.b16 %v540
    %v917 = vunpack.c.h.b16 %v540
    %v918 = vunpack.c.l.b16 %v541
    %v919 = vunpack.c.l.b16 %v542
    %v920 = vunpack.c.h.b16 %v542
    %v921 = vunpack.c.l.b16 %v543
    %v922 = vunpack.c.h.b16 %v543
    %v923 = vunpack.c.l.b16 %v544
    %v924 = vunpack.c.l.b16 %v545
    %v925 = vunpack.c.h.b16 %v545
    %v926 = vunpack.c.l.b16 %v546
    %v927 = vunpack.c.h.b16 %v546
    %v928 = vunpack.c.l.b16 %v547
    %v929 = vunpack.c.l.b16 %v548
    %v930 = vunpack.c.h.b16 %v548
    %v931 = vunpack.c.l.b16 %v549
    %v932 = vunpack.c.h.b16 %v549
    %v933 = vunpack.c.l.b16 %v550
    %v934 = vunpack.c.l.b16 %v551
    %v935 = vunpack.c.h.b16 %v551
    %v936 = vunpack.c.l.b16 %v552
    %v937 = vunpack.c.h.b16 %v552
    %v938 = vunpack.c.l.b16 %v553
    %v939 = vunpack.c.l.b16 %v554
    %v940 = vunpack.c.h.b16 %v554
    %v941 = vunpack.c.l.b16 %v555
    %v942 = vunpack.c.h.b16 %v555
    %v943 = vunpack.c.l.b16 %v556
    %v944 = vunpack.c.l.b16 %v557
    %v945 = vunpack.c.h.b16 %v557
    %v946 = vunpack.c.l.b16 %v558
    %v947 = vunpack.c.h.b16 %v558
    %v948 = vunpack.c.l.b16 %v559
    %v949 = vunpack.c.l.b16 %v560
    %v950 = vunpack.c.h.b16 %v560
    %v951 = vunpack.c.l.b16 %v561
    %v952 = vunpack.c.h.b16 %v561
    %v953 = vunpack.c.l.b16 %v562
    %v954 = vunpack.c.l.b16 %v563
    %v955 = vunpack.c.h.b16 %v563
    %v956 = vunpack.c.l.b16 %v564
    %v957 = vunpack.c.h.b16 %v564
    %v958 = vunpack.c.l.b16 %v565
    %v959 = vunpack.c.l.b16 %v566
    %v960 = vunpack.c.h.b16 %v566
    %v961 = vunpack.c.l.b16 %v567
    %v962 = vunpack.c.h.b16 %v567
    %v963 = vunpack.c.l.b16 %v568
    %v964 = vunpack.c.l.b16 %v569
    %v965 = vunpack.c.h.b16 %v569
    %v966 = vunpack.c.l.b16 %v570
    %v967 = vunpack.c.h.b16 %v570
    %v968 = vunpack.c.l.b16 %v571
    %v969 = vunpack.c.l.b16 %v572
    %v970 = vunpack.c.h.b16 %v572
    %v971 = vunpack.c.l.b16 %v573
    %v972 = vunpack.c.h.b16 %v573
    %v973 = vunpack.c.l.b16 %v574
    %v974 = vpack.c.b16 %v739, %v734
    %v975 = vpack.c.b16 %v740, %v735
    %v976 = vpack.c.b16 %v741, %v736
    %v977 = vpack.c.b16 %v742, %v737
    %v978 = vpack.c.b16 %v743, %v738
    %v979 = vpack.c.b16 %v749, %v744
    %v980 = vpack.c.b16 %v750, %v745
    %v981 = vpack.c.b16 %v751, %v746
    %v982 = vpack.c.b16 %v752, %v747
    %v983 = vpack.c.b16 %v753, %v748
    %v984 = vpack.c.b16 %v759, %v754
    %v985 = vpack.c.b16 %v760, %v755
    %v986 = vpack.c.b16 %v761, %v756
    %v987 = vpack.c.b16 %v762, %v757
    %v988 = vpack.c.b16 %v763, %v758
    %v989 = vpack.c.b16 %v769, %v764
    %v990 = vpack.c.b16 %v770, %v765
    %v991 = vpack.c.b16 %v771, %v766
    %v992 = vpack.c.b16 %v772, %v767
    %v993 = vpack.c.b16 %v773, %v768
    %v994 = vpack.c.b16 %v779, %v774
    %v995 = vpack.c.b16 %v780, %v775
    %v996 = vpack.c.b16 %v781, %v776
    %v997 = vpack.c.b16 %v782, %v777
    %v998 = vpack.c.b16 %v783, %v778
    %v999 = vpack.c.b16 %v789, %v784
    %v1000 = vpack.c.b16 %v790, %v785
    %v1001 = vpack.c.b16 %v791, %v786
    %v1002 = vpack.c.b16 %v792, %v787
    %v1003 = vpack.c.b16 %v793, %v788
    %v1004 = vpack.c.b16 %v799, %v794
    %v1005 = vpack.c.b16 %v800, %v795
    %v1006 = vpack.c.b16 %v801, %v796
    %v1007 = vpack.c.b16 %v802, %v797
    %v1008 = vpack.c.b16 %v803, %v798
    %v1009 = vpack.c.b16 %v809, %v804
    %v1010 = vpack.c.b16 %v810, %v805
    %v1011 = vpack.c.b16 %v811, %v806
    %v1012 = vpack.c.b16 %v812, %v807
    %v1013 = vpack.c.b16 %v813, %v808
    %v1014 = vpack.c.b16 %v819, %v814
    %v1015 = vpack.c.b16 %v820, %v815
    %v1016 = vpack.c.b16 %v821, %v816
    %v1017 = vpack.c.b16 %v822, %v817
    %v1018 = vpack.c.b16 %v823, %v818
    %v1019 = vpack.c.b16 %v829, %v824
    %v1020 = vpack.c.b16 %v830, %v825
    %v1021 = vpack.c.b16 %v831, %v826
    %v1022 = vpack.c.b16 %v832, %v827
    %v1023 = vpack.c.b16 %v833, %v828
    %v1024 = vpack.c.b16 %v839, %v834
    %v1025 = vpack.c.b16 %v840, %v835
    %v1026 = vpack.c.b16 %v841, %v836
    %v1027 = vpack.c.b16 %v842, %v837
    %v1028 = vpack.c.b16 %v843, %v838
    %v1029 = vpack.c.b16 %v849, %v844
    %v1030 = vpack.c.b16 %v850, %v845
    %v1031 = vpack.c.b16 %v851, %v846
    %v1032 = vpack.c.b16 %v852, %v847
    %v1033 = vpack.c.b16 %v853, %v848
    %v1034 = vpack.c.b16 %v859, %v854
    %v1035 = vpack.c.b16 %v860, %v855
    %v1036 = vpack.c.b16 %v861, %v856
    %v1037 = vpack.c.b16 %v862, %v857
    %v1038 = vpack.c.b16 %v863, %v858
    %v1039 = vpack.c.b16 %v869, %v864
    %v1040 = vpack.c.b16 %v870, %v865
    %v1041 = vpack.c.b16 %v871, %v866
    %v1042 = vpack.c.b16 %v872, %v867
    %v1043 = vpack.c.b16 %v873, %v868
    %v1044 = vpack.c.b16 %v879, %v874
    %v1045 = vpack.c.b16 %v880, %v875
    %v1046 = vpack.c.b16 %v881, %v876
    %v1047 = vpack.c.b16 %v882, %v877
    %v1048 = vpack.c.b16 %v883, %v878
    %v1049 = vpack.c.b16 %v889, %v884
    %v1050 = vpack.c.b16 %v890, %v885
    %v1051 = vpack.c.b16 %v891, %v886
    %v1052 = vpack.c.b16 %v892, %v887
    %v1053 = vpack.c.b16 %v893, %v888
    %v1054 = vpack.c.b16 %v899, %v894
    %v1055 = vpack.c.b16 %v900, %v895
    %v1056 = vpack.c.b16 %v901, %v896
    %v1057 = vpack.c.b16 %v902, %v897
    %v1058 = vpack.c.b16 %v903, %v898
    %v1059 = vpack.c.b16 %v909, %v904
    %v1060 = vpack.c.b16 %v910, %v905
    %v1061 = vpack.c.b16 %v911, %v906
    %v1062 = vpack.c.b16 %v912, %v907
    %v1063 = vpack.c.b16 %v913, %v908
    %v1064 = vpack.c.b16 %v919, %v914
    %v1065 = vpack.c.b16 %v920, %v915
    %v1066 = vpack.c.b16 %v921, %v916
    %v1067 = vpack.c.b16 %v922, %v917
    %v1068 = vpack.c.b16 %v923, %v918
    %v1069 = vpack.c.b16 %v929, %v924
    %v1070 = vpack.c.b16 %v930, %v925
    %v1071 = vpack.c.b16 %v931, %v926
    %v1072 = vpack.c.b16 %v932, %v927
    %v1073 = vpack.c.b16 %v933, %v928
    %v1074 = vpack.c.b16 %v939, %v934
    %v1075 = vpack.c.b16 %v940, %v935
    %v1076 = vpack.c.b16 %v941, %v936
    %v1077 = vpack.c.b16 %v942, %v937
    %v1078 = vpack.c.b16 %v943, %v938
    %v1079 = vpack.c.b16 %v949, %v944
    %v1080 = vpack.c.b16 %v950, %v945
    %v1081 = vpack.c.b16 %v951, %v946
    %v1082 = vpack.c.b16 %v952, %v947
    %v1083 = vpack.c.b16 %v953, %v948
    %v1084 = vpack.c.b16 %v959, %v954
    %v1085 = vpack.c.b16 %v960, %v955
    %v1086 = vpack.c.b16 %v961, %v956
    %v1087 = vpack.c.b16 %v962, %v957
    %v1088 = vpack.c.b16 %v963, %v958
    %v1089 = vpack.c.b16 %v969, %v964
    %v1090 = vpack.c.b16 %v970, %v965
    %v1091 = vpack.c.b16 %v971, %v966
    %v1092 = vpack.c.b16 %v972, %v967
    %v1093 = vpack.c.b16 %v973, %v968
    %1214 = vmatpush.bf16.msra.mxu0 %v1009
    %1215 = vmatpush.bf16.msra.mxu0 %v1004
    %1216 = vmatpush.bf16.msra.mxu0 %v999
    %1217 = vmatpush.bf16.msra.mxu0 %v994
    %1218 = vmatpush.bf16.msra.mxu0 %v989
    %1219 = vmatpush.bf16.msra.mxu0 %v984
    %1220 = vmatpush.bf16.msra.mxu0 %v979
    %1221 = vmatpush.bf16.msra.mxu0 %v974
    %1222 = vmatmul.bf16.gmra.mxu0 %v428
    %v1223 = vpop.f32.mrf.mxu0
    %v1224 = vadd.f32 %v580, %v1223
    %v1225 = vpop.f32.mrf.mxu0
    %1226 = vdwg.mxu0
    %1227 = vmatpush.bf16.msra.mxu0 %v1049
    %1228 = vmatpush.bf16.msra.mxu0 %v1044
    %1229 = vmatpush.bf16.msra.mxu0 %v1039
    %1230 = vmatpush.bf16.msra.mxu0 %v1034
    %1231 = vmatpush.bf16.msra.mxu0 %v1029
    %1232 = vmatpush.bf16.msra.mxu0 %v1024
    %1233 = vmatpush.bf16.msra.mxu0 %v1019
    %1234 = vmatpush.bf16.msra.mxu0 %v1014
    %1235 = vmatmul.bf16.gmra.mxu0 %v429
    %v1236 = vpop.f32.mrf.mxu0
    %v1237 = vadd.f32 %v1224, %v1236
    %v1238 = vpop.f32.mrf.mxu0
    %1239 = vdwg.mxu0
    %1240 = vmatpush.bf16.msra.mxu0 %v1089
    %1241 = vmatpush.bf16.msra.mxu0 %v1084
    %1242 = vmatpush.bf16.msra.mxu0 %v1079
    %1243 = vmatpush.bf16.msra.mxu0 %v1074
    %1244 = vmatpush.bf16.msra.mxu0 %v1069
    %1245 = vmatpush.bf16.msra.mxu0 %v1064
    %1246 = vmatpush.bf16.msra.mxu0 %v1059
    %1247 = vmatpush.bf16.msra.mxu0 %v1054
    %1248 = vmatmul.bf16.gmra.mxu0 %v430
    %v1249 = vpop.f32.mrf.mxu0
    %v1250 = vadd.f32 %v1237, %v1249
    %v1251 = vpop.f32.mrf.mxu0
    %1252 = vdwg.mxu0
    %1253 = vmatpush.bf16.msra.mxu0 %v1010
    %1254 = vmatpush.bf16.msra.mxu0 %v1005
    %1255 = vmatpush.bf16.msra.mxu0 %v1000
    %1256 = vmatpush.bf16.msra.mxu0 %v995
    %1257 = vmatpush.bf16.msra.mxu0 %v990
    %1258 = vmatpush.bf16.msra.mxu0 %v985
    %1259 = vmatpush.bf16.msra.mxu0 %v980
    %1260 = vmatpush.bf16.msra.mxu0 %v975
    %1261 = vmatmul.bf16.gmra.mxu0 %v428
    %v1262 = vpop.f32.mrf.mxu0
    %v1263 = vadd.f32 %v581, %v1262
    %v1264 = vpop.f32.mrf.mxu0
    %1265 = vdwg.mxu0
    %1266 = vmatpush.bf16.msra.mxu0 %v1050
    %1267 = vmatpush.bf16.msra.mxu0 %v1045
    %1268 = vmatpush.bf16.msra.mxu0 %v1040
    %1269 = vmatpush.bf16.msra.mxu0 %v1035
    %1270 = vmatpush.bf16.msra.mxu0 %v1030
    %1271 = vmatpush.bf16.msra.mxu0 %v1025
    %1272 = vmatpush.bf16.msra.mxu0 %v1020
    %1273 = vmatpush.bf16.msra.mxu0 %v1015
    %1274 = vmatmul.bf16.gmra.mxu0 %v429
    %v1275 = vpop.f32.mrf.mxu0
    %v1276 = vadd.f32 %v1263, %v1275
    %v1277 = vpop.f32.mrf.mxu0
    %1278 = vdwg.mxu0
    %1279 = vmatpush.bf16.msra.mxu0 %v1090
    %1280 = vmatpush.bf16.msra.mxu0 %v1085
    %1281 = vmatpush.bf16.msra.mxu0 %v1080
    %1282 = vmatpush.bf16.msra.mxu0 %v1075
    %1283 = vmatpush.bf16.msra.mxu0 %v1070
    %1284 = vmatpush.bf16.msra.mxu0 %v1065
    %1285 = vmatpush.bf16.msra.mxu0 %v1060
    %1286 = vmatpush.bf16.msra.mxu0 %v1055
    %1287 = vmatmul.bf16.gmra.mxu0 %v430
    %v1288 = vpop.f32.mrf.mxu0
    %v1289 = vadd.f32 %v1276, %v1288
    %v1290 = vpop.f32.mrf.mxu0
    %1291 = vdwg.mxu0
    %1292 = vmatpush.bf16.msra.mxu0 %v1011
    %1293 = vmatpush.bf16.msra.mxu0 %v1006
    %1294 = vmatpush.bf16.msra.mxu0 %v1001
    %1295 = vmatpush.bf16.msra.mxu0 %v996
    %1296 = vmatpush.bf16.msra.mxu0 %v991
    %1297 = vmatpush.bf16.msra.mxu0 %v986
    %1298 = vmatpush.bf16.msra.mxu0 %v981
    %1299 = vmatpush.bf16.msra.mxu0 %v976
    %1300 = vmatmul.bf16.gmra.mxu0 %v428
    %v1301 = vpop.f32.mrf.mxu0
    %v1302 = vadd.f32 %v582, %v1301
    %v1303 = vpop.f32.mrf.mxu0
    %1304 = vdwg.mxu0
    %1305 = vmatpush.bf16.msra.mxu0 %v1051
    %1306 = vmatpush.bf16.msra.mxu0 %v1046
    %1307 = vmatpush.bf16.msra.mxu0 %v1041
    %1308 = vmatpush.bf16.msra.mxu0 %v1036
    %1309 = vmatpush.bf16.msra.mxu0 %v1031
    %1310 = vmatpush.bf16.msra.mxu0 %v1026
    %1311 = vmatpush.bf16.msra.mxu0 %v1021
    %1312 = vmatpush.bf16.msra.mxu0 %v1016
    %1313 = vmatmul.bf16.gmra.mxu0 %v429
    %v1314 = vpop.f32.mrf.mxu0
    %v1315 = vadd.f32 %v1302, %v1314
    %v1316 = vpop.f32.mrf.mxu0
    %1317 = vdwg.mxu0
    %1318 = vmatpush.bf16.msra.mxu0 %v1091
    %1319 = vmatpush.bf16.msra.mxu0 %v1086
    %1320 = vmatpush.bf16.msra.mxu0 %v1081
    %1321 = vmatpush.bf16.msra.mxu0 %v1076
    %1322 = vmatpush.bf16.msra.mxu0 %v1071
    %1323 = vmatpush.bf16.msra.mxu0 %v1066
    %1324 = vmatpush.bf16.msra.mxu0 %v1061
    %1325 = vmatpush.bf16.msra.mxu0 %v1056
    %1326 = vmatmul.bf16.gmra.mxu0 %v430
    %v1327 = vpop.f32.mrf.mxu0
    %v1328 = vadd.f32 %v1315, %v1327
    %v1329 = vpop.f32.mrf.mxu0
    %1330 = vdwg.mxu0
    %1331 = vmatpush.bf16.msra.mxu0 %v1012
    %1332 = vmatpush.bf16.msra.mxu0 %v1007
    %1333 = vmatpush.bf16.msra.mxu0 %v1002
    %1334 = vmatpush.bf16.msra.mxu0 %v997
    %1335 = vmatpush.bf16.msra.mxu0 %v992
    %1336 = vmatpush.bf16.msra.mxu0 %v987
    %1337 = vmatpush.bf16.msra.mxu0 %v982
    %1338 = vmatpush.bf16.msra.mxu0 %v977
    %1339 = vmatmul.bf16.gmra.mxu0 %v428
    %v1340 = vpop.f32.mrf.mxu0
    %v1341 = vadd.f32 %v583, %v1340
    %v1342 = vpop.f32.mrf.mxu0
    %1343 = vdwg.mxu0
    %1344 = vmatpush.bf16.msra.mxu0 %v1052
    %1345 = vmatpush.bf16.msra.mxu0 %v1047
    %1346 = vmatpush.bf16.msra.mxu0 %v1042
    %1347 = vmatpush.bf16.msra.mxu0 %v1037
    %1348 = vmatpush.bf16.msra.mxu0 %v1032
    %1349 = vmatpush.bf16.msra.mxu0 %v1027
    %1350 = vmatpush.bf16.msra.mxu0 %v1022
    %1351 = vmatpush.bf16.msra.mxu0 %v1017
    %1352 = vmatmul.bf16.gmra.mxu0 %v429
    %v1353 = vpop.f32.mrf.mxu0
    %v1354 = vadd.f32 %v1341, %v1353
    %v1355 = vpop.f32.mrf.mxu0
    %1356 = vdwg.mxu0
    %1357 = vmatpush.bf16.msra.mxu0 %v1092
    %1358 = vmatpush.bf16.msra.mxu0 %v1087
    %1359 = vmatpush.bf16.msra.mxu0 %v1082
    %1360 = vmatpush.bf16.msra.mxu0 %v1077
    %1361 = vmatpush.bf16.msra.mxu0 %v1072
    %1362 = vmatpush.bf16.msra.mxu0 %v1067
    %1363 = vmatpush.bf16.msra.mxu0 %v1062
    %1364 = vmatpush.bf16.msra.mxu0 %v1057
    %1365 = vmatmul.bf16.gmra.mxu0 %v430
    %v1366 = vpop.f32.mrf.mxu0
    %v1367 = vadd.f32 %v1354, %v1366
    %v1368 = vpop.f32.mrf.mxu0
    %1369 = vdwg.mxu0
    %1370 = vmatpush.bf16.msra.mxu0 %v1013
    %1371 = vmatpush.bf16.msra.mxu0 %v1008
    %1372 = vmatpush.bf16.msra.mxu0 %v1003
    %1373 = vmatpush.bf16.msra.mxu0 %v998
    %1374 = vmatpush.bf16.msra.mxu0 %v993
    %1375 = vmatpush.bf16.msra.mxu0 %v988
    %1376 = vmatpush.bf16.msra.mxu0 %v983
    %1377 = vmatpush.bf16.msra.mxu0 %v978
    %1378 = vmatmul.bf16.gmra.mxu0 %v428
    %v1379 = vpop.f32.mrf.mxu0
    %v1380 = vadd.f32 %v584, %v1379
    %v1381 = vpop.f32.mrf.mxu0
    %1382 = vdwg.mxu0
    %1383 = vmatpush.bf16.msra.mxu0 %v1053
    %1384 = vmatpush.bf16.msra.mxu0 %v1048
    %1385 = vmatpush.bf16.msra.mxu0 %v1043
    %1386 = vmatpush.bf16.msra.mxu0 %v1038
    %1387 = vmatpush.bf16.msra.mxu0 %v1033
    %1388 = vmatpush.bf16.msra.mxu0 %v1028
    %1389 = vmatpush.bf16.msra.mxu0 %v1023
    %1390 = vmatpush.bf16.msra.mxu0 %v1018
    %1391 = vmatmul.bf16.gmra.mxu0 %v429
    %v1392 = vpop.f32.mrf.mxu0
    %v1393 = vadd.f32 %v1380, %v1392
    %v1394 = vpop.f32.mrf.mxu0
    %1395 = vdwg.mxu0
    %1396 = vmatpush.bf16.msra.mxu0 %v1093
    %1397 = vmatpush.bf16.msra.mxu0 %v1088
    %1398 = vmatpush.bf16.msra.mxu0 %v1083
    %1399 = vmatpush.bf16.msra.mxu0 %v1078
    %1400 = vmatpush.bf16.msra.mxu0 %v1073
    %1401 = vmatpush.bf16.msra.mxu0 %v1068
    %1402 = vmatpush.bf16.msra.mxu0 %v1063
    %1403 = vmatpush.bf16.msra.mxu0 %v1058
    %1404 = vmatmul.bf16.gmra.mxu0 %v430
    %v1405 = vpop.f32.mrf.mxu0
    %v1406 = vadd.f32 %v1393, %v1405
    %v1407 = vpop.f32.mrf.mxu0
    %1408 = vdwg.mxu0
    %v1409 = vmul.f32 %v1250, 0.01
    %v1410 = vmul.f32 %v1289, 0.01
    %v1411 = vmul.f32 %v1328, 0.01
    %v1412 = vmul.f32 %v1367, 0.01
    %v1413 = vmul.f32 %v1406, 0.01
    %v1414 = vmax.f32 %v1250, %v1409
    %v1415 = vmax.f32 %v1289, %v1410
    %v1416 = vmax.f32 %v1328, %v1411
    %v1417 = vmax.f32 %v1367, %v1412
    %v1418 = vmax.f32 %v1406, %v1413
    %v1419 = vpack.c.bf16 %v1414, %v1414
    %v1420 = vpack.c.bf16 %v1415, %v1415
    %v1421 = vpack.c.bf16 %v1416, %v1416
    %v1422 = vpack.c.bf16 %v1417, %v1417
    %v1423 = vpack.c.bf16 %v1418, %v1418
    %v1424 = vld [vmem:[#allocation10] sm:$0xff]
    %v1425 = vld [vmem:[#allocation10 + $0x8] sm:$0xf]
    %v1426 = vld [vmem:[#allocation10 + $0xc] sm:$0xff]
    %v1427 = vld [vmem:[#allocation10 + $0x14] sm:$0xf]
    %v1428 = vld [vmem:[#allocation10 + $0x18] sm:$0xff]
    %v1429 = vld [vmem:[#allocation10 + $0x20] sm:$0xf]
    %v1430 = vld [vmem:[#allocation10 + $0x24] sm:$0xff]
    %v1431 = vld [vmem:[#allocation10 + $0x2c] sm:$0xf]
    %v1432 = vld [vmem:[#allocation10 + $0x30] sm:$0xff]
    %v1433 = vld [vmem:[#allocation10 + $0x38] sm:$0xf]
    %v1434 = vld [vmem:[#allocation10 + $0x3c] sm:$0xff]
    %v1435 = vld [vmem:[#allocation10 + $0x44] sm:$0xf]
    %v1436 = vld [vmem:[#allocation10 + $0x48] sm:$0xff]
    %v1437 = vld [vmem:[#allocation10 + $0x50] sm:$0xf]
    %v1438 = vld [vmem:[#allocation10 + $0x54] sm:$0xff]
    %v1439 = vld [vmem:[#allocation10 + $0x5c] sm:$0xf]
    %v1440 = vld [vmem:[#allocation10 + $0x60] sm:$0xff]
    %v1441 = vld [vmem:[#allocation10 + $0x68] sm:$0xf]
    %v1442 = vld [vmem:[#allocation10 + $0x6c] sm:$0xff]
    %v1443 = vld [vmem:[#allocation10 + $0x74] sm:$0xf]
    %v1444 = vld [vmem:[#allocation10 + $0x78] sm:$0xff]
    %v1445 = vld [vmem:[#allocation10 + $0x80] sm:$0xf]
    %v1446 = vld [vmem:[#allocation10 + $0x84] sm:$0xff]
    %v1447 = vld [vmem:[#allocation10 + $0x8c] sm:$0xf]
    %v1448 = vld [vmem:[#allocation10 + $0x90] sm:$0xff]
    %v1449 = vld [vmem:[#allocation10 + $0x98] sm:$0xf]
    %v1450 = vld [vmem:[#allocation10 + $0x9c] sm:$0xff]
    %v1451 = vld [vmem:[#allocation10 + $0xa4] sm:$0xf]
    %v1452 = vld [vmem:[#allocation10 + $0xa8] sm:$0xff]
    %v1453 = vld [vmem:[#allocation10 + $0xb0] sm:$0xf]
    %v1454 = vld [vmem:[#allocation10 + $0xb4] sm:$0xff]
    %v1455 = vld [vmem:[#allocation10 + $0xbc] sm:$0xf]
    %v1456 = vld [vmem:[#allocation10 + $0xc0] sm:$0xff]
    %v1457 = vld [vmem:[#allocation10 + $0xc8] sm:$0xf]
    %v1458 = vld [vmem:[#allocation10 + $0xcc] sm:$0xff]
    %v1459 = vld [vmem:[#allocation10 + $0xd4] sm:$0xf]
    %v1460 = vld [vmem:[#allocation10 + $0xd8] sm:$0xff]
    %v1461 = vld [vmem:[#allocation10 + $0xe0] sm:$0xf]
    %v1462 = vld [vmem:[#allocation10 + $0xe4] sm:$0xff]
    %v1463 = vld [vmem:[#allocation10 + $0xec] sm:$0xf]
    %v1464 = vld [vmem:[#allocation10 + $0xf0] sm:$0xff]
    %v1465 = vld [vmem:[#allocation10 + $0xf8] sm:$0xf]
    %v1466 = vld [vmem:[#allocation10 + $0xfc] sm:$0xff]
    %v1467 = vld [vmem:[#allocation10 + $0x104] sm:$0xf]
    %v1468 = vld [vmem:[#allocation10 + $0x108] sm:$0xff]
    %v1469 = vld [vmem:[#allocation10 + $0x110] sm:$0xf]
    %v1470 = vld [vmem:[#allocation10 + $0x114] sm:$0xff]
    %v1471 = vld [vmem:[#allocation10 + $0x11c] sm:$0xf]
    %v1472 = vld [vmem:[#allocation10 + $0x120] sm:$0xff]
    %v1473 = vld [vmem:[#allocation10 + $0x128] sm:$0xf]
    %v1474 = vld [vmem:[#allocation10 + $0x12c] sm:$0xff]
    %v1475 = vld [vmem:[#allocation10 + $0x134] sm:$0xf]
    %v1476 = vld [vmem:[#allocation10 + $0x138] sm:$0xff]
    %v1477 = vld [vmem:[#allocation10 + $0x140] sm:$0xf]
    %v1478 = vld [vmem:[#allocation10 + $0x144] sm:$0xff]
    %v1479 = vld [vmem:[#allocation10 + $0x14c] sm:$0xf]
    %v1480 = vld [vmem:[#allocation10 + $0x150] sm:$0xff]
    %v1481 = vld [vmem:[#allocation10 + $0x158] sm:$0xf]
    %v1482 = vld [vmem:[#allocation10 + $0x15c] sm:$0xff]
    %v1483 = vld [vmem:[#allocation10 + $0x164] sm:$0xf]
    %v1484 = vld [vmem:[#allocation10 + $0x168] sm:$0xff]
    %v1485 = vld [vmem:[#allocation10 + $0x170] sm:$0xf]
    %v1486 = vld [vmem:[#allocation10 + $0x174] sm:$0xff]
    %v1487 = vld [vmem:[#allocation10 + $0x17c] sm:$0xf]
    %v1488 = vld [vmem:[#allocation10 + $0x180] sm:$0xff]
    %v1489 = vld [vmem:[#allocation10 + $0x188] sm:$0xf]
    %v1490 = vld [vmem:[#allocation10 + $0x18c] sm:$0xff]
    %v1491 = vld [vmem:[#allocation10 + $0x194] sm:$0xf]
    %v1492 = vld [vmem:[#allocation10 + $0x198] sm:$0xff]
    %v1493 = vld [vmem:[#allocation10 + $0x1a0] sm:$0xf]
    %v1494 = vld [vmem:[#allocation10 + $0x1a4] sm:$0xff]
    %v1495 = vld [vmem:[#allocation10 + $0x1ac] sm:$0xf]
    %v1496 = vld [vmem:[#allocation10 + $0x1b0] sm:$0xff]
    %v1497 = vld [vmem:[#allocation10 + $0x1b8] sm:$0xf]
    %v1498 = vld [vmem:[#allocation10 + $0x1bc] sm:$0xff]
    %v1499 = vld [vmem:[#allocation10 + $0x1c4] sm:$0xf]
    %v1500 = vld [vmem:[#allocation10 + $0x1c8] sm:$0xff]
    %v1501 = vld [vmem:[#allocation10 + $0x1d0] sm:$0xf]
    %v1502 = vld [vmem:[#allocation10 + $0x1d4] sm:$0xff]
    %v1503 = vld [vmem:[#allocation10 + $0x1dc] sm:$0xf]
    %v1504 = vld [vmem:[#allocation10 + $0x1e0] sm:$0xff]
    %v1505 = vld [vmem:[#allocation10 + $0x1e8] sm:$0xf]
    %v1506 = vld [vmem:[#allocation10 + $0x1ec] sm:$0xff]
    %v1507 = vld [vmem:[#allocation10 + $0x1f4] sm:$0xf]
    %v1508 = vld [vmem:[#allocation10 + $0x1f8] sm:$0xff]
    %v1509 = vld [vmem:[#allocation10 + $0x200] sm:$0xf]
    %v1510 = vld [vmem:[#allocation10 + $0x204] sm:$0xff]
    %v1511 = vld [vmem:[#allocation10 + $0x20c] sm:$0xf]
    %v1512 = vld [vmem:[#allocation10 + $0x210] sm:$0xff]
    %v1513 = vld [vmem:[#allocation10 + $0x218] sm:$0xf]
    %v1514 = vld [vmem:[#allocation10 + $0x21c] sm:$0xff]
    %v1515 = vld [vmem:[#allocation10 + $0x224] sm:$0xf]
    %v1516 = vld [vmem:[#allocation10 + $0x228] sm:$0xff]
    %v1517 = vld [vmem:[#allocation10 + $0x230] sm:$0xf]
    %v1518 = vld [vmem:[#allocation10 + $0x234] sm:$0xff]
    %v1519 = vld [vmem:[#allocation10 + $0x23c] sm:$0xf]
    %v1520 = vld [vmem:[#allocation10 + $0x240] sm:$0xff]
    %v1521 = vld [vmem:[#allocation10 + $0x248] sm:$0xf]
    %v1522 = vld [vmem:[#allocation10 + $0x24c] sm:$0xff]
    %v1523 = vld [vmem:[#allocation10 + $0x254] sm:$0xf]
    %v1524 = vld [vmem:[#allocation10 + $0x258] sm:$0xff]
    %v1525 = vld [vmem:[#allocation10 + $0x260] sm:$0xf]
    %v1526 = vld [vmem:[#allocation10 + $0x264] sm:$0xff]
    %v1527 = vld [vmem:[#allocation10 + $0x26c] sm:$0xf]
    %v1528 = vld [vmem:[#allocation10 + $0x270] sm:$0xff]
    %v1529 = vld [vmem:[#allocation10 + $0x278] sm:$0xf]
    %v1530 = vld [vmem:[#allocation10 + $0x27c] sm:$0xff]
    %v1531 = vld [vmem:[#allocation10 + $0x284] sm:$0xf]
    %v1532 = vld [vmem:[#allocation10 + $0x288] sm:$0xff]
    %v1533 = vld [vmem:[#allocation10 + $0x290] sm:$0xf]
    %v1534 = vld [vmem:[#allocation10 + $0x294] sm:$0xff]
    %v1535 = vld [vmem:[#allocation10 + $0x29c] sm:$0xf]
    %v1536 = vld [vmem:[#allocation10 + $0x2a0] sm:$0xff]
    %v1537 = vld [vmem:[#allocation10 + $0x2a8] sm:$0xf]
    %v1538 = vld [vmem:[#allocation10 + $0x2ac] sm:$0xff]
    %v1539 = vld [vmem:[#allocation10 + $0x2b4] sm:$0xf]
    %v1540 = vld [vmem:[#allocation10 + $0x2b8] sm:$0xff]
    %v1541 = vld [vmem:[#allocation10 + $0x2c0] sm:$0xf]
    %v1542 = vld [vmem:[#allocation10 + $0x2c4] sm:$0xff]
    %v1543 = vld [vmem:[#allocation10 + $0x2cc] sm:$0xf]
    %v1544 = vld [vmem:[#allocation10 + $0x2d0] sm:$0xff]
    %v1545 = vld [vmem:[#allocation10 + $0x2d8] sm:$0xf]
    %v1546 = vld [vmem:[#allocation10 + $0x2dc] sm:$0xff]
    %v1547 = vld [vmem:[#allocation10 + $0x2e4] sm:$0xf]
    %v1548 = vld [vmem:[#allocation10 + $0x2e8] sm:$0xff]
    %v1549 = vld [vmem:[#allocation10 + $0x2f0] sm:$0xf]
    %v1550 = vld [vmem:[#allocation10 + $0x2f4] sm:$0xff]
    %v1551 = vld [vmem:[#allocation10 + $0x2fc] sm:$0xf]
    %v1552 = vld [vmem:[#allocation10 + $0x300] sm:$0xff]
    %v1553 = vld [vmem:[#allocation10 + $0x308] sm:$0xf]
    %v1554 = vld [vmem:[#allocation10 + $0x30c] sm:$0xff]
    %v1555 = vld [vmem:[#allocation10 + $0x314] sm:$0xf]
    %v1556 = vld [vmem:[#allocation10 + $0x318] sm:$0xff]
    %v1557 = vld [vmem:[#allocation10 + $0x320] sm:$0xf]
    %v1558 = vld [vmem:[#allocation10 + $0x324] sm:$0xff]
    %v1559 = vld [vmem:[#allocation10 + $0x32c] sm:$0xf]
    %v1560 = vld [vmem:[#allocation10 + $0x330] sm:$0xff]
    %v1561 = vld [vmem:[#allocation10 + $0x338] sm:$0xf]
    %v1562 = vld [vmem:[#allocation10 + $0x33c] sm:$0xff]
    %v1563 = vld [vmem:[#allocation10 + $0x344] sm:$0xf]
    %v1564 = vld [vmem:[#allocation10 + $0x348] sm:$0xff]
    %v1565 = vld [vmem:[#allocation10 + $0x350] sm:$0xf]
    %v1566 = vld [vmem:[#allocation10 + $0x354] sm:$0xff]
    %v1567 = vld [vmem:[#allocation10 + $0x35c] sm:$0xf]
    %v1568 = vld [vmem:[#allocation10 + $0x360] sm:$0xff]
    %v1569 = vld [vmem:[#allocation10 + $0x368] sm:$0xf]
    %v1570 = vld [vmem:[#allocation10 + $0x36c] sm:$0xff]
    %v1571 = vld [vmem:[#allocation10 + $0x374] sm:$0xf]
    %v1572 = vld [vmem:[#allocation10 + $0x378] sm:$0xff]
    %v1573 = vld [vmem:[#allocation10 + $0x380] sm:$0xf]
    %v1574 = vld [vmem:[#allocation10 + $0x384] sm:$0xff]
    %v1575 = vld [vmem:[#allocation10 + $0x38c] sm:$0xf]
    %v1576 = vld [vmem:[#allocation10 + $0x390] sm:$0xff]
    %v1577 = vld [vmem:[#allocation10 + $0x398] sm:$0xf]
    %v1578 = vld [vmem:[#allocation10 + $0x39c] sm:$0xff]
    %v1579 = vld [vmem:[#allocation10 + $0x3a4] sm:$0xf]
    %v1580 = vld [vmem:[#allocation10 + $0x3a8] sm:$0xff]
    %v1581 = vld [vmem:[#allocation10 + $0x3b0] sm:$0xf]
    %v1582 = vld [vmem:[#allocation10 + $0x3b4] sm:$0xff]
    %v1583 = vld [vmem:[#allocation10 + $0x3bc] sm:$0xf]
    %s1584 = scalar_lea.vmem [#allocation13], 3
    %v1585 = vld [vmem:[%s1584] ss:$8 sm:$0x7]
    %v1587 = vperm.slane %v1585, 0
    %v1588 = vperm.slane %v1585, 1
    %v1589 = vperm.slane %v1585, 2
    %v1753 = vunpack.c.l.b16 %v1424
    %v1754 = vunpack.c.h.b16 %v1424
    %v1755 = vunpack.c.l.b16 %v1425
    %v1756 = vunpack.c.l.b16 %v1426
    %v1757 = vunpack.c.h.b16 %v1426
    %v1758 = vunpack.c.l.b16 %v1427
    %v1759 = vunpack.c.l.b16 %v1428
    %v1760 = vunpack.c.h.b16 %v1428
    %v1761 = vunpack.c.l.b16 %v1429
    %v1762 = vunpack.c.l.b16 %v1430
    %v1763 = vunpack.c.h.b16 %v1430
    %v1764 = vunpack.c.l.b16 %v1431
    %v1765 = vunpack.c.l.b16 %v1432
    %v1766 = vunpack.c.h.b16 %v1432
    %v1767 = vunpack.c.l.b16 %v1433
    %v1768 = vunpack.c.l.b16 %v1434
    %v1769 = vunpack.c.h.b16 %v1434
    %v1770 = vunpack.c.l.b16 %v1435
    %v1771 = vunpack.c.l.b16 %v1436
    %v1772 = vunpack.c.h.b16 %v1436
    %v1773 = vunpack.c.l.b16 %v1437
    %v1774 = vunpack.c.l.b16 %v1438
    %v1775 = vunpack.c.h.b16 %v1438
    %v1776 = vunpack.c.l.b16 %v1439
    %v1777 = vunpack.c.l.b16 %v1440
    %v1778 = vunpack.c.h.b16 %v1440
    %v1779 = vunpack.c.l.b16 %v1441
    %v1780 = vunpack.c.l.b16 %v1442
    %v1781 = vunpack.c.h.b16 %v1442
    %v1782 = vunpack.c.l.b16 %v1443
    %v1783 = vunpack.c.l.b16 %v1444
    %v1784 = vunpack.c.h.b16 %v1444
    %v1785 = vunpack.c.l.b16 %v1445
    %v1786 = vunpack.c.l.b16 %v1446
    %v1787 = vunpack.c.h.b16 %v1446
    %v1788 = vunpack.c.l.b16 %v1447
    %v1789 = vunpack.c.l.b16 %v1448
    %v1790 = vunpack.c.h.b16 %v1448
    %v1791 = vunpack.c.l.b16 %v1449
    %v1792 = vunpack.c.l.b16 %v1450
    %v1793 = vunpack.c.h.b16 %v1450
    %v1794 = vunpack.c.l.b16 %v1451
    %v1795 = vunpack.c.l.b16 %v1452
    %v1796 = vunpack.c.h.b16 %v1452
    %v1797 = vunpack.c.l.b16 %v1453
    %v1798 = vunpack.c.l.b16 %v1454
    %v1799 = vunpack.c.h.b16 %v1454
    %v1800 = vunpack.c.l.b16 %v1455
    %v1801 = vunpack.c.l.b16 %v1456
    %v1802 = vunpack.c.h.b16 %v1456
    %v1803 = vunpack.c.l.b16 %v1457
    %v1804 = vunpack.c.l.b16 %v1458
    %v1805 = vunpack.c.h.b16 %v1458
    %v1806 = vunpack.c.l.b16 %v1459
    %v1807 = vunpack.c.l.b16 %v1460
    %v1808 = vunpack.c.h.b16 %v1460
    %v1809 = vunpack.c.l.b16 %v1461
    %v1810 = vunpack.c.l.b16 %v1462
    %v1811 = vunpack.c.h.b16 %v1462
    %v1812 = vunpack.c.l.b16 %v1463
    %v1813 = vunpack.c.l.b16 %v1464
    %v1814 = vunpack.c.h.b16 %v1464
    %v1815 = vunpack.c.l.b16 %v1465
    %v1816 = vunpack.c.l.b16 %v1466
    %v1817 = vunpack.c.h.b16 %v1466
    %v1818 = vunpack.c.l.b16 %v1467
    %v1819 = vunpack.c.l.b16 %v1468
    %v1820 = vunpack.c.h.b16 %v1468
    %v1821 = vunpack.c.l.b16 %v1469
    %v1822 = vunpack.c.l.b16 %v1470
    %v1823 = vunpack.c.h.b16 %v1470
    %v1824 = vunpack.c.l.b16 %v1471
    %v1825 = vunpack.c.l.b16 %v1472
    %v1826 = vunpack.c.h.b16 %v1472
    %v1827 = vunpack.c.l.b16 %v1473
    %v1828 = vunpack.c.l.b16 %v1474
    %v1829 = vunpack.c.h.b16 %v1474
    %v1830 = vunpack.c.l.b16 %v1475
    %v1831 = vunpack.c.l.b16 %v1476
    %v1832 = vunpack.c.h.b16 %v1476
    %v1833 = vunpack.c.l.b16 %v1477
    %v1834 = vunpack.c.l.b16 %v1478
    %v1835 = vunpack.c.h.b16 %v1478
    %v1836 = vunpack.c.l.b16 %v1479
    %v1837 = vunpack.c.l.b16 %v1480
    %v1838 = vunpack.c.h.b16 %v1480
    %v1839 = vunpack.c.l.b16 %v1481
    %v1840 = vunpack.c.l.b16 %v1482
    %v1841 = vunpack.c.h.b16 %v1482
    %v1842 = vunpack.c.l.b16 %v1483
    %v1843 = vunpack.c.l.b16 %v1484
    %v1844 = vunpack.c.h.b16 %v1484
    %v1845 = vunpack.c.l.b16 %v1485
    %v1846 = vunpack.c.l.b16 %v1486
    %v1847 = vunpack.c.h.b16 %v1486
    %v1848 = vunpack.c.l.b16 %v1487
    %v1849 = vunpack.c.l.b16 %v1488
    %v1850 = vunpack.c.h.b16 %v1488
    %v1851 = vunpack.c.l.b16 %v1489
    %v1852 = vunpack.c.l.b16 %v1490
    %v1853 = vunpack.c.h.b16 %v1490
    %v1854 = vunpack.c.l.b16 %v1491
    %v1855 = vunpack.c.l.b16 %v1492
    %v1856 = vunpack.c.h.b16 %v1492
    %v1857 = vunpack.c.l.b16 %v1493
    %v1858 = vunpack.c.l.b16 %v1494
    %v1859 = vunpack.c.h.b16 %v1494
    %v1860 = vunpack.c.l.b16 %v1495
    %v1861 = vunpack.c.l.b16 %v1496
    %v1862 = vunpack.c.h.b16 %v1496
    %v1863 = vunpack.c.l.b16 %v1497
    %v1864 = vunpack.c.l.b16 %v1498
    %v1865 = vunpack.c.h.b16 %v1498
    %v1866 = vunpack.c.l.b16 %v1499
    %v1867 = vunpack.c.l.b16 %v1500
    %v1868 = vunpack.c.h.b16 %v1500
    %v1869 = vunpack.c.l.b16 %v1501
    %v1870 = vunpack.c.l.b16 %v1502
    %v1871 = vunpack.c.h.b16 %v1502
    %v1872 = vunpack.c.l.b16 %v1503
    %v1873 = vunpack.c.l.b16 %v1504
    %v1874 = vunpack.c.h.b16 %v1504
    %v1875 = vunpack.c.l.b16 %v1505
    %v1876 = vunpack.c.l.b16 %v1506
    %v1877 = vunpack.c.h.b16 %v1506
    %v1878 = vunpack.c.l.b16 %v1507
    %v1879 = vunpack.c.l.b16 %v1508
    %v1880 = vunpack.c.h.b16 %v1508
    %v1881 = vunpack.c.l.b16 %v1509
    %v1882 = vunpack.c.l.b16 %v1510
    %v1883 = vunpack.c.h.b16 %v1510
    %v1884 = vunpack.c.l.b16 %v1511
    %v1885 = vunpack.c.l.b16 %v1512
    %v1886 = vunpack.c.h.b16 %v1512
    %v1887 = vunpack.c.l.b16 %v1513
    %v1888 = vunpack.c.l.b16 %v1514
    %v1889 = vunpack.c.h.b16 %v1514
    %v1890 = vunpack.c.l.b16 %v1515
    %v1891 = vunpack.c.l.b16 %v1516
    %v1892 = vunpack.c.h.b16 %v1516
    %v1893 = vunpack.c.l.b16 %v1517
    %v1894 = vunpack.c.l.b16 %v1518
    %v1895 = vunpack.c.h.b16 %v1518
    %v1896 = vunpack.c.l.b16 %v1519
    %v1897 = vunpack.c.l.b16 %v1520
    %v1898 = vunpack.c.h.b16 %v1520
    %v1899 = vunpack.c.l.b16 %v1521
    %v1900 = vunpack.c.l.b16 %v1522
    %v1901 = vunpack.c.h.b16 %v1522
    %v1902 = vunpack.c.l.b16 %v1523
    %v1903 = vunpack.c.l.b16 %v1524
    %v1904 = vunpack.c.h.b16 %v1524
    %v1905 = vunpack.c.l.b16 %v1525
    %v1906 = vunpack.c.l.b16 %v1526
    %v1907 = vunpack.c.h.b16 %v1526
    %v1908 = vunpack.c.l.b16 %v1527
    %v1909 = vunpack.c.l.b16 %v1528
    %v1910 = vunpack.c.h.b16 %v1528
    %v1911 = vunpack.c.l.b16 %v1529
    %v1912 = vunpack.c.l.b16 %v1530
    %v1913 = vunpack.c.h.b16 %v1530
    %v1914 = vunpack.c.l.b16 %v1531
    %v1915 = vunpack.c.l.b16 %v1532
    %v1916 = vunpack.c.h.b16 %v1532
    %v1917 = vunpack.c.l.b16 %v1533
    %v1918 = vunpack.c.l.b16 %v1534
    %v1919 = vunpack.c.h.b16 %v1534
    %v1920 = vunpack.c.l.b16 %v1535
    %v1921 = vunpack.c.l.b16 %v1536
    %v1922 = vunpack.c.h.b16 %v1536
    %v1923 = vunpack.c.l.b16 %v1537
    %v1924 = vunpack.c.l.b16 %v1538
    %v1925 = vunpack.c.h.b16 %v1538
    %v1926 = vunpack.c.l.b16 %v1539
    %v1927 = vunpack.c.l.b16 %v1540
    %v1928 = vunpack.c.h.b16 %v1540
    %v1929 = vunpack.c.l.b16 %v1541
    %v1930 = vunpack.c.l.b16 %v1542
    %v1931 = vunpack.c.h.b16 %v1542
    %v1932 = vunpack.c.l.b16 %v1543
    %v1933 = vunpack.c.l.b16 %v1544
    %v1934 = vunpack.c.h.b16 %v1544
    %v1935 = vunpack.c.l.b16 %v1545
    %v1936 = vunpack.c.l.b16 %v1546
    %v1937 = vunpack.c.h.b16 %v1546
    %v1938 = vunpack.c.l.b16 %v1547
    %v1939 = vunpack.c.l.b16 %v1548
    %v1940 = vunpack.c.h.b16 %v1548
    %v1941 = vunpack.c.l.b16 %v1549
    %v1942 = vunpack.c.l.b16 %v1550
    %v1943 = vunpack.c.h.b16 %v1550
    %v1944 = vunpack.c.l.b16 %v1551
    %v1945 = vunpack.c.l.b16 %v1552
    %v1946 = vunpack.c.h.b16 %v1552
    %v1947 = vunpack.c.l.b16 %v1553
    %v1948 = vunpack.c.l.b16 %v1554
    %v1949 = vunpack.c.h.b16 %v1554
    %v1950 = vunpack.c.l.b16 %v1555
    %v1951 = vunpack.c.l.b16 %v1556
    %v1952 = vunpack.c.h.b16 %v1556
    %v1953 = vunpack.c.l.b16 %v1557
    %v1954 = vunpack.c.l.b16 %v1558
    %v1955 = vunpack.c.h.b16 %v1558
    %v1956 = vunpack.c.l.b16 %v1559
    %v1957 = vunpack.c.l.b16 %v1560
    %v1958 = vunpack.c.h.b16 %v1560
    %v1959 = vunpack.c.l.b16 %v1561
    %v1960 = vunpack.c.l.b16 %v1562
    %v1961 = vunpack.c.h.b16 %v1562
    %v1962 = vunpack.c.l.b16 %v1563
    %v1963 = vunpack.c.l.b16 %v1564
    %v1964 = vunpack.c.h.b16 %v1564
    %v1965 = vunpack.c.l.b16 %v1565
    %v1966 = vunpack.c.l.b16 %v1566
    %v1967 = vunpack.c.h.b16 %v1566
    %v1968 = vunpack.c.l.b16 %v1567
    %v1969 = vunpack.c.l.b16 %v1568
    %v1970 = vunpack.c.h.b16 %v1568
    %v1971 = vunpack.c.l.b16 %v1569
    %v1972 = vunpack.c.l.b16 %v1570
    %v1973 = vunpack.c.h.b16 %v1570
    %v1974 = vunpack.c.l.b16 %v1571
    %v1975 = vunpack.c.l.b16 %v1572
    %v1976 = vunpack.c.h.b16 %v1572
    %v1977 = vunpack.c.l.b16 %v1573
    %v1978 = vunpack.c.l.b16 %v1574
    %v1979 = vunpack.c.h.b16 %v1574
    %v1980 = vunpack.c.l.b16 %v1575
    %v1981 = vunpack.c.l.b16 %v1576
    %v1982 = vunpack.c.h.b16 %v1576
    %v1983 = vunpack.c.l.b16 %v1577
    %v1984 = vunpack.c.l.b16 %v1578
    %v1985 = vunpack.c.h.b16 %v1578
    %v1986 = vunpack.c.l.b16 %v1579
    %v1987 = vunpack.c.l.b16 %v1580
    %v1988 = vunpack.c.h.b16 %v1580
    %v1989 = vunpack.c.l.b16 %v1581
    %v1990 = vunpack.c.l.b16 %v1582
    %v1991 = vunpack.c.h.b16 %v1582
    %v1992 = vunpack.c.l.b16 %v1583
    %v1993 = vpack.c.b16 %v1756, %v1753
    %v1994 = vpack.c.b16 %v1757, %v1754
    %v1995 = vpack.c.b16 %v1758, %v1755
    %v1996 = vpack.c.b16 %v1762, %v1759
    %v1997 = vpack.c.b16 %v1763, %v1760
    %v1998 = vpack.c.b16 %v1764, %v1761
    %v1999 = vpack.c.b16 %v1768, %v1765
    %v2000 = vpack.c.b16 %v1769, %v1766
    %v2001 = vpack.c.b16 %v1770, %v1767
    %v2002 = vpack.c.b16 %v1774, %v1771
    %v2003 = vpack.c.b16 %v1775, %v1772
    %v2004 = vpack.c.b16 %v1776, %v1773
    %v2005 = vpack.c.b16 %v1780, %v1777
    %v2006 = vpack.c.b16 %v1781, %v1778
    %v2007 = vpack.c.b16 %v1782, %v1779
    %v2008 = vpack.c.b16 %v1786, %v1783
    %v2009 = vpack.c.b16 %v1787, %v1784
    %v2010 = vpack.c.b16 %v1788, %v1785
    %v2011 = vpack.c.b16 %v1792, %v1789
    %v2012 = vpack.c.b16 %v1793, %v1790
    %v2013 = vpack.c.b16 %v1794, %v1791
    %v2014 = vpack.c.b16 %v1798, %v1795
    %v2015 = vpack.c.b16 %v1799, %v1796
    %v2016 = vpack.c.b16 %v1800, %v1797
    %v2017 = vpack.c.b16 %v1804, %v1801
    %v2018 = vpack.c.b16 %v1805, %v1802
    %v2019 = vpack.c.b16 %v1806, %v1803
    %v2020 = vpack.c.b16 %v1810, %v1807
    %v2021 = vpack.c.b16 %v1811, %v1808
    %v2022 = vpack.c.b16 %v1812, %v1809
    %v2023 = vpack.c.b16 %v1816, %v1813
    %v2024 = vpack.c.b16 %v1817, %v1814
    %v2025 = vpack.c.b16 %v1818, %v1815
    %v2026 = vpack.c.b16 %v1822, %v1819
    %v2027 = vpack.c.b16 %v1823, %v1820
    %v2028 = vpack.c.b16 %v1824, %v1821
    %v2029 = vpack.c.b16 %v1828, %v1825
    %v2030 = vpack.c.b16 %v1829, %v1826
    %v2031 = vpack.c.b16 %v1830, %v1827
    %v2032 = vpack.c.b16 %v1834, %v1831
    %v2033 = vpack.c.b16 %v1835, %v1832
    %v2034 = vpack.c.b16 %v1836, %v1833
    %v2035 = vpack.c.b16 %v1840, %v1837
    %v2036 = vpack.c.b16 %v1841, %v1838
    %v2037 = vpack.c.b16 %v1842, %v1839
    %v2038 = vpack.c.b16 %v1846, %v1843
    %v2039 = vpack.c.b16 %v1847, %v1844
    %v2040 = vpack.c.b16 %v1848, %v1845
    %v2041 = vpack.c.b16 %v1852, %v1849
    %v2042 = vpack.c.b16 %v1853, %v1850
    %v2043 = vpack.c.b16 %v1854, %v1851
    %v2044 = vpack.c.b16 %v1858, %v1855
    %v2045 = vpack.c.b16 %v1859, %v1856
    %v2046 = vpack.c.b16 %v1860, %v1857
    %v2047 = vpack.c.b16 %v1864, %v1861
    %v2048 = vpack.c.b16 %v1865, %v1862
    %v2049 = vpack.c.b16 %v1866, %v1863
    %v2050 = vpack.c.b16 %v1870, %v1867
    %v2051 = vpack.c.b16 %v1871, %v1868
    %v2052 = vpack.c.b16 %v1872, %v1869
    %v2053 = vpack.c.b16 %v1876, %v1873
    %v2054 = vpack.c.b16 %v1877, %v1874
    %v2055 = vpack.c.b16 %v1878, %v1875
    %v2056 = vpack.c.b16 %v1882, %v1879
    %v2057 = vpack.c.b16 %v1883, %v1880
    %v2058 = vpack.c.b16 %v1884, %v1881
    %v2059 = vpack.c.b16 %v1888, %v1885
    %v2060 = vpack.c.b16 %v1889, %v1886
    %v2061 = vpack.c.b16 %v1890, %v1887
    %v2062 = vpack.c.b16 %v1894, %v1891
    %v2063 = vpack.c.b16 %v1895, %v1892
    %v2064 = vpack.c.b16 %v1896, %v1893
    %v2065 = vpack.c.b16 %v1900, %v1897
    %v2066 = vpack.c.b16 %v1901, %v1898
    %v2067 = vpack.c.b16 %v1902, %v1899
    %v2068 = vpack.c.b16 %v1906, %v1903
    %v2069 = vpack.c.b16 %v1907, %v1904
    %v2070 = vpack.c.b16 %v1908, %v1905
    %v2071 = vpack.c.b16 %v1912, %v1909
    %v2072 = vpack.c.b16 %v1913, %v1910
    %v2073 = vpack.c.b16 %v1914, %v1911
    %v2074 = vpack.c.b16 %v1918, %v1915
    %v2075 = vpack.c.b16 %v1919, %v1916
    %v2076 = vpack.c.b16 %v1920, %v1917
    %v2077 = vpack.c.b16 %v1924, %v1921
    %v2078 = vpack.c.b16 %v1925, %v1922
    %v2079 = vpack.c.b16 %v1926, %v1923
    %v2080 = vpack.c.b16 %v1930, %v1927
    %v2081 = vpack.c.b16 %v1931, %v1928
    %v2082 = vpack.c.b16 %v1932, %v1929
    %v2083 = vpack.c.b16 %v1936, %v1933
    %v2084 = vpack.c.b16 %v1937, %v1934
    %v2085 = vpack.c.b16 %v1938, %v1935
    %v2086 = vpack.c.b16 %v1942, %v1939
    %v2087 = vpack.c.b16 %v1943, %v1940
    %v2088 = vpack.c.b16 %v1944, %v1941
    %v2089 = vpack.c.b16 %v1948, %v1945
    %v2090 = vpack.c.b16 %v1949, %v1946
    %v2091 = vpack.c.b16 %v1950, %v1947
    %v2092 = vpack.c.b16 %v1954, %v1951
    %v2093 = vpack.c.b16 %v1955, %v1952
    %v2094 = vpack.c.b16 %v1956, %v1953
    %v2095 = vpack.c.b16 %v1960, %v1957
    %v2096 = vpack.c.b16 %v1961, %v1958
    %v2097 = vpack.c.b16 %v1962, %v1959
    %v2098 = vpack.c.b16 %v1966, %v1963
    %v2099 = vpack.c.b16 %v1967, %v1964
    %v2100 = vpack.c.b16 %v1968, %v1965
    %v2101 = vpack.c.b16 %v1972, %v1969
    %v2102 = vpack.c.b16 %v1973, %v1970
    %v2103 = vpack.c.b16 %v1974, %v1971
    %v2104 = vpack.c.b16 %v1978, %v1975
    %v2105 = vpack.c.b16 %v1979, %v1976
    %v2106 = vpack.c.b16 %v1980, %v1977
    %v2107 = vpack.c.b16 %v1984, %v1981
    %v2108 = vpack.c.b16 %v1985, %v1982
    %v2109 = vpack.c.b16 %v1986, %v1983
    %v2110 = vpack.c.b16 %v1990, %v1987
    %v2111 = vpack.c.b16 %v1991, %v1988
    %v2112 = vpack.c.b16 %v1992, %v1989
    %2233 = vmatpush.bf16.msra.mxu0 %v2014
    %2234 = vmatpush.bf16.msra.mxu0 %v2011
    %2235 = vmatpush.bf16.msra.mxu0 %v2008
    %2236 = vmatpush.bf16.msra.mxu0 %v2005
    %2237 = vmatpush.bf16.msra.mxu0 %v2002
    %2238 = vmatpush.bf16.msra.mxu0 %v1999
    %2239 = vmatpush.bf16.msra.mxu0 %v1996
    %2240 = vmatpush.bf16.msra.mxu0 %v1993
    %2241 = vmatmul.bf16.gmra.mxu0 %v1419
    %v2242 = vpop.f32.mrf.mxu0
    %v2243 = vadd.f32 %v1587, %v2242
    %v2244 = vpop.f32.mrf.mxu0
    %2245 = vdwg.mxu0
    %2246 = vmatpush.bf16.msra.mxu0 %v2038
    %2247 = vmatpush.bf16.msra.mxu0 %v2035
    %2248 = vmatpush.bf16.msra.mxu0 %v2032
    %2249 = vmatpush.bf16.msra.mxu0 %v2029
    %2250 = vmatpush.bf16.msra.mxu0 %v2026
    %2251 = vmatpush.bf16.msra.mxu0 %v2023
    %2252 = vmatpush.bf16.msra.mxu0 %v2020
    %2253 = vmatpush.bf16.msra.mxu0 %v2017
    %2254 = vmatmul.bf16.gmra.mxu0 %v1420
    %v2255 = vpop.f32.mrf.mxu0
    %v2256 = vadd.f32 %v2243, %v2255
    %v2257 = vpop.f32.mrf.mxu0
    %2258 = vdwg.mxu0
    %2259 = vmatpush.bf16.msra.mxu0 %v2062
    %2260 = vmatpush.bf16.msra.mxu0 %v2059
    %2261 = vmatpush.bf16.msra.mxu0 %v2056
    %2262 = vmatpush.bf16.msra.mxu0 %v2053
    %2263 = vmatpush.bf16.msra.mxu0 %v2050
    %2264 = vmatpush.bf16.msra.mxu0 %v2047
    %2265 = vmatpush.bf16.msra.mxu0 %v2044
    %2266 = vmatpush.bf16.msra.mxu0 %v2041
    %2267 = vmatmul.bf16.gmra.mxu0 %v1421
    %v2268 = vpop.f32.mrf.mxu0
    %v2269 = vadd.f32 %v2256, %v2268
    %v2270 = vpop.f32.mrf.mxu0
    %2271 = vdwg.mxu0
    %2272 = vmatpush.bf16.msra.mxu0 %v2086
    %2273 = vmatpush.bf16.msra.mxu0 %v2083
    %2274 = vmatpush.bf16.msra.mxu0 %v2080
    %2275 = vmatpush.bf16.msra.mxu0 %v2077
    %2276 = vmatpush.bf16.msra.mxu0 %v2074
    %2277 = vmatpush.bf16.msra.mxu0 %v2071
    %2278 = vmatpush.bf16.msra.mxu0 %v2068
    %2279 = vmatpush.bf16.msra.mxu0 %v2065
    %2280 = vmatmul.bf16.gmra.mxu0 %v1422
    %v2281 = vpop.f32.mrf.mxu0
    %v2282 = vadd.f32 %v2269, %v2281
    %v2283 = vpop.f32.mrf.mxu0
    %2284 = vdwg.mxu0
    %2285 = vmatpush.bf16.msra.mxu0 %v2110
    %2286 = vmatpush.bf16.msra.mxu0 %v2107
    %2287 = vmatpush.bf16.msra.mxu0 %v2104
    %2288 = vmatpush.bf16.msra.mxu0 %v2101
    %2289 = vmatpush.bf16.msra.mxu0 %v2098
    %2290 = vmatpush.bf16.msra.mxu0 %v2095
    %2291 = vmatpush.bf16.msra.mxu0 %v2092
    %2292 = vmatpush.bf16.msra.mxu0 %v2089
    %2293 = vmatmul.bf16.gmra.mxu0 %v1423
    %v2294 = vpop.f32.mrf.mxu0
    %v2295 = vadd.f32 %v2282, %v2294
    %v2296 = vpop.f32.mrf.mxu0
    %2297 = vdwg.mxu0
    %2298 = vmatpush.bf16.msra.mxu0 %v2015
    %2299 = vmatpush.bf16.msra.mxu0 %v2012
    %2300 = vmatpush.bf16.msra.mxu0 %v2009
    %2301 = vmatpush.bf16.msra.mxu0 %v2006
    %2302 = vmatpush.bf16.msra.mxu0 %v2003
    %2303 = vmatpush.bf16.msra.mxu0 %v2000
    %2304 = vmatpush.bf16.msra.mxu0 %v1997
    %2305 = vmatpush.bf16.msra.mxu0 %v1994
    %2306 = vmatmul.bf16.gmra.mxu0 %v1419
    %v2307 = vpop.f32.mrf.mxu0
    %v2308 = vadd.f32 %v1588, %v2307
    %v2309 = vpop.f32.mrf.mxu0
    %2310 = vdwg.mxu0
    %2311 = vmatpush.bf16.msra.mxu0 %v2039
    %2312 = vmatpush.bf16.msra.mxu0 %v2036
    %2313 = vmatpush.bf16.msra.mxu0 %v2033
    %2314 = vmatpush.bf16.msra.mxu0 %v2030
    %2315 = vmatpush.bf16.msra.mxu0 %v2027
    %2316 = vmatpush.bf16.msra.mxu0 %v2024
    %2317 = vmatpush.bf16.msra.mxu0 %v2021
    %2318 = vmatpush.bf16.msra.mxu0 %v2018
    %2319 = vmatmul.bf16.gmra.mxu0 %v1420
    %v2320 = vpop.f32.mrf.mxu0
    %v2321 = vadd.f32 %v2308, %v2320
    %v2322 = vpop.f32.mrf.mxu0
    %2323 = vdwg.mxu0
    %2324 = vmatpush.bf16.msra.mxu0 %v2063
    %2325 = vmatpush.bf16.msra.mxu0 %v2060
    %2326 = vmatpush.bf16.msra.mxu0 %v2057
    %2327 = vmatpush.bf16.msra.mxu0 %v2054
    %2328 = vmatpush.bf16.msra.mxu0 %v2051
    %2329 = vmatpush.bf16.msra.mxu0 %v2048
    %2330 = vmatpush.bf16.msra.mxu0 %v2045
    %2331 = vmatpush.bf16.msra.mxu0 %v2042
    %2332 = vmatmul.bf16.gmra.mxu0 %v1421
    %v2333 = vpop.f32.mrf.mxu0
    %v2334 = vadd.f32 %v2321, %v2333
    %v2335 = vpop.f32.mrf.mxu0
    %2336 = vdwg.mxu0
    %2337 = vmatpush.bf16.msra.mxu0 %v2087
    %2338 = vmatpush.bf16.msra.mxu0 %v2084
    %2339 = vmatpush.bf16.msra.mxu0 %v2081
    %2340 = vmatpush.bf16.msra.mxu0 %v2078
    %2341 = vmatpush.bf16.msra.mxu0 %v2075
    %2342 = vmatpush.bf16.msra.mxu0 %v2072
    %2343 = vmatpush.bf16.msra.mxu0 %v2069
    %2344 = vmatpush.bf16.msra.mxu0 %v2066
    %2345 = vmatmul.bf16.gmra.mxu0 %v1422
    %v2346 = vpop.f32.mrf.mxu0
    %v2347 = vadd.f32 %v2334, %v2346
    %v2348 = vpop.f32.mrf.mxu0
    %2349 = vdwg.mxu0
    %2350 = vmatpush.bf16.msra.mxu0 %v2111
    %2351 = vmatpush.bf16.msra.mxu0 %v2108
    %2352 = vmatpush.bf16.msra.mxu0 %v2105
    %2353 = vmatpush.bf16.msra.mxu0 %v2102
    %2354 = vmatpush.bf16.msra.mxu0 %v2099
    %2355 = vmatpush.bf16.msra.mxu0 %v2096
    %2356 = vmatpush.bf16.msra.mxu0 %v2093
    %2357 = vmatpush.bf16.msra.mxu0 %v2090
    %2358 = vmatmul.bf16.gmra.mxu0 %v1423
    %v2359 = vpop.f32.mrf.mxu0
    %v2360 = vadd.f32 %v2347, %v2359
    %v2361 = vpop.f32.mrf.mxu0
    %2362 = vdwg.mxu0
    %2363 = vmatpush.bf16.msra.mxu0 %v2016
    %2364 = vmatpush.bf16.msra.mxu0 %v2013
    %2365 = vmatpush.bf16.msra.mxu0 %v2010
    %2366 = vmatpush.bf16.msra.mxu0 %v2007
    %2367 = vmatpush.bf16.msra.mxu0 %v2004
    %2368 = vmatpush.bf16.msra.mxu0 %v2001
    %2369 = vmatpush.bf16.msra.mxu0 %v1998
    %2370 = vmatpush.bf16.msra.mxu0 %v1995
    %2371 = vmatmul.bf16.gmra.mxu0 %v1419
    %v2372 = vpop.f32.mrf.mxu0
    %v2373 = vadd.f32 %v1589, %v2372
    %v2374 = vpop.f32.mrf.mxu0
    %2375 = vdwg.mxu0
    %2376 = vmatpush.bf16.msra.mxu0 %v2040
    %2377 = vmatpush.bf16.msra.mxu0 %v2037
    %2378 = vmatpush.bf16.msra.mxu0 %v2034
    %2379 = vmatpush.bf16.msra.mxu0 %v2031
    %2380 = vmatpush.bf16.msra.mxu0 %v2028
    %2381 = vmatpush.bf16.msra.mxu0 %v2025
    %2382 = vmatpush.bf16.msra.mxu0 %v2022
    %2383 = vmatpush.bf16.msra.mxu0 %v2019
    %2384 = vmatmul.bf16.gmra.mxu0 %v1420
    %v2385 = vpop.f32.mrf.mxu0
    %v2386 = vadd.f32 %v2373, %v2385
    %v2387 = vpop.f32.mrf.mxu0
    %2388 = vdwg.mxu0
    %2389 = vmatpush.bf16.msra.mxu0 %v2064
    %2390 = vmatpush.bf16.msra.mxu0 %v2061
    %2391 = vmatpush.bf16.msra.mxu0 %v2058
    %2392 = vmatpush.bf16.msra.mxu0 %v2055
    %2393 = vmatpush.bf16.msra.mxu0 %v2052
    %2394 = vmatpush.bf16.msra.mxu0 %v2049
    %2395 = vmatpush.bf16.msra.mxu0 %v2046
    %2396 = vmatpush.bf16.msra.mxu0 %v2043
    %2397 = vmatmul.bf16.gmra.mxu0 %v1421
    %v2398 = vpop.f32.mrf.mxu0
    %v2399 = vadd.f32 %v2386, %v2398
    %v2400 = vpop.f32.mrf.mxu0
    %2401 = vdwg.mxu0
    %2402 = vmatpush.bf16.msra.mxu0 %v2088
    %2403 = vmatpush.bf16.msra.mxu0 %v2085
    %2404 = vmatpush.bf16.msra.mxu0 %v2082
    %2405 = vmatpush.bf16.msra.mxu0 %v2079
    %2406 = vmatpush.bf16.msra.mxu0 %v2076
    %2407 = vmatpush.bf16.msra.mxu0 %v2073
    %2408 = vmatpush.bf16.msra.mxu0 %v2070
    %2409 = vmatpush.bf16.msra.mxu0 %v2067
    %2410 = vmatmul.bf16.gmra.mxu0 %v1422
    %v2411 = vpop.f32.mrf.mxu0
    %v2412 = vadd.f32 %v2399, %v2411
    %v2413 = vpop.f32.mrf.mxu0
    %2414 = vdwg.mxu0
    %2415 = vmatpush.bf16.msra.mxu0 %v2112
    %2416 = vmatpush.bf16.msra.mxu0 %v2109
    %2417 = vmatpush.bf16.msra.mxu0 %v2106
    %2418 = vmatpush.bf16.msra.mxu0 %v2103
    %2419 = vmatpush.bf16.msra.mxu0 %v2100
    %2420 = vmatpush.bf16.msra.mxu0 %v2097
    %2421 = vmatpush.bf16.msra.mxu0 %v2094
    %2422 = vmatpush.bf16.msra.mxu0 %v2091
    %2423 = vmatmul.bf16.gmra.mxu0 %v1423
    %v2424 = vpop.f32.mrf.mxu0
    %v2425 = vadd.f32 %v2412, %v2424
    %v2426 = vpop.f32.mrf.mxu0
    %2427 = vdwg.mxu0
    %v2428 = vmul.f32 %v2295, 0.01
    %v2429 = vmul.f32 %v2360, 0.01
    %v2430 = vmul.f32 %v2425, 0.01
    %v2431 = vmax.f32 %v2295, %v2428
    %v2432 = vmax.f32 %v2360, %v2429
    %v2433 = vmax.f32 %v2425, %v2430
    %v2434 = vpack.c.bf16 %v2431, %v2431
    %v2435 = vpack.c.bf16 %v2432, %v2432
    %v2436 = vpack.c.bf16 %v2433, %v2433
    %v2437 = vld [vmem:[#allocation11] sm:$0xf]
    %v2438 = vld [vmem:[#allocation11 + $0x4] sm:$0xf]
    %v2439 = vld [vmem:[#allocation11 + $0x8] sm:$0xf]
    %v2440 = vld [vmem:[#allocation11 + $0xc] sm:$0xf]
    %v2441 = vld [vmem:[#allocation11 + $0x10] sm:$0xf]
    %v2442 = vld [vmem:[#allocation11 + $0x14] sm:$0xf]
    %v2443 = vld [vmem:[#allocation11 + $0x18] sm:$0xf]
    %v2444 = vld [vmem:[#allocation11 + $0x1c] sm:$0xf]
    %v2445 = vld [vmem:[#allocation11 + $0x20] sm:$0xf]
    %v2446 = vld [vmem:[#allocation11 + $0x24] sm:$0xf]
    %v2447 = vld [vmem:[#allocation11 + $0x28] sm:$0xf]
    %v2448 = vld [vmem:[#allocation11 + $0x2c] sm:$0xf]
    %v2449 = vld [vmem:[#allocation11 + $0x30] sm:$0xf]
    %v2450 = vld [vmem:[#allocation11 + $0x34] sm:$0xf]
    %v2451 = vld [vmem:[#allocation11 + $0x38] sm:$0xf]
    %v2452 = vld [vmem:[#allocation11 + $0x3c] sm:$0xf]
    %v2453 = vld [vmem:[#allocation11 + $0x40] sm:$0xf]
    %v2454 = vld [vmem:[#allocation11 + $0x44] sm:$0xf]
    %v2455 = vld [vmem:[#allocation11 + $0x48] sm:$0xf]
    %v2456 = vld [vmem:[#allocation11 + $0x4c] sm:$0xf]
    %v2457 = vld [vmem:[#allocation11 + $0x50] sm:$0xf]
    %v2458 = vld [vmem:[#allocation11 + $0x54] sm:$0xf]
    %v2459 = vld [vmem:[#allocation11 + $0x58] sm:$0xf]
    %v2460 = vld [vmem:[#allocation11 + $0x5c] sm:$0xf]
    %v2461 = vld [vmem:[#allocation11 + $0x60] sm:$0xf]
    %v2462 = vld [vmem:[#allocation11 + $0x64] sm:$0xf]
    %v2463 = vld [vmem:[#allocation11 + $0x68] sm:$0xf]
    %v2464 = vld [vmem:[#allocation11 + $0x6c] sm:$0xf]
    %v2465 = vld [vmem:[#allocation11 + $0x70] sm:$0xf]
    %v2466 = vld [vmem:[#allocation11 + $0x74] sm:$0xf]
    %v2467 = vld [vmem:[#allocation11 + $0x78] sm:$0xf]
    %v2468 = vld [vmem:[#allocation11 + $0x7c] sm:$0xf]
    %v2469 = vld [vmem:[#allocation11 + $0x80] sm:$0xf]
    %v2470 = vld [vmem:[#allocation11 + $0x84] sm:$0xf]
    %v2471 = vld [vmem:[#allocation11 + $0x88] sm:$0xf]
    %v2472 = vld [vmem:[#allocation11 + $0x8c] sm:$0xf]
    %v2473 = vld [vmem:[#allocation11 + $0x90] sm:$0xf]
    %v2474 = vld [vmem:[#allocation11 + $0x94] sm:$0xf]
    %v2475 = vld [vmem:[#allocation11 + $0x98] sm:$0xf]
    %v2476 = vld [vmem:[#allocation11 + $0x9c] sm:$0xf]
    %v2477 = vld [vmem:[#allocation11 + $0xa0] sm:$0xf]
    %v2478 = vld [vmem:[#allocation11 + $0xa4] sm:$0xf]
    %v2479 = vld [vmem:[#allocation11 + $0xa8] sm:$0xf]
    %v2480 = vld [vmem:[#allocation11 + $0xac] sm:$0xf]
    %v2481 = vld [vmem:[#allocation11 + $0xb0] sm:$0xf]
    %v2482 = vld [vmem:[#allocation11 + $0xb4] sm:$0xf]
    %v2483 = vld [vmem:[#allocation11 + $0xb8] sm:$0xf]
    %v2484 = vld [vmem:[#allocation11 + $0xbc] sm:$0xf]
    %v2485 = vld [vmem:[#allocation13 + $0x4] ss:$0 sm:$0xff]
    %v2534 = vunpack.c.l.b16 %v2437
    %v2535 = vunpack.c.l.b16 %v2438
    %v2536 = vunpack.c.l.b16 %v2439
    %v2537 = vunpack.c.l.b16 %v2440
    %v2538 = vunpack.c.l.b16 %v2441
    %v2539 = vunpack.c.l.b16 %v2442
    %v2540 = vunpack.c.l.b16 %v2443
    %v2541 = vunpack.c.l.b16 %v2444
    %v2542 = vunpack.c.l.b16 %v2445
    %v2543 = vunpack.c.l.b16 %v2446
    %v2544 = vunpack.c.l.b16 %v2447
    %v2545 = vunpack.c.l.b16 %v2448
    %v2546 = vunpack.c.l.b16 %v2449
    %v2547 = vunpack.c.l.b16 %v2450
    %v2548 = vunpack.c.l.b16 %v2451
    %v2549 = vunpack.c.l.b16 %v2452
    %v2550 = vunpack.c.l.b16 %v2453
    %v2551 = vunpack.c.l.b16 %v2454
    %v2552 = vunpack.c.l.b16 %v2455
    %v2553 = vunpack.c.l.b16 %v2456
    %v2554 = vunpack.c.l.b16 %v2457
    %v2555 = vunpack.c.l.b16 %v2458
    %v2556 = vunpack.c.l.b16 %v2459
    %v2557 = vunpack.c.l.b16 %v2460
    %v2558 = vunpack.c.l.b16 %v2461
    %v2559 = vunpack.c.l.b16 %v2462
    %v2560 = vunpack.c.l.b16 %v2463
    %v2561 = vunpack.c.l.b16 %v2464
    %v2562 = vunpack.c.l.b16 %v2465
    %v2563 = vunpack.c.l.b16 %v2466
    %v2564 = vunpack.c.l.b16 %v2467
    %v2565 = vunpack.c.l.b16 %v2468
    %v2566 = vunpack.c.l.b16 %v2469
    %v2567 = vunpack.c.l.b16 %v2470
    %v2568 = vunpack.c.l.b16 %v2471
    %v2569 = vunpack.c.l.b16 %v2472
    %v2570 = vunpack.c.l.b16 %v2473
    %v2571 = vunpack.c.l.b16 %v2474
    %v2572 = vunpack.c.l.b16 %v2475
    %v2573 = vunpack.c.l.b16 %v2476
    %v2574 = vunpack.c.l.b16 %v2477
    %v2575 = vunpack.c.l.b16 %v2478
    %v2576 = vunpack.c.l.b16 %v2479
    %v2577 = vunpack.c.l.b16 %v2480
    %v2578 = vunpack.c.l.b16 %v2481
    %v2579 = vunpack.c.l.b16 %v2482
    %v2580 = vunpack.c.l.b16 %v2483
    %v2581 = vunpack.c.l.b16 %v2484
    %v2582 = vpack.c.b16 %v2535, %v2534
    %v2583 = vpack.c.b16 %v2537, %v2536
    %v2584 = vpack.c.b16 %v2539, %v2538
    %v2585 = vpack.c.b16 %v2541, %v2540
    %v2586 = vpack.c.b16 %v2543, %v2542
    %v2587 = vpack.c.b16 %v2545, %v2544
    %v2588 = vpack.c.b16 %v2547, %v2546
    %v2589 = vpack.c.b16 %v2549, %v2548
    %v2590 = vpack.c.b16 %v2551, %v2550
    %v2591 = vpack.c.b16 %v2553, %v2552
    %v2592 = vpack.c.b16 %v2555, %v2554
    %v2593 = vpack.c.b16 %v2557, %v2556
    %v2594 = vpack.c.b16 %v2559, %v2558
    %v2595 = vpack.c.b16 %v2561, %v2560
    %v2596 = vpack.c.b16 %v2563, %v2562
    %v2597 = vpack.c.b16 %v2565, %v2564
    %v2598 = vpack.c.b16 %v2567, %v2566
    %v2599 = vpack.c.b16 %v2569, %v2568
    %v2600 = vpack.c.b16 %v2571, %v2570
    %v2601 = vpack.c.b16 %v2573, %v2572
    %v2602 = vpack.c.b16 %v2575, %v2574
    %v2603 = vpack.c.b16 %v2577, %v2576
    %v2604 = vpack.c.b16 %v2579, %v2578
    %v2605 = vpack.c.b16 %v2581, %v2580
    %2630 = vmatpush.bf16.msra.mxu0 %v2589
    %2631 = vmatpush.bf16.msra.mxu0 %v2588
    %2632 = vmatpush.bf16.msra.mxu0 %v2587
    %2633 = vmatpush.bf16.msra.mxu0 %v2586
    %2634 = vmatpush.bf16.msra.mxu0 %v2585
    %2635 = vmatpush.bf16.msra.mxu0 %v2584
    %2636 = vmatpush.bf16.msra.mxu0 %v2583
    %2637 = vmatpush.bf16.msra.mxu0 %v2582
    %2638 = vmatmul.bf16.gmra.mxu0 %v2434
    %v2639 = vpop.f32.mrf.mxu0
    %v2640 = vadd.f32 %v2485, %v2639
    %v2641 = vpop.f32.mrf.mxu0
    %2642 = vdwg.mxu0
    %2643 = vmatpush.bf16.msra.mxu0 %v2597
    %2644 = vmatpush.bf16.msra.mxu0 %v2596
    %2645 = vmatpush.bf16.msra.mxu0 %v2595
    %2646 = vmatpush.bf16.msra.mxu0 %v2594
    %2647 = vmatpush.bf16.msra.mxu0 %v2593
    %2648 = vmatpush.bf16.msra.mxu0 %v2592
    %2649 = vmatpush.bf16.msra.mxu0 %v2591
    %2650 = vmatpush.bf16.msra.mxu0 %v2590
    %2651 = vmatmul.bf16.gmra.mxu0 %v2435
    %v2652 = vpop.f32.mrf.mxu0
    %v2653 = vadd.f32 %v2640, %v2652
    %v2654 = vpop.f32.mrf.mxu0
    %2655 = vdwg.mxu0
    %2656 = vmatpush.bf16.msra.mxu0 %v2605
    %2657 = vmatpush.bf16.msra.mxu0 %v2604
    %2658 = vmatpush.bf16.msra.mxu0 %v2603
    %2659 = vmatpush.bf16.msra.mxu0 %v2602
    %2660 = vmatpush.bf16.msra.mxu0 %v2601
    %2661 = vmatpush.bf16.msra.mxu0 %v2600
    %2662 = vmatpush.bf16.msra.mxu0 %v2599
    %2663 = vmatpush.bf16.msra.mxu0 %v2598
    %2664 = vmatmul.bf16.gmra.mxu0 %v2436
    %v2665 = vpop.f32.mrf.mxu0
    %v2666 = vadd.f32 %v2653, %v2665
    %v2667 = vpop.f32.mrf.mxu0
    %2668 = vdwg.mxu0
    %2669 = vst [vmem:[#allocation14] sm:$0xff] %v2666
    // Predicated region
    $region58: #{tpu_custom_call.1} parent=1 // pred_check
      _
    $region59: #{tpu_custom_call.1} parent=1 // pred_check_branch
      %2671 = sbr.rel (0) target = $region61
    $region60: #{tpu_custom_call.1} parent=1 // pred_region
      %2673 = vsyncadd [#allocation4], 0
      %s2675 = sshll.u32 [#allocation14], 4
      %s2676 = int_to_ptr.vmem [resolvable:$true] %s2675
      %s2677 = sshll.u32 %s7, 4
      %s2678 = int_to_ptr.hbm [resolvable:$true] %s2677
      %2680 = dma.vmem_to_hbm [thread:$0]  %s2676, 128, %s2678, [#allocation4]
    $region61: #{tpu_custom_call.1} parent=1 // pred_fallthru
      _
    // Predicated region
    $region62: #{tpu_custom_call.1} parent=1 // pred_check
      _
    $region63: #{tpu_custom_call.1} parent=1 // pred_check_branch
      %2682 = sbr.rel (0) target = $region65
    $region64: #{tpu_custom_call.1} parent=1 // pred_region
      %2684 = dma.done [#allocation4], 128
    $region65: #{tpu_custom_call.1} parent=1 // pred_fallthru
      _
    %2685 = vsyncpa [#allocation3], 1
    %2686 = vsyncpa [#allocation6], 1
    %2687 = vsyncpa [#allocation9], 1
    %2688 = vsyncpa [#allocation12], 1
    %2689 = vsyncpa [#allocation4], 1

// kernel: tpu_custom_call.1
$region0: #{tpu_custom_call.1}
  #allocation0 [shape = 'u32[]', space=smem, size = 0x4, offset = 0x4, fixed_abs, tag = 'smem constant byte address 0x4 - core index']
  #allocation1 [shape = 'u32[72,128]{1,0:T(1,128)}', space=vmem, size = 0x9000, scoped, tag = 'internal scratch']
  %s0 = inlined_call_operand.hbm [shape: bf16[8,128], index: 0, kind: input, shape index: {}]
  %s1 = inlined_call_operand.hbm [shape: bf16[128,128], index: 1, kind: input, shape index: {}]
  %s2 = inlined_call_operand.hbm [shape: bf16[128,384], index: 2, kind: input, shape index: {}]
  %s3 = inlined_call_operand.hbm [shape: bf16[384,640], index: 3, kind: input, shape index: {}]
  %s4 = inlined_call_operand.hbm [shape: bf16[640,384], index: 4, kind: input, shape index: {}]
  %s5 = inlined_call_operand.hbm [shape: bf16[384,128], index: 5, kind: input, shape index: {}]
  %s6 = inlined_call_operand.hbm [shape: f32[8,640], index: 6, kind: input, shape index: {}]
  %s7 = inlined_call_operand.hbm [shape: f32[8,128], index: 7, kind: output, shape index: {}]
  %s8 = sld [smem:[#allocation0]]
  $region66: #{tpu_custom_call.1} parent=0
    _
  %s10 = ssub.s32 1, %s8
  %s11 = scalar_select 0, %s10, %s8
  $region1: #{tpu_custom_call.1} parent=0
    #allocation2 [shape = 'u8[2048]{0}', space=vmem, size = 0x800, scoped, tag = 'input window, operand 0, single buffered']
    #allocation3 [shape = 's32[1]{0}', space=sflag, size = 0x4, scoped, tag = 'scoped memory for tpu_custom_call.1']
    #allocation4 [shape = 's32[1]{0}', space=sflag, size = 0x4, scoped, tag = 'scoped memory for tpu_custom_call.1']
    #allocation5 [shape = 'u8[32768]{0}', space=vmem, size = 0x8000, scoped, tag = 'input window, operand 1, single buffered']
    #allocation6 [shape = 's32[1]{0}', space=sflag, size = 0x4, scoped, tag = 'scoped memory for tpu_custom_call.1']
    #allocation7 [shape = 'u8[98304]{0}', space=vmem, size = 0x18000, scoped, tag = 'input window, operand 2, single buffered']
    #allocation8 [shape = 'u8[491520]{0}', space=vmem, size = 0x78000, scoped, tag = 'input window, operand 3, single buffered']
    #allocation9 [shape = 's32[1]{0}', space=sflag, size = 0x4, scoped, tag = 'scoped memory for tpu_custom_call.1']
    #allocation10 [shape = 'u8[491520]{0}', space=vmem, size = 0x78000, scoped, tag = 'input window, operand 4, single buffered']
    #allocation11 [shape = 'u8[98304]{0}', space=vmem, size = 0x18000, scoped, tag = 'input window, operand 5, single buffered']
    #allocation12 [shape = 's32[1]{0}', space=sflag, size = 0x4, scoped, tag = 'scoped memory for tpu_custom_call.1']
    #allocation13 [shape = 'u8[20480]{0}', space=vmem, size = 0x5000, scoped, tag = 'input window, operand 6, single buffered']
    #allocation14 [shape = 'u8[4096]{0}', space=vmem, size = 0x1000, scoped, tag = 'output window, operand 0, single buffered']
    %12 = vsyncpa [#allocation3], 0
    %13 = vsyncpa [#allocation6], 0
    %14 = vsyncpa [#allocation9], 0
    %15 = vsyncpa [#allocation12], 0
    %16 = vsyncpa [#allocation4], 0
    // Predicated region
    $region2: #{tpu_custom_call.1} parent=1 // pred_check
      _
    $region3: #{tpu_custom_call.1} parent=1 // pred_check_branch
      %18 = sbr.rel (0) target = $region5
    $region4: #{tpu_custom_call.1} parent=1 // pred_region
      %20 = vsyncadd [#allocation3], 0
      %s22 = sshll.u32 %s0, 4
      %s23 = int_to_ptr.hbm [resolvable:$true] %s22
      %s24 = sshll.u32 [#allocation2], 4
      %s25 = int_to_ptr.vmem [resolvable:$true] %s24
      %27 = dma.hbm_to_vmem [thread:$0]  %s23, 64, %s25, [#allocation3]
    $region5: #{tpu_custom_call.1} parent=1 // pred_fallthru
      _
    // Predicated region
    $region6: #{tpu_custom_call.1} parent=1 // pred_check
      _
    $region7: #{tpu_custom_call.1} parent=1 // pred_check_branch
      %29 = sbr.rel (0) target = $region9
    $region8: #{tpu_custom_call.1} parent=1 // pred_region
      %31 = vsyncadd [#allocation6], 0
      %s32 = sshll.u32 %s1, 4
      %s33 = int_to_ptr.hbm [resolvable:$true] %s32
      %s34 = sshll.u32 [#allocation5], 4
      %s35 = int_to_ptr.vmem [resolvable:$true] %s34
      %40 = dma.hbm_to_vmem [thread:$0]  %s33, 1024, %s35, [#allocation6], 64, 64, 4
    $region9: #{tpu_custom_call.1} parent=1 // pred_fallthru
      _
    // Predicated region
    $region10: #{tpu_custom_call.1} parent=1 // pred_check
      _
    $region11: #{tpu_custom_call.1} parent=1 // pred_check_branch
      %42 = sbr.rel (0) target = $region13
    $region12: #{tpu_custom_call.1} parent=1 // pred_region
      %44 = vsyncadd [#allocation6], 0
      %s45 = sshll.u32 %s2, 4
      %s46 = int_to_ptr.hbm [resolvable:$true] %s45
      %s47 = sshll.u32 [#allocation7], 4
      %s48 = int_to_ptr.vmem [resolvable:$true] %s47
      %53 = dma.hbm_to_vmem [thread:$0]  %s46, 3072, %s48, [#allocation6], 192, 192, 12
    $region13: #{tpu_custom_call.1} parent=1 // pred_fallthru
      _
    // Predicated region
    $region14: #{tpu_custom_call.1} parent=1 // pred_check
      _
    $region15: #{tpu_custom_call.1} parent=1 // pred_check_branch
      %55 = sbr.rel (0) target = $region17
    $region16: #{tpu_custom_call.1} parent=1 // pred_region
      %57 = vsyncadd [#allocation9], 0
      %s58 = sshll.u32 %s3, 4
      %s59 = int_to_ptr.hbm [resolvable:$true] %s58
      %s60 = sshll.u32 [#allocation8], 4
      %s61 = int_to_ptr.vmem [resolvable:$true] %s60
      %66 = dma.hbm_to_vmem [thread:$0]  %s59, 15360, %s61, [#allocation9], 320, 320, 20
    $region17: #{tpu_custom_call.1} parent=1 // pred_fallthru
      _
    // Predicated region
    $region18: #{tpu_custom_call.1} parent=1 // pred_check
      _
    $region19: #{tpu_custom_call.1} parent=1 // pred_check_branch
      %68 = sbr.rel (0) target = $region21
    $region20: #{tpu_custom_call.1} parent=1 // pred_region
      %70 = vsyncadd [#allocation9], 0
      %s71 = sshll.u32 %s4, 4
      %s72 = int_to_ptr.hbm [resolvable:$true] %s71
      %s73 = sshll.u32 [#allocation10], 4
      %s74 = int_to_ptr.vmem [resolvable:$true] %s73
      %79 = dma.hbm_to_vmem [thread:$0]  %s72, 15360, %s74, [#allocation9], 192, 192, 12
    $region21: #{tpu_custom_call.1} parent=1 // pred_fallthru
      _
    // Predicated region
    $region22: #{tpu_custom_call.1} parent=1 // pred_check
      _
    $region23: #{tpu_custom_call.1} parent=1 // pred_check_branch
      %81 = sbr.rel (0) target = $region25
    $region24: #{tpu_custom_call.1} parent=1 // pred_region
      %83 = vsyncadd [#allocation12], 0
      %s84 = sshll.u32 %s5, 4
      %s85 = int_to_ptr.hbm [resolvable:$true] %s84
      %s86 = sshll.u32 [#allocation11], 4
      %s87 = int_to_ptr.vmem [resolvable:$true] %s86
      %92 = dma.hbm_to_vmem [thread:$0]  %s85, 3072, %s87, [#allocation12], 64, 64, 4
    $region25: #{tpu_custom_call.1} parent=1 // pred_fallthru
      _
    // Predicated region
    $region26: #{tpu_custom_call.1} parent=1 // pred_check
      _
    $region27: #{tpu_custom_call.1} parent=1 // pred_check_branch
      %94 = sbr.rel (0) target = $region29
    $region28: #{tpu_custom_call.1} parent=1 // pred_region
      %96 = vsyncadd [#allocation12], 0
      %s98 = sshll.u32 %s6, 4
      %s99 = int_to_ptr.hbm [resolvable:$true] %s98
      %s100 = sshll.u32 [#allocation13], 4
      %s101 = int_to_ptr.vmem [resolvable:$true] %s100
      %103 = dma.hbm_to_vmem [thread:$0]  %s99, 640, %s101, [#allocation12]
    $region29: #{tpu_custom_call.1} parent=1 // pred_fallthru
      _
    // Predicated region
    $region30: #{tpu_custom_call.1} parent=1 // pred_check
      _
    $region31: #{tpu_custom_call.1} parent=1 // pred_check_branch
      %105 = sbr.rel (0) target = $region33
    $region32: #{tpu_custom_call.1} parent=1 // pred_region
      %107 = dma.done [#allocation3], 64
    $region33: #{tpu_custom_call.1} parent=1 // pred_fallthru
      _
    // Predicated region
    $region34: #{tpu_custom_call.1} parent=1 // pred_check
      _
    $region35: #{tpu_custom_call.1} parent=1 // pred_check_branch
      %109 = sbr.rel (0) target = $region37
    $region36: #{tpu_custom_call.1} parent=1 // pred_region
      %111 = dma.done [#allocation6], 1024
    $region37: #{tpu_custom_call.1} parent=1 // pred_fallthru
      _
    // Predicated region
    $region38: #{tpu_custom_call.1} parent=1 // pred_check
      _
    $region39: #{tpu_custom_call.1} parent=1 // pred_check_branch
      %113 = sbr.rel (0) target = $region41
    $region40: #{tpu_custom_call.1} parent=1 // pred_region
      %115 = dma.done [#allocation6], 3072
    $region41: #{tpu_custom_call.1} parent=1 // pred_fallthru
      _
    // Predicated region
    $region42: #{tpu_custom_call.1} parent=1 // pred_check
      _
    $region43: #{tpu_custom_call.1} parent=1 // pred_check_branch
      %117 = sbr.rel (0) target = $region45
    $region44: #{tpu_custom_call.1} parent=1 // pred_region
      %119 = dma.done [#allocation9], 15360
    $region45: #{tpu_custom_call.1} parent=1 // pred_fallthru
      _
    // Predicated region
    $region46: #{tpu_custom_call.1} parent=1 // pred_check
      _
    $region47: #{tpu_custom_call.1} parent=1 // pred_check_branch
      %121 = sbr.rel (0) target = $region49
    $region48: #{tpu_custom_call.1} parent=1 // pred_region
      %123 = dma.done [#allocation9], 15360
    $region49: #{tpu_custom_call.1} parent=1 // pred_fallthru
      _
    // Predicated region
    $region50: #{tpu_custom_call.1} parent=1 // pred_check
      _
    $region51: #{tpu_custom_call.1} parent=1 // pred_check_branch
      %125 = sbr.rel (0) target = $region53
    $region52: #{tpu_custom_call.1} parent=1 // pred_region
      %127 = dma.done [#allocation12], 3072
    $region53: #{tpu_custom_call.1} parent=1 // pred_fallthru
      _
    // Predicated region
    $region54: #{tpu_custom_call.1} parent=1 // pred_check
      _
    $region55: #{tpu_custom_call.1} parent=1 // pred_check_branch
      %129 = sbr.rel (0) target = $region57
    $region56: #{tpu_custom_call.1} parent=1 // pred_region
      %131 = dma.done [#allocation12], 640
    $region57: #{tpu_custom_call.1} parent=1 // pred_fallthru
      _
    %v132 = vld [vmem:[#allocation2] sm:$0xf]
    %v133 = vld [vmem:[#allocation5] sm:$0xf]
    %v134 = vld [vmem:[#allocation5 + $0x4] sm:$0xf]
    %v135 = vld [vmem:[#allocation5 + $0x8] sm:$0xf]
    %v136 = vld [vmem:[#allocation5 + $0xc] sm:$0xf]
    %v137 = vld [vmem:[#allocation5 + $0x10] sm:$0xf]
    %v138 = vld [vmem:[#allocation5 + $0x14] sm:$0xf]
    %v139 = vld [vmem:[#allocation5 + $0x18] sm:$0xf]
    %v140 = vld [vmem:[#allocation5 + $0x1c] sm:$0xf]
    %v141 = vld [vmem:[#allocation5 + $0x20] sm:$0xf]
    %v142 = vld [vmem:[#allocation5 + $0x24] sm:$0xf]
    %v143 = vld [vmem:[#allocation5 + $0x28] sm:$0xf]
    %v144 = vld [vmem:[#allocation5 + $0x2c] sm:$0xf]
    %v145 = vld [vmem:[#allocation5 + $0x30] sm:$0xf]
    %v146 = vld [vmem:[#allocation5 + $0x34] sm:$0xf]
    %v147 = vld [vmem:[#allocation5 + $0x38] sm:$0xf]
    %v148 = vld [vmem:[#allocation5 + $0x3c] sm:$0xf]
    %v149 = vld [vmem:[#allocation13] ss:$0 sm:$0xff]
    %v166 = vunpack.c.l.b16 %v133
    %v167 = vunpack.c.l.b16 %v134
    %v168 = vunpack.c.l.b16 %v135
    %v169 = vunpack.c.l.b16 %v136
    %v170 = vunpack.c.l.b16 %v137
    %v171 = vunpack.c.l.b16 %v138
    %v172 = vunpack.c.l.b16 %v139
    %v173 = vunpack.c.l.b16 %v140
    %v174 = vunpack.c.l.b16 %v141
    %v175 = vunpack.c.l.b16 %v142
    %v176 = vunpack.c.l.b16 %v143
    %v177 = vunpack.c.l.b16 %v144
    %v178 = vunpack.c.l.b16 %v145
    %v179 = vunpack.c.l.b16 %v146
    %v180 = vunpack.c.l.b16 %v147
    %v181 = vunpack.c.l.b16 %v148
    %v182 = vpack.c.b16 %v167, %v166
    %v183 = vpack.c.b16 %v169, %v168
    %v184 = vpack.c.b16 %v171, %v170
    %v185 = vpack.c.b16 %v173, %v172
    %v186 = vpack.c.b16 %v175, %v174
    %v187 = vpack.c.b16 %v177, %v176
    %v188 = vpack.c.b16 %v179, %v178
    %v189 = vpack.c.b16 %v181, %v180
    %198 = vmatpush.bf16.msra.mxu0 %v189
    %199 = vmatpush.bf16.msra.mxu0 %v188
    %200 = vmatpush.bf16.msra.mxu0 %v187
    %201 = vmatpush.bf16.msra.mxu0 %v186
    %202 = vmatpush.bf16.msra.mxu0 %v185
    %203 = vmatpush.bf16.msra.mxu0 %v184
    %204 = vmatpush.bf16.msra.mxu0 %v183
    %205 = vmatpush.bf16.msra.mxu0 %v182
    %206 = vmatmul.bf16.gmra.mxu0 %v132
    %v207 = vpop.f32.mrf.mxu0
    %v208 = vadd.f32 %v149, %v207
    %v209 = vpop.f32.mrf.mxu0
    %210 = vdwg.mxu0
    %v211 = vmul.f32 %v208, 0.01
    %v212 = vmax.f32 %v208, %v211
    %v213 = vpack.c.bf16 %v212, %v212
    %v214 = vld [vmem:[#allocation7] sm:$0xff]
    %v215 = vld [vmem:[#allocation7 + $0x8] sm:$0xf]
    %v216 = vld [vmem:[#allocation7 + $0xc] sm:$0xff]
    %v217 = vld [vmem:[#allocation7 + $0x14] sm:$0xf]
    %v218 = vld [vmem:[#allocation7 + $0x18] sm:$0xff]
    %v219 = vld [vmem:[#allocation7 + $0x20] sm:$0xf]
    %v220 = vld [vmem:[#allocation7 + $0x24] sm:$0xff]
    %v221 = vld [vmem:[#allocation7 + $0x2c] sm:$0xf]
    %v222 = vld [vmem:[#allocation7 + $0x30] sm:$0xff]
    %v223 = vld [vmem:[#allocation7 + $0x38] sm:$0xf]
    %v224 = vld [vmem:[#allocation7 + $0x3c] sm:$0xff]
    %v225 = vld [vmem:[#allocation7 + $0x44] sm:$0xf]
    %v226 = vld [vmem:[#allocation7 + $0x48] sm:$0xff]
    %v227 = vld [vmem:[#allocation7 + $0x50] sm:$0xf]
    %v228 = vld [vmem:[#allocation7 + $0x54] sm:$0xff]
    %v229 = vld [vmem:[#allocation7 + $0x5c] sm:$0xf]
    %v230 = vld [vmem:[#allocation7 + $0x60] sm:$0xff]
    %v231 = vld [vmem:[#allocation7 + $0x68] sm:$0xf]
    %v232 = vld [vmem:[#allocation7 + $0x6c] sm:$0xff]
    %v233 = vld [vmem:[#allocation7 + $0x74] sm:$0xf]
    %v234 = vld [vmem:[#allocation7 + $0x78] sm:$0xff]
    %v235 = vld [vmem:[#allocation7 + $0x80] sm:$0xf]
    %v236 = vld [vmem:[#allocation7 + $0x84] sm:$0xff]
    %v237 = vld [vmem:[#allocation7 + $0x8c] sm:$0xf]
    %v238 = vld [vmem:[#allocation7 + $0x90] sm:$0xff]
    %v239 = vld [vmem:[#allocation7 + $0x98] sm:$0xf]
    %v240 = vld [vmem:[#allocation7 + $0x9c] sm:$0xff]
    %v241 = vld [vmem:[#allocation7 + $0xa4] sm:$0xf]
    %v242 = vld [vmem:[#allocation7 + $0xa8] sm:$0xff]
    %v243 = vld [vmem:[#allocation7 + $0xb0] sm:$0xf]
    %v244 = vld [vmem:[#allocation7 + $0xb4] sm:$0xff]
    %v245 = vld [vmem:[#allocation7 + $0xbc] sm:$0xf]
    %s246 = scalar_lea.vmem [#allocation13], 1
    %v247 = vld [vmem:[%s246] ss:$8 sm:$0x7]
    %v249 = vperm.slane %v247, 0
    %v250 = vperm.slane %v247, 1
    %v251 = vperm.slane %v247, 2
    %v287 = vunpack.c.l.b16 %v214
    %v288 = vunpack.c.h.b16 %v214
    %v289 = vunpack.c.l.b16 %v215
    %v290 = vunpack.c.l.b16 %v216
    %v291 = vunpack.c.h.b16 %v216
    %v292 = vunpack.c.l.b16 %v217
    %v293 = vunpack.c.l.b16 %v218
    %v294 = vunpack.c.h.b16 %v218
    %v295 = vunpack.c.l.b16 %v219
    %v296 = vunpack.c.l.b16 %v220
    %v297 = vunpack.c.h.b16 %v220
    %v298 = vunpack.c.l.b16 %v221
    %v299 = vunpack.c.l.b16 %v222
    %v300 = vunpack.c.h.b16 %v222
    %v301 = vunpack.c.l.b16 %v223
    %v302 = vunpack.c.l.b16 %v224
    %v303 = vunpack.c.h.b16 %v224
    %v304 = vunpack.c.l.b16 %v225
    %v305 = vunpack.c.l.b16 %v226
    %v306 = vunpack.c.h.b16 %v226
    %v307 = vunpack.c.l.b16 %v227
    %v308 = vunpack.c.l.b16 %v228
    %v309 = vunpack.c.h.b16 %v228
    %v310 = vunpack.c.l.b16 %v229
    %v311 = vunpack.c.l.b16 %v230
    %v312 = vunpack.c.h.b16 %v230
    %v313 = vunpack.c.l.b16 %v231
    %v314 = vunpack.c.l.b16 %v232
    %v315 = vunpack.c.h.b16 %v232
    %v316 = vunpack.c.l.b16 %v233
    %v317 = vunpack.c.l.b16 %v234
    %v318 = vunpack.c.h.b16 %v234
    %v319 = vunpack.c.l.b16 %v235
    %v320 = vunpack.c.l.b16 %v236
    %v321 = vunpack.c.h.b16 %v236
    %v322 = vunpack.c.l.b16 %v237
    %v323 = vunpack.c.l.b16 %v238
    %v324 = vunpack.c.h.b16 %v238
    %v325 = vunpack.c.l.b16 %v239
    %v326 = vunpack.c.l.b16 %v240
    %v327 = vunpack.c.h.b16 %v240
    %v328 = vunpack.c.l.b16 %v241
    %v329 = vunpack.c.l.b16 %v242
    %v330 = vunpack.c.h.b16 %v242
    %v331 = vunpack.c.l.b16 %v243
    %v332 = vunpack.c.l.b16 %v244
    %v333 = vunpack.c.h.b16 %v244
    %v334 = vunpack.c.l.b16 %v245
    %v335 = vpack.c.b16 %v290, %v287
    %v336 = vpack.c.b16 %v291, %v288
    %v337 = vpack.c.b16 %v292, %v289
    %v338 = vpack.c.b16 %v296, %v293
    %v339 = vpack.c.b16 %v297, %v294
    %v340 = vpack.c.b16 %v298, %v295
    %v341 = vpack.c.b16 %v302, %v299
    %v342 = vpack.c.b16 %v303, %v300
    %v343 = vpack.c.b16 %v304, %v301
    %v344 = vpack.c.b16 %v308, %v305
    %v345 = vpack.c.b16 %v309, %v306
    %v346 = vpack.c.b16 %v310, %v307
    %v347 = vpack.c.b16 %v314, %v311
    %v348 = vpack.c.b16 %v315, %v312
    %v349 = vpack.c.b16 %v316, %v313
    %v350 = vpack.c.b16 %v320, %v317
    %v351 = vpack.c.b16 %v321, %v318
    %v352 = vpack.c.b16 %v322, %v319
    %v353 = vpack.c.b16 %v326, %v323
    %v354 = vpack.c.b16 %v327, %v324
    %v355 = vpack.c.b16 %v328, %v325
    %v356 = vpack.c.b16 %v332, %v329
    %v357 = vpack.c.b16 %v333, %v330
    %v358 = vpack.c.b16 %v334, %v331
    %383 = vmatpush.bf16.msra.mxu0 %v356
    %384 = vmatpush.bf16.msra.mxu0 %v353
    %385 = vmatpush.bf16.msra.mxu0 %v350
    %386 = vmatpush.bf16.msra.mxu0 %v347
    %387 = vmatpush.bf16.msra.mxu0 %v344
    %388 = vmatpush.bf16.msra.mxu0 %v341
    %389 = vmatpush.bf16.msra.mxu0 %v338
    %390 = vmatpush.bf16.msra.mxu0 %v335
    %391 = vmatmul.bf16.gmra.mxu0 %v213
    %v392 = vpop.f32.mrf.mxu0
    %v393 = vadd.f32 %v249, %v392
    %v394 = vpop.f32.mrf.mxu0
    %395 = vdwg.mxu0
    %396 = vmatpush.bf16.msra.mxu0 %v357
    %397 = vmatpush.bf16.msra.mxu0 %v354
    %398 = vmatpush.bf16.msra.mxu0 %v351
    %399 = vmatpush.bf16.msra.mxu0 %v348
    %400 = vmatpush.bf16.msra.mxu0 %v345
    %401 = vmatpush.bf16.msra.mxu0 %v342
    %402 = vmatpush.bf16.msra.mxu0 %v339
    %403 = vmatpush.bf16.msra.mxu0 %v336
    %404 = vmatmul.bf16.gmra.mxu0 %v213
    %v405 = vpop.f32.mrf.mxu0
    %v406 = vadd.f32 %v250, %v405
    %v407 = vpop.f32.mrf.mxu0
    %408 = vdwg.mxu0
    %409 = vmatpush.bf16.msra.mxu0 %v358
    %410 = vmatpush.bf16.msra.mxu0 %v355
    %411 = vmatpush.bf16.msra.mxu0 %v352
    %412 = vmatpush.bf16.msra.mxu0 %v349
    %413 = vmatpush.bf16.msra.mxu0 %v346
    %414 = vmatpush.bf16.msra.mxu0 %v343
    %415 = vmatpush.bf16.msra.mxu0 %v340
    %416 = vmatpush.bf16.msra.mxu0 %v337
    %417 = vmatmul.bf16.gmra.mxu0 %v213
    %v418 = vpop.f32.mrf.mxu0
    %v419 = vadd.f32 %v251, %v418
    %v420 = vpop.f32.mrf.mxu0
    %421 = vdwg.mxu0
    %v422 = vmul.f32 %v393, 0.01
    %v423 = vmul.f32 %v406, 0.01
    %v424 = vmul.f32 %v419, 0.01
    %v425 = vmax.f32 %v393, %v422
    %v426 = vmax.f32 %v406, %v423
    %v427 = vmax.f32 %v419, %v424
    %v428 = vpack.c.bf16 %v425, %v425
    %v429 = vpack.c.bf16 %v426, %v426
    %v430 = vpack.c.bf16 %v427, %v427
    %v431 = vld [vmem:[#allocation8] sm:$0xff]
    %v432 = vld [vmem:[#allocation8 + $0x8] sm:$0xff]
    %v433 = vld [vmem:[#allocation8 + $0x10] sm:$0xf]
    %v434 = vld [vmem:[#allocation8 + $0x14] sm:$0xff]
    %v435 = vld [vmem:[#allocation8 + $0x1c] sm:$0xff]
    %v436 = vld [vmem:[#allocation8 + $0x24] sm:$0xf]
    %v437 = vld [vmem:[#allocation8 + $0x28] sm:$0xff]
    %v438 = vld [vmem:[#allocation8 + $0x30] sm:$0xff]
    %v439 = vld [vmem:[#allocation8 + $0x38] sm:$0xf]
    %v440 = vld [vmem:[#allocation8 + $0x3c] sm:$0xff]
    %v441 = vld [vmem:[#allocation8 + $0x44] sm:$0xff]
    %v442 = vld [vmem:[#allocation8 + $0x4c] sm:$0xf]
    %v443 = vld [vmem:[#allocation8 + $0x50] sm:$0xff]
    %v444 = vld [vmem:[#allocation8 + $0x58] sm:$0xff]
    %v445 = vld [vmem:[#allocation8 + $0x60] sm:$0xf]
    %v446 = vld [vmem:[#allocation8 + $0x64] sm:$0xff]
    %v447 = vld [vmem:[#allocation8 + $0x6c] sm:$0xff]
    %v448 = vld [vmem:[#allocation8 + $0x74] sm:$0xf]
    %v449 = vld [vmem:[#allocation8 + $0x78] sm:$0xff]
    %v450 = vld [vmem:[#allocation8 + $0x80] sm:$0xff]
    %v451 = vld [vmem:[#allocation8 + $0x88] sm:$0xf]
    %v452 = vld [vmem:[#allocation8 + $0x8c] sm:$0xff]
    %v453 = vld [vmem:[#allocation8 + $0x94] sm:$0xff]
    %v454 = vld [vmem:[#allocation8 + $0x9c] sm:$0xf]
    %v455 = vld [vmem:[#allocation8 + $0xa0] sm:$0xff]
    %v456 = vld [vmem:[#allocation8 + $0xa8] sm:$0xff]
    %v457 = vld [vmem:[#allocation8 + $0xb0] sm:$0xf]
    %v458 = vld [vmem:[#allocation8 + $0xb4] sm:$0xff]
    %v459 = vld [vmem:[#allocation8 + $0xbc] sm:$0xff]
    %v460 = vld [vmem:[#allocation8 + $0xc4] sm:$0xf]
    %v461 = vld [vmem:[#allocation8 + $0xc8] sm:$0xff]
    %v462 = vld [vmem:[#allocation8 + $0xd0] sm:$0xff]
    %v463 = vld [vmem:[#allocation8 + $0xd8] sm:$0xf]
    %v464 = vld [vmem:[#allocation8 + $0xdc] sm:$0xff]
    %v465 = vld [vmem:[#allocation8 + $0xe4] sm:$0xff]
    %v466 = vld [vmem:[#allocation8 + $0xec] sm:$0xf]
    %v467 = vld [vmem:[#allocation8 + $0xf0] sm:$0xff]
    %v468 = vld [vmem:[#allocation8 + $0xf8] sm:$0xff]
    %v469 = vld [vmem:[#allocation8 + $0x100] sm:$0xf]
    %v470 = vld [vmem:[#allocation8 + $0x104] sm:$0xff]
    %v471 = vld [vmem:[#allocation8 + $0x10c] sm:$0xff]
    %v472 = vld [vmem:[#allocation8 + $0x114] sm:$0xf]
    %v473 = vld [vmem:[#allocation8 + $0x118] sm:$0xff]
    %v474 = vld [vmem:[#allocation8 + $0x120] sm:$0xff]
    %v475 = vld [vmem:[#allocation8 + $0x128] sm:$0xf]
    %v476 = vld [vmem:[#allocation8 + $0x12c] sm:$0xff]
    %v477 = vld [vmem:[#allocation8 + $0x134] sm:$0xff]
    %v478 = vld [vmem:[#allocation8 + $0x13c] sm:$0xf]
    %v479 = vld [vmem:[#allocation8 + $0x140] sm:$0xff]
    %v480 = vld [vmem:[#allocation8 + $0x148] sm:$0xff]
    %v481 = vld [vmem:[#allocation8 + $0x150] sm:$0xf]
    %v482 = vld [vmem:[#allocation8 + $0x154] sm:$0xff]
    %v483 = vld [vmem:[#allocation8 + $0x15c] sm:$0xff]
    %v484 = vld [vmem:[#allocation8 + $0x164] sm:$0xf]
    %v485 = vld [vmem:[#allocation8 + $0x168] sm:$0xff]
    %v486 = vld [vmem:[#allocation8 + $0x170] sm:$0xff]
    %v487 = vld [vmem:[#allocation8 + $0x178] sm:$0xf]
    %v488 = vld [vmem:[#allocation8 + $0x17c] sm:$0xff]
    %v489 = vld [vmem:[#allocation8 + $0x184] sm:$0xff]
    %v490 = vld [vmem:[#allocation8 + $0x18c] sm:$0xf]
    %v491 = vld [vmem:[#allocation8 + $0x190] sm:$0xff]
    %v492 = vld [vmem:[#allocation8 + $0x198] sm:$0xff]
    %v493 = vld [vmem:[#allocation8 + $0x1a0] sm:$0xf]
    %v494 = vld [vmem:[#allocation8 + $0x1a4] sm:$0xff]
    %v495 = vld [vmem:[#allocation8 + $0x1ac] sm:$0xff]
    %v496 = vld [vmem:[#allocation8 + $0x1b4] sm:$0xf]
    %v497 = vld [vmem:[#allocation8 + $0x1b8] sm:$0xff]
    %v498 = vld [vmem:[#allocation8 + $0x1c0] sm:$0xff]
    %v499 = vld [vmem:[#allocation8 + $0x1c8] sm:$0xf]
    %v500 = vld [vmem:[#allocation8 + $0x1cc] sm:$0xff]
    %v501 = vld [vmem:[#allocation8 + $0x1d4] sm:$0xff]
    %v502 = vld [vmem:[#allocation8 + $0x1dc] sm:$0xf]
    %v503 = vld [vmem:[#allocation8 + $0x1e0] sm:$0xff]
    %v504 = vld [vmem:[#allocation8 + $0x1e8] sm:$0xff]
    %v505 = vld [vmem:[#allocation8 + $0x1f0] sm:$0xf]
    %v506 = vld [vmem:[#allocation8 + $0x1f4] sm:$0xff]
    %v507 = vld [vmem:[#allocation8 + $0x1fc] sm:$0xff]
    %v508 = vld [vmem:[#allocation8 + $0x204] sm:$0xf]
    %v509 = vld [vmem:[#allocation8 + $0x208] sm:$0xff]
    %v510 = vld [vmem:[#allocation8 + $0x210] sm:$0xff]
    %v511 = vld [vmem:[#allocation8 + $0x218] sm:$0xf]
    %v512 = vld [vmem:[#allocation8 + $0x21c] sm:$0xff]
    %v513 = vld [vmem:[#allocation8 + $0x224] sm:$0xff]
    %v514 = vld [vmem:[#allocation8 + $0x22c] sm:$0xf]
    %v515 = vld [vmem:[#allocation8 + $0x230] sm:$0xff]
    %v516 = vld [vmem:[#allocation8 + $0x238] sm:$0xff]
    %v517 = vld [vmem:[#allocation8 + $0x240] sm:$0xf]
    %v518 = vld [vmem:[#allocation8 + $0x244] sm:$0xff]
    %v519 = vld [vmem:[#allocation8 + $0x24c] sm:$0xff]
    %v520 = vld [vmem:[#allocation8 + $0x254] sm:$0xf]
    %v521 = vld [vmem:[#allocation8 + $0x258] sm:$0xff]
    %v522 = vld [vmem:[#allocation8 + $0x260] sm:$0xff]
    %v523 = vld [vmem:[#allocation8 + $0x268] sm:$0xf]
    %v524 = vld [vmem:[#allocation8 + $0x26c] sm:$0xff]
    %v525 = vld [vmem:[#allocation8 + $0x274] sm:$0xff]
    %v526 = vld [vmem:[#allocation8 + $0x27c] sm:$0xf]
    %v527 = vld [vmem:[#allocation8 + $0x280] sm:$0xff]
    %v528 = vld [vmem:[#allocation8 + $0x288] sm:$0xff]
    %v529 = vld [vmem:[#allocation8 + $0x290] sm:$0xf]
    %v530 = vld [vmem:[#allocation8 + $0x294] sm:$0xff]
    %v531 = vld [vmem:[#allocation8 + $0x29c] sm:$0xff]
    %v532 = vld [vmem:[#allocation8 + $0x2a4] sm:$0xf]
    %v533 = vld [vmem:[#allocation8 + $0x2a8] sm:$0xff]
    %v534 = vld [vmem:[#allocation8 + $0x2b0] sm:$0xff]
    %v535 = vld [vmem:[#allocation8 + $0x2b8] sm:$0xf]
    %v536 = vld [vmem:[#allocation8 + $0x2bc] sm:$0xff]
    %v537 = vld [vmem:[#allocation8 + $0x2c4] sm:$0xff]
    %v538 = vld [vmem:[#allocation8 + $0x2cc] sm:$0xf]
    %v539 = vld [vmem:[#allocation8 + $0x2d0] sm:$0xff]
    %v540 = vld [vmem:[#allocation8 + $0x2d8] sm:$0xff]
    %v541 = vld [vmem:[#allocation8 + $0x2e0] sm:$0xf]
    %v542 = vld [vmem:[#allocation8 + $0x2e4] sm:$0xff]
    %v543 = vld [vmem:[#allocation8 + $0x2ec] sm:$0xff]
    %v544 = vld [vmem:[#allocation8 + $0x2f4] sm:$0xf]
    %v545 = vld [vmem:[#allocation8 + $0x2f8] sm:$0xff]
    %v546 = vld [vmem:[#allocation8 + $0x300] sm:$0xff]
    %v547 = vld [vmem:[#allocation8 + $0x308] sm:$0xf]
    %v548 = vld [vmem:[#allocation8 + $0x30c] sm:$0xff]
    %v549 = vld [vmem:[#allocation8 + $0x314] sm:$0xff]
    %v550 = vld [vmem:[#allocation8 + $0x31c] sm:$0xf]
    %v551 = vld [vmem:[#allocation8 + $0x320] sm:$0xff]
    %v552 = vld [vmem:[#allocation8 + $0x328] sm:$0xff]
    %v553 = vld [vmem:[#allocation8 + $0x330] sm:$0xf]
    %v554 = vld [vmem:[#allocation8 + $0x334] sm:$0xff]
    %v555 = vld [vmem:[#allocation8 + $0x33c] sm:$0xff]
    %v556 = vld [vmem:[#allocation8 + $0x344] sm:$0xf]
    %v557 = vld [vmem:[#allocation8 + $0x348] sm:$0xff]
    %v558 = vld [vmem:[#allocation8 + $0x350] sm:$0xff]
    %v559 = vld [vmem:[#allocation8 + $0x358] sm:$0xf]
    %v560 = vld [vmem:[#allocation8 + $0x35c] sm:$0xff]
    %v561 = vld [vmem:[#allocation8 + $0x364] sm:$0xff]
    %v562 = vld [vmem:[#allocation8 + $0x36c] sm:$0xf]
    %v563 = vld [vmem:[#allocation8 + $0x370] sm:$0xff]
    %v564 = vld [vmem:[#allocation8 + $0x378] sm:$0xff]
    %v565 = vld [vmem:[#allocation8 + $0x380] sm:$0xf]
    %v566 = vld [vmem:[#allocation8 + $0x384] sm:$0xff]
    %v567 = vld [vmem:[#allocation8 + $0x38c] sm:$0xff]
    %v568 = vld [vmem:[#allocation8 + $0x394] sm:$0xf]
    %v569 = vld [vmem:[#allocation8 + $0x398] sm:$0xff]
    %v570 = vld [vmem:[#allocation8 + $0x3a0] sm:$0xff]
    %v571 = vld [vmem:[#allocation8 + $0x3a8] sm:$0xf]
    %v572 = vld [vmem:[#allocation8 + $0x3ac] sm:$0xff]
    %v573 = vld [vmem:[#allocation8 + $0x3b4] sm:$0xff]
    %v574 = vld [vmem:[#allocation8 + $0x3bc] sm:$0xf]
    %s575 = scalar_lea.vmem [#allocation13], 2
    %v576 = vld [vmem:[%s575] ss:$8 sm:$0xf]
    %v577 = vld [vmem:[%s575] ss:$8 sm:$0x10]
    %v578 = vor.u32 %v576, %v577
    %v580 = vperm.slane %v578, 0
    %v581 = vperm.slane %v578, 1
    %v582 = vperm.slane %v578, 2
    %v583 = vperm.slane %v578, 3
    %v584 = vperm.slane %v578, 4
    %v734 = vunpack.c.l.b16 %v431
    %v735 = vunpack.c.h.b16 %v431
    %v736 = vunpack.c.l.b16 %v432
    %v737 = vunpack.c.h.b16 %v432
    %v738 = vunpack.c.l.b16 %v433
    %v739 = vunpack.c.l.b16 %v434
    %v740 = vunpack.c.h.b16 %v434
    %v741 = vunpack.c.l.b16 %v435
    %v742 = vunpack.c.h.b16 %v435
    %v743 = vunpack.c.l.b16 %v436
    %v744 = vunpack.c.l.b16 %v437
    %v745 = vunpack.c.h.b16 %v437
    %v746 = vunpack.c.l.b16 %v438
    %v747 = vunpack.c.h.b16 %v438
    %v748 = vunpack.c.l.b16 %v439
    %v749 = vunpack.c.l.b16 %v440
    %v750 = vunpack.c.h.b16 %v440
    %v751 = vunpack.c.l.b16 %v441
    %v752 = vunpack.c.h.b16 %v441
    %v753 = vunpack.c.l.b16 %v442
    %v754 = vunpack.c.l.b16 %v443
    %v755 = vunpack.c.h.b16 %v443
    %v756 = vunpack.c.l.b16 %v444
    %v757 = vunpack.c.h.b16 %v444
    %v758 = vunpack.c.l.b16 %v445
    %v759 = vunpack.c.l.b16 %v446
    %v760 = vunpack.c.h.b16 %v446
    %v761 = vunpack.c.l.b16 %v447
    %v762 = vunpack.c.h.b16 %v447
    %v763 = vunpack.c.l.b16 %v448
    %v764 = vunpack.c.l.b16 %v449
    %v765 = vunpack.c.h.b16 %v449
    %v766 = vunpack.c.l.b16 %v450
    %v767 = vunpack.c.h.b16 %v450
    %v768 = vunpack.c.l.b16 %v451
    %v769 = vunpack.c.l.b16 %v452
    %v770 = vunpack.c.h.b16 %v452
    %v771 = vunpack.c.l.b16 %v453
    %v772 = vunpack.c.h.b16 %v453
    %v773 = vunpack.c.l.b16 %v454
    %v774 = vunpack.c.l.b16 %v455
    %v775 = vunpack.c.h.b16 %v455
    %v776 = vunpack.c.l.b16 %v456
    %v777 = vunpack.c.h.b16 %v456
    %v778 = vunpack.c.l.b16 %v457
    %v779 = vunpack.c.l.b16 %v458
    %v780 = vunpack.c.h.b16 %v458
    %v781 = vunpack.c.l.b16 %v459
    %v782 = vunpack.c.h.b16 %v459
    %v783 = vunpack.c.l.b16 %v460
    %v784 = vunpack.c.l.b16 %v461
    %v785 = vunpack.c.h.b16 %v461
    %v786 = vunpack.c.l.b16 %v462
    %v787 = vunpack.c.h.b16 %v462
    %v788 = vunpack.c.l.b16 %v463
    %v789 = vunpack.c.l.b16 %v464
    %v790 = vunpack.c.h.b16 %v464
    %v791 = vunpack.c.l.b16 %v465
    %v792 = vunpack.c.h.b16 %v465
    %v793 = vunpack.c.l.b16 %v466
    %v794 = vunpack.c.l.b16 %v467
    %v795 = vunpack.c.h.b16 %v467
    %v796 = vunpack.c.l.b16 %v468
    %v797 = vunpack.c.h.b16 %v468
    %v798 = vunpack.c.l.b16 %v469
    %v799 = vunpack.c.l.b16 %v470
    %v800 = vunpack.c.h.b16 %v470
    %v801 = vunpack.c.l.b16 %v471
    %v802 = vunpack.c.h.b16 %v471
    %v803 = vunpack.c.l.b16 %v472
    %v804 = vunpack.c.l.b16 %v473
    %v805 = vunpack.c.h.b16 %v473
    %v806 = vunpack.c.l.b16 %v474
    %v807 = vunpack.c.h.b16 %v474
    %v808 = vunpack.c.l.b16 %v475
    %v809 = vunpack.c.l.b16 %v476
    %v810 = vunpack.c.h.b16 %v476
    %v811 = vunpack.c.l.b16 %v477
    %v812 = vunpack.c.h.b16 %v477
    %v813 = vunpack.c.l.b16 %v478
    %v814 = vunpack.c.l.b16 %v479
    %v815 = vunpack.c.h.b16 %v479
    %v816 = vunpack.c.l.b16 %v480
    %v817 = vunpack.c.h.b16 %v480
    %v818 = vunpack.c.l.b16 %v481
    %v819 = vunpack.c.l.b16 %v482
    %v820 = vunpack.c.h.b16 %v482
    %v821 = vunpack.c.l.b16 %v483
    %v822 = vunpack.c.h.b16 %v483
    %v823 = vunpack.c.l.b16 %v484
    %v824 = vunpack.c.l.b16 %v485
    %v825 = vunpack.c.h.b16 %v485
    %v826 = vunpack.c.l.b16 %v486
    %v827 = vunpack.c.h.b16 %v486
    %v828 = vunpack.c.l.b16 %v487
    %v829 = vunpack.c.l.b16 %v488
    %v830 = vunpack.c.h.b16 %v488
    %v831 = vunpack.c.l.b16 %v489
    %v832 = vunpack.c.h.b16 %v489
    %v833 = vunpack.c.l.b16 %v490
    %v834 = vunpack.c.l.b16 %v491
    %v835 = vunpack.c.h.b16 %v491
    %v836 = vunpack.c.l.b16 %v492
    %v837 = vunpack.c.h.b16 %v492
    %v838 = vunpack.c.l.b16 %v493
    %v839 = vunpack.c.l.b16 %v494
    %v840 = vunpack.c.h.b16 %v494
    %v841 = vunpack.c.l.b16 %v495
    %v842 = vunpack.c.h.b16 %v495
    %v843 = vunpack.c.l.b16 %v496
    %v844 = vunpack.c.l.b16 %v497
    %v845 = vunpack.c.h.b16 %v497
    %v846 = vunpack.c.l.b16 %v498
    %v847 = vunpack.c.h.b16 %v498
    %v848 = vunpack.c.l.b16 %v499
    %v849 = vunpack.c.l.b16 %v500
    %v850 = vunpack.c.h.b16 %v500
    %v851 = vunpack.c.l.b16 %v501
    %v852 = vunpack.c.h.b16 %v501
    %v853 = vunpack.c.l.b16 %v502
    %v854 = vunpack.c.l.b16 %v503
    %v855 = vunpack.c.h.b16 %v503
    %v856 = vunpack.c.l.b16 %v504
    %v857 = vunpack.c.h.b16 %v504
    %v858 = vunpack.c.l.b16 %v505
    %v859 = vunpack.c.l.b16 %v506
    %v860 = vunpack.c.h.b16 %v506
    %v861 = vunpack.c.l.b16 %v507
    %v862 = vunpack.c.h.b16 %v507
    %v863 = vunpack.c.l.b16 %v508
    %v864 = vunpack.c.l.b16 %v509
    %v865 = vunpack.c.h.b16 %v509
    %v866 = vunpack.c.l.b16 %v510
    %v867 = vunpack.c.h.b16 %v510
    %v868 = vunpack.c.l.b16 %v511
    %v869 = vunpack.c.l.b16 %v512
    %v870 = vunpack.c.h.b16 %v512
    %v871 = vunpack.c.l.b16 %v513
    %v872 = vunpack.c.h.b16 %v513
    %v873 = vunpack.c.l.b16 %v514
    %v874 = vunpack.c.l.b16 %v515
    %v875 = vunpack.c.h.b16 %v515
    %v876 = vunpack.c.l.b16 %v516
    %v877 = vunpack.c.h.b16 %v516
    %v878 = vunpack.c.l.b16 %v517
    %v879 = vunpack.c.l.b16 %v518
    %v880 = vunpack.c.h.b16 %v518
    %v881 = vunpack.c.l.b16 %v519
    %v882 = vunpack.c.h.b16 %v519
    %v883 = vunpack.c.l.b16 %v520
    %v884 = vunpack.c.l.b16 %v521
    %v885 = vunpack.c.h.b16 %v521
    %v886 = vunpack.c.l.b16 %v522
    %v887 = vunpack.c.h.b16 %v522
    %v888 = vunpack.c.l.b16 %v523
    %v889 = vunpack.c.l.b16 %v524
    %v890 = vunpack.c.h.b16 %v524
    %v891 = vunpack.c.l.b16 %v525
    %v892 = vunpack.c.h.b16 %v525
    %v893 = vunpack.c.l.b16 %v526
    %v894 = vunpack.c.l.b16 %v527
    %v895 = vunpack.c.h.b16 %v527
    %v896 = vunpack.c.l.b16 %v528
    %v897 = vunpack.c.h.b16 %v528
    %v898 = vunpack.c.l.b16 %v529
    %v899 = vunpack.c.l.b16 %v530
    %v900 = vunpack.c.h.b16 %v530
    %v901 = vunpack.c.l.b16 %v531
    %v902 = vunpack.c.h.b16 %v531
    %v903 = vunpack.c.l.b16 %v532
    %v904 = vunpack.c.l.b16 %v533
    %v905 = vunpack.c.h.b16 %v533
    %v906 = vunpack.c.l.b16 %v534
    %v907 = vunpack.c.h.b16 %v534
    %v908 = vunpack.c.l.b16 %v535
    %v909 = vunpack.c.l.b16 %v536
    %v910 = vunpack.c.h.b16 %v536
    %v911 = vunpack.c.l.b16 %v537
    %v912 = vunpack.c.h.b16 %v537
    %v913 = vunpack.c.l.b16 %v538
    %v914 = vunpack.c.l.b16 %v539
    %v915 = vunpack.c.h.b16 %v539
    %v916 = vunpack.c.l.b16 %v540
    %v917 = vunpack.c.h.b16 %v540
    %v918 = vunpack.c.l.b16 %v541
    %v919 = vunpack.c.l.b16 %v542
    %v920 = vunpack.c.h.b16 %v542
    %v921 = vunpack.c.l.b16 %v543
    %v922 = vunpack.c.h.b16 %v543
    %v923 = vunpack.c.l.b16 %v544
    %v924 = vunpack.c.l.b16 %v545
    %v925 = vunpack.c.h.b16 %v545
    %v926 = vunpack.c.l.b16 %v546
    %v927 = vunpack.c.h.b16 %v546
    %v928 = vunpack.c.l.b16 %v547
    %v929 = vunpack.c.l.b16 %v548
    %v930 = vunpack.c.h.b16 %v548
    %v931 = vunpack.c.l.b16 %v549
    %v932 = vunpack.c.h.b16 %v549
    %v933 = vunpack.c.l.b16 %v550
    %v934 = vunpack.c.l.b16 %v551
    %v935 = vunpack.c.h.b16 %v551
    %v936 = vunpack.c.l.b16 %v552
    %v937 = vunpack.c.h.b16 %v552
    %v938 = vunpack.c.l.b16 %v553
    %v939 = vunpack.c.l.b16 %v554
    %v940 = vunpack.c.h.b16 %v554
    %v941 = vunpack.c.l.b16 %v555
    %v942 = vunpack.c.h.b16 %v555
    %v943 = vunpack.c.l.b16 %v556
    %v944 = vunpack.c.l.b16 %v557
    %v945 = vunpack.c.h.b16 %v557
    %v946 = vunpack.c.l.b16 %v558
    %v947 = vunpack.c.h.b16 %v558
    %v948 = vunpack.c.l.b16 %v559
    %v949 = vunpack.c.l.b16 %v560
    %v950 = vunpack.c.h.b16 %v560
    %v951 = vunpack.c.l.b16 %v561
    %v952 = vunpack.c.h.b16 %v561
    %v953 = vunpack.c.l.b16 %v562
    %v954 = vunpack.c.l.b16 %v563
    %v955 = vunpack.c.h.b16 %v563
    %v956 = vunpack.c.l.b16 %v564
    %v957 = vunpack.c.h.b16 %v564
    %v958 = vunpack.c.l.b16 %v565
    %v959 = vunpack.c.l.b16 %v566
    %v960 = vunpack.c.h.b16 %v566
    %v961 = vunpack.c.l.b16 %v567
    %v962 = vunpack.c.h.b16 %v567
    %v963 = vunpack.c.l.b16 %v568
    %v964 = vunpack.c.l.b16 %v569
    %v965 = vunpack.c.h.b16 %v569
    %v966 = vunpack.c.l.b16 %v570
    %v967 = vunpack.c.h.b16 %v570
    %v968 = vunpack.c.l.b16 %v571
    %v969 = vunpack.c.l.b16 %v572
    %v970 = vunpack.c.h.b16 %v572
    %v971 = vunpack.c.l.b16 %v573
    %v972 = vunpack.c.h.b16 %v573
    %v973 = vunpack.c.l.b16 %v574
    %v974 = vpack.c.b16 %v739, %v734
    %v975 = vpack.c.b16 %v740, %v735
    %v976 = vpack.c.b16 %v741, %v736
    %v977 = vpack.c.b16 %v742, %v737
    %v978 = vpack.c.b16 %v743, %v738
    %v979 = vpack.c.b16 %v749, %v744
    %v980 = vpack.c.b16 %v750, %v745
    %v981 = vpack.c.b16 %v751, %v746
    %v982 = vpack.c.b16 %v752, %v747
    %v983 = vpack.c.b16 %v753, %v748
    %v984 = vpack.c.b16 %v759, %v754
    %v985 = vpack.c.b16 %v760, %v755
    %v986 = vpack.c.b16 %v761, %v756
    %v987 = vpack.c.b16 %v762, %v757
    %v988 = vpack.c.b16 %v763, %v758
    %v989 = vpack.c.b16 %v769, %v764
    %v990 = vpack.c.b16 %v770, %v765
    %v991 = vpack.c.b16 %v771, %v766
    %v992 = vpack.c.b16 %v772, %v767
    %v993 = vpack.c.b16 %v773, %v768
    %v994 = vpack.c.b16 %v779, %v774
    %v995 = vpack.c.b16 %v780, %v775
    %v996 = vpack.c.b16 %v781, %v776
    %v997 = vpack.c.b16 %v782, %v777
    %v998 = vpack.c.b16 %v783, %v778
    %v999 = vpack.c.b16 %v789, %v784
    %v1000 = vpack.c.b16 %v790, %v785
    %v1001 = vpack.c.b16 %v791, %v786
    %v1002 = vpack.c.b16 %v792, %v787
    %v1003 = vpack.c.b16 %v793, %v788
    %v1004 = vpack.c.b16 %v799, %v794
    %v1005 = vpack.c.b16 %v800, %v795
    %v1006 = vpack.c.b16 %v801, %v796
    %v1007 = vpack.c.b16 %v802, %v797
    %v1008 = vpack.c.b16 %v803, %v798
    %v1009 = vpack.c.b16 %v809, %v804
    %v1010 = vpack.c.b16 %v810, %v805
    %v1011 = vpack.c.b16 %v811, %v806
    %v1012 = vpack.c.b16 %v812, %v807
    %v1013 = vpack.c.b16 %v813, %v808
    %v1014 = vpack.c.b16 %v819, %v814
    %v1015 = vpack.c.b16 %v820, %v815
    %v1016 = vpack.c.b16 %v821, %v816
    %v1017 = vpack.c.b16 %v822, %v817
    %v1018 = vpack.c.b16 %v823, %v818
    %v1019 = vpack.c.b16 %v829, %v824
    %v1020 = vpack.c.b16 %v830, %v825
    %v1021 = vpack.c.b16 %v831, %v826
    %v1022 = vpack.c.b16 %v832, %v827
    %v1023 = vpack.c.b16 %v833, %v828
    %v1024 = vpack.c.b16 %v839, %v834
    %v1025 = vpack.c.b16 %v840, %v835
    %v1026 = vpack.c.b16 %v841, %v836
    %v1027 = vpack.c.b16 %v842, %v837
    %v1028 = vpack.c.b16 %v843, %v838
    %v1029 = vpack.c.b16 %v849, %v844
    %v1030 = vpack.c.b16 %v850, %v845
    %v1031 = vpack.c.b16 %v851, %v846
    %v1032 = vpack.c.b16 %v852, %v847
    %v1033 = vpack.c.b16 %v853, %v848
    %v1034 = vpack.c.b16 %v859, %v854
    %v1035 = vpack.c.b16 %v860, %v855
    %v1036 = vpack.c.b16 %v861, %v856
    %v1037 = vpack.c.b16 %v862, %v857
    %v1038 = vpack.c.b16 %v863, %v858
    %v1039 = vpack.c.b16 %v869, %v864
    %v1040 = vpack.c.b16 %v870, %v865
    %v1041 = vpack.c.b16 %v871, %v866
    %v1042 = vpack.c.b16 %v872, %v867
    %v1043 = vpack.c.b16 %v873, %v868
    %v1044 = vpack.c.b16 %v879, %v874
    %v1045 = vpack.c.b16 %v880, %v875
    %v1046 = vpack.c.b16 %v881, %v876
    %v1047 = vpack.c.b16 %v882, %v877
    %v1048 = vpack.c.b16 %v883, %v878
    %v1049 = vpack.c.b16 %v889, %v884
    %v1050 = vpack.c.b16 %v890, %v885
    %v1051 = vpack.c.b16 %v891, %v886
    %v1052 = vpack.c.b16 %v892, %v887
    %v1053 = vpack.c.b16 %v893, %v888
    %v1054 = vpack.c.b16 %v899, %v894
    %v1055 = vpack.c.b16 %v900, %v895
    %v1056 = vpack.c.b16 %v901, %v896
    %v1057 = vpack.c.b16 %v902, %v897
    %v1058 = vpack.c.b16 %v903, %v898
    %v1059 = vpack.c.b16 %v909, %v904
    %v1060 = vpack.c.b16 %v910, %v905
    %v1061 = vpack.c.b16 %v911, %v906
    %v1062 = vpack.c.b16 %v912, %v907
    %v1063 = vpack.c.b16 %v913, %v908
    %v1064 = vpack.c.b16 %v919, %v914
    %v1065 = vpack.c.b16 %v920, %v915
    %v1066 = vpack.c.b16 %v921, %v916
    %v1067 = vpack.c.b16 %v922, %v917
    %v1068 = vpack.c.b16 %v923, %v918
    %v1069 = vpack.c.b16 %v929, %v924
    %v1070 = vpack.c.b16 %v930, %v925
    %v1071 = vpack.c.b16 %v931, %v926
    %v1072 = vpack.c.b16 %v932, %v927
    %v1073 = vpack.c.b16 %v933, %v928
    %v1074 = vpack.c.b16 %v939, %v934
    %v1075 = vpack.c.b16 %v940, %v935
    %v1076 = vpack.c.b16 %v941, %v936
    %v1077 = vpack.c.b16 %v942, %v937
    %v1078 = vpack.c.b16 %v943, %v938
    %v1079 = vpack.c.b16 %v949, %v944
    %v1080 = vpack.c.b16 %v950, %v945
    %v1081 = vpack.c.b16 %v951, %v946
    %v1082 = vpack.c.b16 %v952, %v947
    %v1083 = vpack.c.b16 %v953, %v948
    %v1084 = vpack.c.b16 %v959, %v954
    %v1085 = vpack.c.b16 %v960, %v955
    %v1086 = vpack.c.b16 %v961, %v956
    %v1087 = vpack.c.b16 %v962, %v957
    %v1088 = vpack.c.b16 %v963, %v958
    %v1089 = vpack.c.b16 %v969, %v964
    %v1090 = vpack.c.b16 %v970, %v965
    %v1091 = vpack.c.b16 %v971, %v966
    %v1092 = vpack.c.b16 %v972, %v967
    %v1093 = vpack.c.b16 %v973, %v968
    %1214 = vmatpush.bf16.msra.mxu0 %v1009
    %1215 = vmatpush.bf16.msra.mxu0 %v1004
    %1216 = vmatpush.bf16.msra.mxu0 %v999
    %1217 = vmatpush.bf16.msra.mxu0 %v994
    %1218 = vmatpush.bf16.msra.mxu0 %v989
    %1219 = vmatpush.bf16.msra.mxu0 %v984
    %1220 = vmatpush.bf16.msra.mxu0 %v979
    %1221 = vmatpush.bf16.msra.mxu0 %v974
    %1222 = vmatmul.bf16.gmra.mxu0 %v428
    %v1223 = vpop.f32.mrf.mxu0
    %v1224 = vadd.f32 %v580, %v1223
    %v1225 = vpop.f32.mrf.mxu0
    %1226 = vdwg.mxu0
    %1227 = vmatpush.bf16.msra.mxu0 %v1049
    %1228 = vmatpush.bf16.msra.mxu0 %v1044
    %1229 = vmatpush.bf16.msra.mxu0 %v1039
    %1230 = vmatpush.bf16.msra.mxu0 %v1034
    %1231 = vmatpush.bf16.msra.mxu0 %v1029
    %1232 = vmatpush.bf16.msra.mxu0 %v1024
    %1233 = vmatpush.bf16.msra.mxu0 %v1019
    %1234 = vmatpush.bf16.msra.mxu0 %v1014
    %1235 = vmatmul.bf16.gmra.mxu0 %v429
    %v1236 = vpop.f32.mrf.mxu0
    %v1237 = vadd.f32 %v1224, %v1236
    %v1238 = vpop.f32.mrf.mxu0
    %1239 = vdwg.mxu0
    %1240 = vmatpush.bf16.msra.mxu0 %v1089
    %1241 = vmatpush.bf16.msra.mxu0 %v1084
    %1242 = vmatpush.bf16.msra.mxu0 %v1079
    %1243 = vmatpush.bf16.msra.mxu0 %v1074
    %1244 = vmatpush.bf16.msra.mxu0 %v1069
    %1245 = vmatpush.bf16.msra.mxu0 %v1064
    %1246 = vmatpush.bf16.msra.mxu0 %v1059
    %1247 = vmatpush.bf16.msra.mxu0 %v1054
    %1248 = vmatmul.bf16.gmra.mxu0 %v430
    %v1249 = vpop.f32.mrf.mxu0
    %v1250 = vadd.f32 %v1237, %v1249
    %v1251 = vpop.f32.mrf.mxu0
    %1252 = vdwg.mxu0
    %1253 = vmatpush.bf16.msra.mxu0 %v1010
    %1254 = vmatpush.bf16.msra.mxu0 %v1005
    %1255 = vmatpush.bf16.msra.mxu0 %v1000
    %1256 = vmatpush.bf16.msra.mxu0 %v995
    %1257 = vmatpush.bf16.msra.mxu0 %v990
    %1258 = vmatpush.bf16.msra.mxu0 %v985
    %1259 = vmatpush.bf16.msra.mxu0 %v980
    %1260 = vmatpush.bf16.msra.mxu0 %v975
    %1261 = vmatmul.bf16.gmra.mxu0 %v428
    %v1262 = vpop.f32.mrf.mxu0
    %v1263 = vadd.f32 %v581, %v1262
    %v1264 = vpop.f32.mrf.mxu0
    %1265 = vdwg.mxu0
    %1266 = vmatpush.bf16.msra.mxu0 %v1050
    %1267 = vmatpush.bf16.msra.mxu0 %v1045
    %1268 = vmatpush.bf16.msra.mxu0 %v1040
    %1269 = vmatpush.bf16.msra.mxu0 %v1035
    %1270 = vmatpush.bf16.msra.mxu0 %v1030
    %1271 = vmatpush.bf16.msra.mxu0 %v1025
    %1272 = vmatpush.bf16.msra.mxu0 %v1020
    %1273 = vmatpush.bf16.msra.mxu0 %v1015
    %1274 = vmatmul.bf16.gmra.mxu0 %v429
    %v1275 = vpop.f32.mrf.mxu0
    %v1276 = vadd.f32 %v1263, %v1275
    %v1277 = vpop.f32.mrf.mxu0
    %1278 = vdwg.mxu0
    %1279 = vmatpush.bf16.msra.mxu0 %v1090
    %1280 = vmatpush.bf16.msra.mxu0 %v1085
    %1281 = vmatpush.bf16.msra.mxu0 %v1080
    %1282 = vmatpush.bf16.msra.mxu0 %v1075
    %1283 = vmatpush.bf16.msra.mxu0 %v1070
    %1284 = vmatpush.bf16.msra.mxu0 %v1065
    %1285 = vmatpush.bf16.msra.mxu0 %v1060
    %1286 = vmatpush.bf16.msra.mxu0 %v1055
    %1287 = vmatmul.bf16.gmra.mxu0 %v430
    %v1288 = vpop.f32.mrf.mxu0
    %v1289 = vadd.f32 %v1276, %v1288
    %v1290 = vpop.f32.mrf.mxu0
    %1291 = vdwg.mxu0
    %1292 = vmatpush.bf16.msra.mxu0 %v1011
    %1293 = vmatpush.bf16.msra.mxu0 %v1006
    %1294 = vmatpush.bf16.msra.mxu0 %v1001
    %1295 = vmatpush.bf16.msra.mxu0 %v996
    %1296 = vmatpush.bf16.msra.mxu0 %v991
    %1297 = vmatpush.bf16.msra.mxu0 %v986
    %1298 = vmatpush.bf16.msra.mxu0 %v981
    %1299 = vmatpush.bf16.msra.mxu0 %v976
    %1300 = vmatmul.bf16.gmra.mxu0 %v428
    %v1301 = vpop.f32.mrf.mxu0
    %v1302 = vadd.f32 %v582, %v1301
    %v1303 = vpop.f32.mrf.mxu0
    %1304 = vdwg.mxu0
    %1305 = vmatpush.bf16.msra.mxu0 %v1051
    %1306 = vmatpush.bf16.msra.mxu0 %v1046
    %1307 = vmatpush.bf16.msra.mxu0 %v1041
    %1308 = vmatpush.bf16.msra.mxu0 %v1036
    %1309 = vmatpush.bf16.msra.mxu0 %v1031
    %1310 = vmatpush.bf16.msra.mxu0 %v1026
    %1311 = vmatpush.bf16.msra.mxu0 %v1021
    %1312 = vmatpush.bf16.msra.mxu0 %v1016
    %1313 = vmatmul.bf16.gmra.mxu0 %v429
    %v1314 = vpop.f32.mrf.mxu0
    %v1315 = vadd.f32 %v1302, %v1314
    %v1316 = vpop.f32.mrf.mxu0
    %1317 = vdwg.mxu0
    %1318 = vmatpush.bf16.msra.mxu0 %v1091
    %1319 = vmatpush.bf16.msra.mxu0 %v1086
    %1320 = vmatpush.bf16.msra.mxu0 %v1081
    %1321 = vmatpush.bf16.msra.mxu0 %v1076
    %1322 = vmatpush.bf16.msra.mxu0 %v1071
    %1323 = vmatpush.bf16.msra.mxu0 %v1066
    %1324 = vmatpush.bf16.msra.mxu0 %v1061
    %1325 = vmatpush.bf16.msra.mxu0 %v1056
    %1326 = vmatmul.bf16.gmra.mxu0 %v430
    %v1327 = vpop.f32.mrf.mxu0
    %v1328 = vadd.f32 %v1315, %v1327
    %v1329 = vpop.f32.mrf.mxu0
    %1330 = vdwg.mxu0
    %1331 = vmatpush.bf16.msra.mxu0 %v1012
    %1332 = vmatpush.bf16.msra.mxu0 %v1007
    %1333 = vmatpush.bf16.msra.mxu0 %v1002
    %1334 = vmatpush.bf16.msra.mxu0 %v997
    %1335 = vmatpush.bf16.msra.mxu0 %v992
    %1336 = vmatpush.bf16.msra.mxu0 %v987
    %1337 = vmatpush.bf16.msra.mxu0 %v982
    %1338 = vmatpush.bf16.msra.mxu0 %v977
    %1339 = vmatmul.bf16.gmra.mxu0 %v428
    %v1340 = vpop.f32.mrf.mxu0
    %v1341 = vadd.f32 %v583, %v1340
    %v1342 = vpop.f32.mrf.mxu0
    %1343 = vdwg.mxu0
    %1344 = vmatpush.bf16.msra.mxu0 %v1052
    %1345 = vmatpush.bf16.msra.mxu0 %v1047
    %1346 = vmatpush.bf16.msra.mxu0 %v1042
    %1347 = vmatpush.bf16.msra.mxu0 %v1037
    %1348 = vmatpush.bf16.msra.mxu0 %v1032
    %1349 = vmatpush.bf16.msra.mxu0 %v1027
    %1350 = vmatpush.bf16.msra.mxu0 %v1022
    %1351 = vmatpush.bf16.msra.mxu0 %v1017
    %1352 = vmatmul.bf16.gmra.mxu0 %v429
    %v1353 = vpop.f32.mrf.mxu0
    %v1354 = vadd.f32 %v1341, %v1353
    %v1355 = vpop.f32.mrf.mxu0
    %1356 = vdwg.mxu0
    %1357 = vmatpush.bf16.msra.mxu0 %v1092
    %1358 = vmatpush.bf16.msra.mxu0 %v1087
    %1359 = vmatpush.bf16.msra.mxu0 %v1082
    %1360 = vmatpush.bf16.msra.mxu0 %v1077
    %1361 = vmatpush.bf16.msra.mxu0 %v1072
    %1362 = vmatpush.bf16.msra.mxu0 %v1067
    %1363 = vmatpush.bf16.msra.mxu0 %v1062
    %1364 = vmatpush.bf16.msra.mxu0 %v1057
    %1365 = vmatmul.bf16.gmra.mxu0 %v430
    %v1366 = vpop.f32.mrf.mxu0
    %v1367 = vadd.f32 %v1354, %v1366
    %v1368 = vpop.f32.mrf.mxu0
    %1369 = vdwg.mxu0
    %1370 = vmatpush.bf16.msra.mxu0 %v1013
    %1371 = vmatpush.bf16.msra.mxu0 %v1008
    %1372 = vmatpush.bf16.msra.mxu0 %v1003
    %1373 = vmatpush.bf16.msra.mxu0 %v998
    %1374 = vmatpush.bf16.msra.mxu0 %v993
    %1375 = vmatpush.bf16.msra.mxu0 %v988
    %1376 = vmatpush.bf16.msra.mxu0 %v983
    %1377 = vmatpush.bf16.msra.mxu0 %v978
    %1378 = vmatmul.bf16.gmra.mxu0 %v428
    %v1379 = vpop.f32.mrf.mxu0
    %v1380 = vadd.f32 %v584, %v1379
    %v1381 = vpop.f32.mrf.mxu0
    %1382 = vdwg.mxu0
    %1383 = vmatpush.bf16.msra.mxu0 %v1053
    %1384 = vmatpush.bf16.msra.mxu0 %v1048
    %1385 = vmatpush.bf16.msra.mxu0 %v1043
    %1386 = vmatpush.bf16.msra.mxu0 %v1038
    %1387 = vmatpush.bf16.msra.mxu0 %v1033
    %1388 = vmatpush.bf16.msra.mxu0 %v1028
    %1389 = vmatpush.bf16.msra.mxu0 %v1023
    %1390 = vmatpush.bf16.msra.mxu0 %v1018
    %1391 = vmatmul.bf16.gmra.mxu0 %v429
    %v1392 = vpop.f32.mrf.mxu0
    %v1393 = vadd.f32 %v1380, %v1392
    %v1394 = vpop.f32.mrf.mxu0
    %1395 = vdwg.mxu0
    %1396 = vmatpush.bf16.msra.mxu0 %v1093
    %1397 = vmatpush.bf16.msra.mxu0 %v1088
    %1398 = vmatpush.bf16.msra.mxu0 %v1083
    %1399 = vmatpush.bf16.msra.mxu0 %v1078
    %1400 = vmatpush.bf16.msra.mxu0 %v1073
    %1401 = vmatpush.bf16.msra.mxu0 %v1068
    %1402 = vmatpush.bf16.msra.mxu0 %v1063
    %1403 = vmatpush.bf16.msra.mxu0 %v1058
    %1404 = vmatmul.bf16.gmra.mxu0 %v430
    %v1405 = vpop.f32.mrf.mxu0
    %v1406 = vadd.f32 %v1393, %v1405
    %v1407 = vpop.f32.mrf.mxu0
    %1408 = vdwg.mxu0
    %v1409 = vmul.f32 %v1250, 0.01
    %v1410 = vmul.f32 %v1289, 0.01
    %v1411 = vmul.f32 %v1328, 0.01
    %v1412 = vmul.f32 %v1367, 0.01
    %v1413 = vmul.f32 %v1406, 0.01
    %v1414 = vmax.f32 %v1250, %v1409
    %v1415 = vmax.f32 %v1289, %v1410
    %v1416 = vmax.f32 %v1328, %v1411
    %v1417 = vmax.f32 %v1367, %v1412
    %v1418 = vmax.f32 %v1406, %v1413
    %v1419 = vpack.c.bf16 %v1414, %v1414
    %v1420 = vpack.c.bf16 %v1415, %v1415
    %v1421 = vpack.c.bf16 %v1416, %v1416
    %v1422 = vpack.c.bf16 %v1417, %v1417
    %v1423 = vpack.c.bf16 %v1418, %v1418
    %v1424 = vld [vmem:[#allocation10] sm:$0xff]
    %v1425 = vld [vmem:[#allocation10 + $0x8] sm:$0xf]
    %v1426 = vld [vmem:[#allocation10 + $0xc] sm:$0xff]
    %v1427 = vld [vmem:[#allocation10 + $0x14] sm:$0xf]
    %v1428 = vld [vmem:[#allocation10 + $0x18] sm:$0xff]
    %v1429 = vld [vmem:[#allocation10 + $0x20] sm:$0xf]
    %v1430 = vld [vmem:[#allocation10 + $0x24] sm:$0xff]
    %v1431 = vld [vmem:[#allocation10 + $0x2c] sm:$0xf]
    %v1432 = vld [vmem:[#allocation10 + $0x30] sm:$0xff]
    %v1433 = vld [vmem:[#allocation10 + $0x38] sm:$0xf]
    %v1434 = vld [vmem:[#allocation10 + $0x3c] sm:$0xff]
    %v1435 = vld [vmem:[#allocation10 + $0x44] sm:$0xf]
    %v1436 = vld [vmem:[#allocation10 + $0x48] sm:$0xff]
    %v1437 = vld [vmem:[#allocation10 + $0x50] sm:$0xf]
    %v1438 = vld [vmem:[#allocation10 + $0x54] sm:$0xff]
    %v1439 = vld [vmem:[#allocation10 + $0x5c] sm:$0xf]
    %v1440 = vld [vmem:[#allocation10 + $0x60] sm:$0xff]
    %v1441 = vld [vmem:[#allocation10 + $0x68] sm:$0xf]
    %v1442 = vld [vmem:[#allocation10 + $0x6c] sm:$0xff]
    %v1443 = vld [vmem:[#allocation10 + $0x74] sm:$0xf]
    %v1444 = vld [vmem:[#allocation10 + $0x78] sm:$0xff]
    %v1445 = vld [vmem:[#allocation10 + $0x80] sm:$0xf]
    %v1446 = vld [vmem:[#allocation10 + $0x84] sm:$0xff]
    %v1447 = vld [vmem:[#allocation10 + $0x8c] sm:$0xf]
    %v1448 = vld [vmem:[#allocation10 + $0x90] sm:$0xff]
    %v1449 = vld [vmem:[#allocation10 + $0x98] sm:$0xf]
    %v1450 = vld [vmem:[#allocation10 + $0x9c] sm:$0xff]
    %v1451 = vld [vmem:[#allocation10 + $0xa4] sm:$0xf]
    %v1452 = vld [vmem:[#allocation10 + $0xa8] sm:$0xff]
    %v1453 = vld [vmem:[#allocation10 + $0xb0] sm:$0xf]
    %v1454 = vld [vmem:[#allocation10 + $0xb4] sm:$0xff]
    %v1455 = vld [vmem:[#allocation10 + $0xbc] sm:$0xf]
    %v1456 = vld [vmem:[#allocation10 + $0xc0] sm:$0xff]
    %v1457 = vld [vmem:[#allocation10 + $0xc8] sm:$0xf]
    %v1458 = vld [vmem:[#allocation10 + $0xcc] sm:$0xff]
    %v1459 = vld [vmem:[#allocation10 + $0xd4] sm:$0xf]
    %v1460 = vld [vmem:[#allocation10 + $0xd8] sm:$0xff]
    %v1461 = vld [vmem:[#allocation10 + $0xe0] sm:$0xf]
    %v1462 = vld [vmem:[#allocation10 + $0xe4] sm:$0xff]
    %v1463 = vld [vmem:[#allocation10 + $0xec] sm:$0xf]
    %v1464 = vld [vmem:[#allocation10 + $0xf0] sm:$0xff]
    %v1465 = vld [vmem:[#allocation10 + $0xf8] sm:$0xf]
    %v1466 = vld [vmem:[#allocation10 + $0xfc] sm:$0xff]
    %v1467 = vld [vmem:[#allocation10 + $0x104] sm:$0xf]
    %v1468 = vld [vmem:[#allocation10 + $0x108] sm:$0xff]
    %v1469 = vld [vmem:[#allocation10 + $0x110] sm:$0xf]
    %v1470 = vld [vmem:[#allocation10 + $0x114] sm:$0xff]
    %v1471 = vld [vmem:[#allocation10 + $0x11c] sm:$0xf]
    %v1472 = vld [vmem:[#allocation10 + $0x120] sm:$0xff]
    %v1473 = vld [vmem:[#allocation10 + $0x128] sm:$0xf]
    %v1474 = vld [vmem:[#allocation10 + $0x12c] sm:$0xff]
    %v1475 = vld [vmem:[#allocation10 + $0x134] sm:$0xf]
    %v1476 = vld [vmem:[#allocation10 + $0x138] sm:$0xff]
    %v1477 = vld [vmem:[#allocation10 + $0x140] sm:$0xf]
    %v1478 = vld [vmem:[#allocation10 + $0x144] sm:$0xff]
    %v1479 = vld [vmem:[#allocation10 + $0x14c] sm:$0xf]
    %v1480 = vld [vmem:[#allocation10 + $0x150] sm:$0xff]
    %v1481 = vld [vmem:[#allocation10 + $0x158] sm:$0xf]
    %v1482 = vld [vmem:[#allocation10 + $0x15c] sm:$0xff]
    %v1483 = vld [vmem:[#allocation10 + $0x164] sm:$0xf]
    %v1484 = vld [vmem:[#allocation10 + $0x168] sm:$0xff]
    %v1485 = vld [vmem:[#allocation10 + $0x170] sm:$0xf]
    %v1486 = vld [vmem:[#allocation10 + $0x174] sm:$0xff]
    %v1487 = vld [vmem:[#allocation10 + $0x17c] sm:$0xf]
    %v1488 = vld [vmem:[#allocation10 + $0x180] sm:$0xff]
    %v1489 = vld [vmem:[#allocation10 + $0x188] sm:$0xf]
    %v1490 = vld [vmem:[#allocation10 + $0x18c] sm:$0xff]
    %v1491 = vld [vmem:[#allocation10 + $0x194] sm:$0xf]
    %v1492 = vld [vmem:[#allocation10 + $0x198] sm:$0xff]
    %v1493 = vld [vmem:[#allocation10 + $0x1a0] sm:$0xf]
    %v1494 = vld [vmem:[#allocation10 + $0x1a4] sm:$0xff]
    %v1495 = vld [vmem:[#allocation10 + $0x1ac] sm:$0xf]
    %v1496 = vld [vmem:[#allocation10 + $0x1b0] sm:$0xff]
    %v1497 = vld [vmem:[#allocation10 + $0x1b8] sm:$0xf]
    %v1498 = vld [vmem:[#allocation10 + $0x1bc] sm:$0xff]
    %v1499 = vld [vmem:[#allocation10 + $0x1c4] sm:$0xf]
    %v1500 = vld [vmem:[#allocation10 + $0x1c8] sm:$0xff]
    %v1501 = vld [vmem:[#allocation10 + $0x1d0] sm:$0xf]
    %v1502 = vld [vmem:[#allocation10 + $0x1d4] sm:$0xff]
    %v1503 = vld [vmem:[#allocation10 + $0x1dc] sm:$0xf]
    %v1504 = vld [vmem:[#allocation10 + $0x1e0] sm:$0xff]
    %v1505 = vld [vmem:[#allocation10 + $0x1e8] sm:$0xf]
    %v1506 = vld [vmem:[#allocation10 + $0x1ec] sm:$0xff]
    %v1507 = vld [vmem:[#allocation10 + $0x1f4] sm:$0xf]
    %v1508 = vld [vmem:[#allocation10 + $0x1f8] sm:$0xff]
    %v1509 = vld [vmem:[#allocation10 + $0x200] sm:$0xf]
    %v1510 = vld [vmem:[#allocation10 + $0x204] sm:$0xff]
    %v1511 = vld [vmem:[#allocation10 + $0x20c] sm:$0xf]
    %v1512 = vld [vmem:[#allocation10 + $0x210] sm:$0xff]
    %v1513 = vld [vmem:[#allocation10 + $0x218] sm:$0xf]
    %v1514 = vld [vmem:[#allocation10 + $0x21c] sm:$0xff]
    %v1515 = vld [vmem:[#allocation10 + $0x224] sm:$0xf]
    %v1516 = vld [vmem:[#allocation10 + $0x228] sm:$0xff]
    %v1517 = vld [vmem:[#allocation10 + $0x230] sm:$0xf]
    %v1518 = vld [vmem:[#allocation10 + $0x234] sm:$0xff]
    %v1519 = vld [vmem:[#allocation10 + $0x23c] sm:$0xf]
    %v1520 = vld [vmem:[#allocation10 + $0x240] sm:$0xff]
    %v1521 = vld [vmem:[#allocation10 + $0x248] sm:$0xf]
    %v1522 = vld [vmem:[#allocation10 + $0x24c] sm:$0xff]
    %v1523 = vld [vmem:[#allocation10 + $0x254] sm:$0xf]
    %v1524 = vld [vmem:[#allocation10 + $0x258] sm:$0xff]
    %v1525 = vld [vmem:[#allocation10 + $0x260] sm:$0xf]
    %v1526 = vld [vmem:[#allocation10 + $0x264] sm:$0xff]
    %v1527 = vld [vmem:[#allocation10 + $0x26c] sm:$0xf]
    %v1528 = vld [vmem:[#allocation10 + $0x270] sm:$0xff]
    %v1529 = vld [vmem:[#allocation10 + $0x278] sm:$0xf]
    %v1530 = vld [vmem:[#allocation10 + $0x27c] sm:$0xff]
    %v1531 = vld [vmem:[#allocation10 + $0x284] sm:$0xf]
    %v1532 = vld [vmem:[#allocation10 + $0x288] sm:$0xff]
    %v1533 = vld [vmem:[#allocation10 + $0x290] sm:$0xf]
    %v1534 = vld [vmem:[#allocation10 + $0x294] sm:$0xff]
    %v1535 = vld [vmem:[#allocation10 + $0x29c] sm:$0xf]
    %v1536 = vld [vmem:[#allocation10 + $0x2a0] sm:$0xff]
    %v1537 = vld [vmem:[#allocation10 + $0x2a8] sm:$0xf]
    %v1538 = vld [vmem:[#allocation10 + $0x2ac] sm:$0xff]
    %v1539 = vld [vmem:[#allocation10 + $0x2b4] sm:$0xf]
    %v1540 = vld [vmem:[#allocation10 + $0x2b8] sm:$0xff]
    %v1541 = vld [vmem:[#allocation10 + $0x2c0] sm:$0xf]
    %v1542 = vld [vmem:[#allocation10 + $0x2c4] sm:$0xff]
    %v1543 = vld [vmem:[#allocation10 + $0x2cc] sm:$0xf]
    %v1544 = vld [vmem:[#allocation10 + $0x2d0] sm:$0xff]
    %v1545 = vld [vmem:[#allocation10 + $0x2d8] sm:$0xf]
    %v1546 = vld [vmem:[#allocation10 + $0x2dc] sm:$0xff]
    %v1547 = vld [vmem:[#allocation10 + $0x2e4] sm:$0xf]
    %v1548 = vld [vmem:[#allocation10 + $0x2e8] sm:$0xff]
    %v1549 = vld [vmem:[#allocation10 + $0x2f0] sm:$0xf]
    %v1550 = vld [vmem:[#allocation10 + $0x2f4] sm:$0xff]
    %v1551 = vld [vmem:[#allocation10 + $0x2fc] sm:$0xf]
    %v1552 = vld [vmem:[#allocation10 + $0x300] sm:$0xff]
    %v1553 = vld [vmem:[#allocation10 + $0x308] sm:$0xf]
    %v1554 = vld [vmem:[#allocation10 + $0x30c] sm:$0xff]
    %v1555 = vld [vmem:[#allocation10 + $0x314] sm:$0xf]
    %v1556 = vld [vmem:[#allocation10 + $0x318] sm:$0xff]
    %v1557 = vld [vmem:[#allocation10 + $0x320] sm:$0xf]
    %v1558 = vld [vmem:[#allocation10 + $0x324] sm:$0xff]
    %v1559 = vld [vmem:[#allocation10 + $0x32c] sm:$0xf]
    %v1560 = vld [vmem:[#allocation10 + $0x330] sm:$0xff]
    %v1561 = vld [vmem:[#allocation10 + $0x338] sm:$0xf]
    %v1562 = vld [vmem:[#allocation10 + $0x33c] sm:$0xff]
    %v1563 = vld [vmem:[#allocation10 + $0x344] sm:$0xf]
    %v1564 = vld [vmem:[#allocation10 + $0x348] sm:$0xff]
    %v1565 = vld [vmem:[#allocation10 + $0x350] sm:$0xf]
    %v1566 = vld [vmem:[#allocation10 + $0x354] sm:$0xff]
    %v1567 = vld [vmem:[#allocation10 + $0x35c] sm:$0xf]
    %v1568 = vld [vmem:[#allocation10 + $0x360] sm:$0xff]
    %v1569 = vld [vmem:[#allocation10 + $0x368] sm:$0xf]
    %v1570 = vld [vmem:[#allocation10 + $0x36c] sm:$0xff]
    %v1571 = vld [vmem:[#allocation10 + $0x374] sm:$0xf]
    %v1572 = vld [vmem:[#allocation10 + $0x378] sm:$0xff]
    %v1573 = vld [vmem:[#allocation10 + $0x380] sm:$0xf]
    %v1574 = vld [vmem:[#allocation10 + $0x384] sm:$0xff]
    %v1575 = vld [vmem:[#allocation10 + $0x38c] sm:$0xf]
    %v1576 = vld [vmem:[#allocation10 + $0x390] sm:$0xff]
    %v1577 = vld [vmem:[#allocation10 + $0x398] sm:$0xf]
    %v1578 = vld [vmem:[#allocation10 + $0x39c] sm:$0xff]
    %v1579 = vld [vmem:[#allocation10 + $0x3a4] sm:$0xf]
    %v1580 = vld [vmem:[#allocation10 + $0x3a8] sm:$0xff]
    %v1581 = vld [vmem:[#allocation10 + $0x3b0] sm:$0xf]
    %v1582 = vld [vmem:[#allocation10 + $0x3b4] sm:$0xff]
    %v1583 = vld [vmem:[#allocation10 + $0x3bc] sm:$0xf]
    %s1584 = scalar_lea.vmem [#allocation13], 3
    %v1585 = vld [vmem:[%s1584] ss:$8 sm:$0x7]
    %v1587 = vperm.slane %v1585, 0
    %v1588 = vperm.slane %v1585, 1
    %v1589 = vperm.slane %v1585, 2
    %v1753 = vunpack.c.l.b16 %v1424
    %v1754 = vunpack.c.h.b16 %v1424
    %v1755 = vunpack.c.l.b16 %v1425
    %v1756 = vunpack.c.l.b16 %v1426
    %v1757 = vunpack.c.h.b16 %v1426
    %v1758 = vunpack.c.l.b16 %v1427
    %v1759 = vunpack.c.l.b16 %v1428
    %v1760 = vunpack.c.h.b16 %v1428
    %v1761 = vunpack.c.l.b16 %v1429
    %v1762 = vunpack.c.l.b16 %v1430
    %v1763 = vunpack.c.h.b16 %v1430
    %v1764 = vunpack.c.l.b16 %v1431
    %v1765 = vunpack.c.l.b16 %v1432
    %v1766 = vunpack.c.h.b16 %v1432
    %v1767 = vunpack.c.l.b16 %v1433
    %v1768 = vunpack.c.l.b16 %v1434
    %v1769 = vunpack.c.h.b16 %v1434
    %v1770 = vunpack.c.l.b16 %v1435
    %v1771 = vunpack.c.l.b16 %v1436
    %v1772 = vunpack.c.h.b16 %v1436
    %v1773 = vunpack.c.l.b16 %v1437
    %v1774 = vunpack.c.l.b16 %v1438
    %v1775 = vunpack.c.h.b16 %v1438
    %v1776 = vunpack.c.l.b16 %v1439
    %v1777 = vunpack.c.l.b16 %v1440
    %v1778 = vunpack.c.h.b16 %v1440
    %v1779 = vunpack.c.l.b16 %v1441
    %v1780 = vunpack.c.l.b16 %v1442
    %v1781 = vunpack.c.h.b16 %v1442
    %v1782 = vunpack.c.l.b16 %v1443
    %v1783 = vunpack.c.l.b16 %v1444
    %v1784 = vunpack.c.h.b16 %v1444
    %v1785 = vunpack.c.l.b16 %v1445
    %v1786 = vunpack.c.l.b16 %v1446
    %v1787 = vunpack.c.h.b16 %v1446
    %v1788 = vunpack.c.l.b16 %v1447
    %v1789 = vunpack.c.l.b16 %v1448
    %v1790 = vunpack.c.h.b16 %v1448
    %v1791 = vunpack.c.l.b16 %v1449
    %v1792 = vunpack.c.l.b16 %v1450
    %v1793 = vunpack.c.h.b16 %v1450
    %v1794 = vunpack.c.l.b16 %v1451
    %v1795 = vunpack.c.l.b16 %v1452
    %v1796 = vunpack.c.h.b16 %v1452
    %v1797 = vunpack.c.l.b16 %v1453
    %v1798 = vunpack.c.l.b16 %v1454
    %v1799 = vunpack.c.h.b16 %v1454
    %v1800 = vunpack.c.l.b16 %v1455
    %v1801 = vunpack.c.l.b16 %v1456
    %v1802 = vunpack.c.h.b16 %v1456
    %v1803 = vunpack.c.l.b16 %v1457
    %v1804 = vunpack.c.l.b16 %v1458
    %v1805 = vunpack.c.h.b16 %v1458
    %v1806 = vunpack.c.l.b16 %v1459
    %v1807 = vunpack.c.l.b16 %v1460
    %v1808 = vunpack.c.h.b16 %v1460
    %v1809 = vunpack.c.l.b16 %v1461
    %v1810 = vunpack.c.l.b16 %v1462
    %v1811 = vunpack.c.h.b16 %v1462
    %v1812 = vunpack.c.l.b16 %v1463
    %v1813 = vunpack.c.l.b16 %v1464
    %v1814 = vunpack.c.h.b16 %v1464
    %v1815 = vunpack.c.l.b16 %v1465
    %v1816 = vunpack.c.l.b16 %v1466
    %v1817 = vunpack.c.h.b16 %v1466
    %v1818 = vunpack.c.l.b16 %v1467
    %v1819 = vunpack.c.l.b16 %v1468
    %v1820 = vunpack.c.h.b16 %v1468
    %v1821 = vunpack.c.l.b16 %v1469
    %v1822 = vunpack.c.l.b16 %v1470
    %v1823 = vunpack.c.h.b16 %v1470
    %v1824 = vunpack.c.l.b16 %v1471
    %v1825 = vunpack.c.l.b16 %v1472
    %v1826 = vunpack.c.h.b16 %v1472
    %v1827 = vunpack.c.l.b16 %v1473
    %v1828 = vunpack.c.l.b16 %v1474
    %v1829 = vunpack.c.h.b16 %v1474
    %v1830 = vunpack.c.l.b16 %v1475
    %v1831 = vunpack.c.l.b16 %v1476
    %v1832 = vunpack.c.h.b16 %v1476
    %v1833 = vunpack.c.l.b16 %v1477
    %v1834 = vunpack.c.l.b16 %v1478
    %v1835 = vunpack.c.h.b16 %v1478
    %v1836 = vunpack.c.l.b16 %v1479
    %v1837 = vunpack.c.l.b16 %v1480
    %v1838 = vunpack.c.h.b16 %v1480
    %v1839 = vunpack.c.l.b16 %v1481
    %v1840 = vunpack.c.l.b16 %v1482
    %v1841 = vunpack.c.h.b16 %v1482
    %v1842 = vunpack.c.l.b16 %v1483
    %v1843 = vunpack.c.l.b16 %v1484
    %v1844 = vunpack.c.h.b16 %v1484
    %v1845 = vunpack.c.l.b16 %v1485
    %v1846 = vunpack.c.l.b16 %v1486
    %v1847 = vunpack.c.h.b16 %v1486
    %v1848 = vunpack.c.l.b16 %v1487
    %v1849 = vunpack.c.l.b16 %v1488
    %v1850 = vunpack.c.h.b16 %v1488
    %v1851 = vunpack.c.l.b16 %v1489
    %v1852 = vunpack.c.l.b16 %v1490
    %v1853 = vunpack.c.h.b16 %v1490
    %v1854 = vunpack.c.l.b16 %v1491
    %v1855 = vunpack.c.l.b16 %v1492
    %v1856 = vunpack.c.h.b16 %v1492
    %v1857 = vunpack.c.l.b16 %v1493
    %v1858 = vunpack.c.l.b16 %v1494
    %v1859 = vunpack.c.h.b16 %v1494
    %v1860 = vunpack.c.l.b16 %v1495
    %v1861 = vunpack.c.l.b16 %v1496
    %v1862 = vunpack.c.h.b16 %v1496
    %v1863 = vunpack.c.l.b16 %v1497
    %v1864 = vunpack.c.l.b16 %v1498
    %v1865 = vunpack.c.h.b16 %v1498
    %v1866 = vunpack.c.l.b16 %v1499
    %v1867 = vunpack.c.l.b16 %v1500
    %v1868 = vunpack.c.h.b16 %v1500
    %v1869 = vunpack.c.l.b16 %v1501
    %v1870 = vunpack.c.l.b16 %v1502
    %v1871 = vunpack.c.h.b16 %v1502
    %v1872 = vunpack.c.l.b16 %v1503
    %v1873 = vunpack.c.l.b16 %v1504
    %v1874 = vunpack.c.h.b16 %v1504
    %v1875 = vunpack.c.l.b16 %v1505
    %v1876 = vunpack.c.l.b16 %v1506
    %v1877 = vunpack.c.h.b16 %v1506
    %v1878 = vunpack.c.l.b16 %v1507
    %v1879 = vunpack.c.l.b16 %v1508
    %v1880 = vunpack.c.h.b16 %v1508
    %v1881 = vunpack.c.l.b16 %v1509
    %v1882 = vunpack.c.l.b16 %v1510
    %v1883 = vunpack.c.h.b16 %v1510
    %v1884 = vunpack.c.l.b16 %v1511
    %v1885 = vunpack.c.l.b16 %v1512
    %v1886 = vunpack.c.h.b16 %v1512
    %v1887 = vunpack.c.l.b16 %v1513
    %v1888 = vunpack.c.l.b16 %v1514
    %v1889 = vunpack.c.h.b16 %v1514
    %v1890 = vunpack.c.l.b16 %v1515
    %v1891 = vunpack.c.l.b16 %v1516
    %v1892 = vunpack.c.h.b16 %v1516
    %v1893 = vunpack.c.l.b16 %v1517
    %v1894 = vunpack.c.l.b16 %v1518
    %v1895 = vunpack.c.h.b16 %v1518
    %v1896 = vunpack.c.l.b16 %v1519
    %v1897 = vunpack.c.l.b16 %v1520
    %v1898 = vunpack.c.h.b16 %v1520
    %v1899 = vunpack.c.l.b16 %v1521
    %v1900 = vunpack.c.l.b16 %v1522
    %v1901 = vunpack.c.h.b16 %v1522
    %v1902 = vunpack.c.l.b16 %v1523
    %v1903 = vunpack.c.l.b16 %v1524
    %v1904 = vunpack.c.h.b16 %v1524
    %v1905 = vunpack.c.l.b16 %v1525
    %v1906 = vunpack.c.l.b16 %v1526
    %v1907 = vunpack.c.h.b16 %v1526
    %v1908 = vunpack.c.l.b16 %v1527
    %v1909 = vunpack.c.l.b16 %v1528
    %v1910 = vunpack.c.h.b16 %v1528
    %v1911 = vunpack.c.l.b16 %v1529
    %v1912 = vunpack.c.l.b16 %v1530
    %v1913 = vunpack.c.h.b16 %v1530
    %v1914 = vunpack.c.l.b16 %v1531
    %v1915 = vunpack.c.l.b16 %v1532
    %v1916 = vunpack.c.h.b16 %v1532
    %v1917 = vunpack.c.l.b16 %v1533
    %v1918 = vunpack.c.l.b16 %v1534
    %v1919 = vunpack.c.h.b16 %v1534
    %v1920 = vunpack.c.l.b16 %v1535
    %v1921 = vunpack.c.l.b16 %v1536
    %v1922 = vunpack.c.h.b16 %v1536
    %v1923 = vunpack.c.l.b16 %v1537
    %v1924 = vunpack.c.l.b16 %v1538
    %v1925 = vunpack.c.h.b16 %v1538
    %v1926 = vunpack.c.l.b16 %v1539
    %v1927 = vunpack.c.l.b16 %v1540
    %v1928 = vunpack.c.h.b16 %v1540
    %v1929 = vunpack.c.l.b16 %v1541
    %v1930 = vunpack.c.l.b16 %v1542
    %v1931 = vunpack.c.h.b16 %v1542
    %v1932 = vunpack.c.l.b16 %v1543
    %v1933 = vunpack.c.l.b16 %v1544
    %v1934 = vunpack.c.h.b16 %v1544
    %v1935 = vunpack.c.l.b16 %v1545
    %v1936 = vunpack.c.l.b16 %v1546
    %v1937 = vunpack.c.h.b16 %v1546
    %v1938 = vunpack.c.l.b16 %v1547
    %v1939 = vunpack.c.l.b16 %v1548
    %v1940 = vunpack.c.h.b16 %v1548
    %v1941 = vunpack.c.l.b16 %v1549
    %v1942 = vunpack.c.l.b16 %v1550
    %v1943 = vunpack.c.h.b16 %v1550
    %v1944 = vunpack.c.l.b16 %v1551
    %v1945 = vunpack.c.l.b16 %v1552
    %v1946 = vunpack.c.h.b16 %v1552
    %v1947 = vunpack.c.l.b16 %v1553
    %v1948 = vunpack.c.l.b16 %v1554
    %v1949 = vunpack.c.h.b16 %v1554
    %v1950 = vunpack.c.l.b16 %v1555
    %v1951 = vunpack.c.l.b16 %v1556
    %v1952 = vunpack.c.h.b16 %v1556
    %v1953 = vunpack.c.l.b16 %v1557
    %v1954 = vunpack.c.l.b16 %v1558
    %v1955 = vunpack.c.h.b16 %v1558
    %v1956 = vunpack.c.l.b16 %v1559
    %v1957 = vunpack.c.l.b16 %v1560
    %v1958 = vunpack.c.h.b16 %v1560
    %v1959 = vunpack.c.l.b16 %v1561
    %v1960 = vunpack.c.l.b16 %v1562
    %v1961 = vunpack.c.h.b16 %v1562
    %v1962 = vunpack.c.l.b16 %v1563
    %v1963 = vunpack.c.l.b16 %v1564
    %v1964 = vunpack.c.h.b16 %v1564
    %v1965 = vunpack.c.l.b16 %v1565
    %v1966 = vunpack.c.l.b16 %v1566
    %v1967 = vunpack.c.h.b16 %v1566
    %v1968 = vunpack.c.l.b16 %v1567
    %v1969 = vunpack.c.l.b16 %v1568
    %v1970 = vunpack.c.h.b16 %v1568
    %v1971 = vunpack.c.l.b16 %v1569
    %v1972 = vunpack.c.l.b16 %v1570
    %v1973 = vunpack.c.h.b16 %v1570
    %v1974 = vunpack.c.l.b16 %v1571
    %v1975 = vunpack.c.l.b16 %v1572
    %v1976 = vunpack.c.h.b16 %v1572
    %v1977 = vunpack.c.l.b16 %v1573
    %v1978 = vunpack.c.l.b16 %v1574
    %v1979 = vunpack.c.h.b16 %v1574
    %v1980 = vunpack.c.l.b16 %v1575
    %v1981 = vunpack.c.l.b16 %v1576
    %v1982 = vunpack.c.h.b16 %v1576
    %v1983 = vunpack.c.l.b16 %v1577
    %v1984 = vunpack.c.l.b16 %v1578
    %v1985 = vunpack.c.h.b16 %v1578
    %v1986 = vunpack.c.l.b16 %v1579
    %v1987 = vunpack.c.l.b16 %v1580
    %v1988 = vunpack.c.h.b16 %v1580
    %v1989 = vunpack.c.l.b16 %v1581
    %v1990 = vunpack.c.l.b16 %v1582
    %v1991 = vunpack.c.h.b16 %v1582
    %v1992 = vunpack.c.l.b16 %v1583
    %v1993 = vpack.c.b16 %v1756, %v1753
    %v1994 = vpack.c.b16 %v1757, %v1754
    %v1995 = vpack.c.b16 %v1758, %v1755
    %v1996 = vpack.c.b16 %v1762, %v1759
    %v1997 = vpack.c.b16 %v1763, %v1760
    %v1998 = vpack.c.b16 %v1764, %v1761
    %v1999 = vpack.c.b16 %v1768, %v1765
    %v2000 = vpack.c.b16 %v1769, %v1766
    %v2001 = vpack.c.b16 %v1770, %v1767
    %v2002 = vpack.c.b16 %v1774, %v1771
    %v2003 = vpack.c.b16 %v1775, %v1772
    %v2004 = vpack.c.b16 %v1776, %v1773
    %v2005 = vpack.c.b16 %v1780, %v1777
    %v2006 = vpack.c.b16 %v1781, %v1778
    %v2007 = vpack.c.b16 %v1782, %v1779
    %v2008 = vpack.c.b16 %v1786, %v1783
    %v2009 = vpack.c.b16 %v1787, %v1784
    %v2010 = vpack.c.b16 %v1788, %v1785
    %v2011 = vpack.c.b16 %v1792, %v1789
    %v2012 = vpack.c.b16 %v1793, %v1790
    %v2013 = vpack.c.b16 %v1794, %v1791
    %v2014 = vpack.c.b16 %v1798, %v1795
    %v2015 = vpack.c.b16 %v1799, %v1796
    %v2016 = vpack.c.b16 %v1800, %v1797
    %v2017 = vpack.c.b16 %v1804, %v1801
    %v2018 = vpack.c.b16 %v1805, %v1802
    %v2019 = vpack.c.b16 %v1806, %v1803
    %v2020 = vpack.c.b16 %v1810, %v1807
    %v2021 = vpack.c.b16 %v1811, %v1808
    %v2022 = vpack.c.b16 %v1812, %v1809
    %v2023 = vpack.c.b16 %v1816, %v1813
    %v2024 = vpack.c.b16 %v1817, %v1814
    %v2025 = vpack.c.b16 %v1818, %v1815
    %v2026 = vpack.c.b16 %v1822, %v1819
    %v2027 = vpack.c.b16 %v1823, %v1820
    %v2028 = vpack.c.b16 %v1824, %v1821
    %v2029 = vpack.c.b16 %v1828, %v1825
    %v2030 = vpack.c.b16 %v1829, %v1826
    %v2031 = vpack.c.b16 %v1830, %v1827
    %v2032 = vpack.c.b16 %v1834, %v1831
    %v2033 = vpack.c.b16 %v1835, %v1832
    %v2034 = vpack.c.b16 %v1836, %v1833
    %v2035 = vpack.c.b16 %v1840, %v1837
    %v2036 = vpack.c.b16 %v1841, %v1838
    %v2037 = vpack.c.b16 %v1842, %v1839
    %v2038 = vpack.c.b16 %v1846, %v1843
    %v2039 = vpack.c.b16 %v1847, %v1844
    %v2040 = vpack.c.b16 %v1848, %v1845
    %v2041 = vpack.c.b16 %v1852, %v1849
    %v2042 = vpack.c.b16 %v1853, %v1850
    %v2043 = vpack.c.b16 %v1854, %v1851
    %v2044 = vpack.c.b16 %v1858, %v1855
    %v2045 = vpack.c.b16 %v1859, %v1856
    %v2046 = vpack.c.b16 %v1860, %v1857
    %v2047 = vpack.c.b16 %v1864, %v1861
    %v2048 = vpack.c.b16 %v1865, %v1862
    %v2049 = vpack.c.b16 %v1866, %v1863
    %v2050 = vpack.c.b16 %v1870, %v1867
    %v2051 = vpack.c.b16 %v1871, %v1868
    %v2052 = vpack.c.b16 %v1872, %v1869
    %v2053 = vpack.c.b16 %v1876, %v1873
    %v2054 = vpack.c.b16 %v1877, %v1874
    %v2055 = vpack.c.b16 %v1878, %v1875
    %v2056 = vpack.c.b16 %v1882, %v1879
    %v2057 = vpack.c.b16 %v1883, %v1880
    %v2058 = vpack.c.b16 %v1884, %v1881
    %v2059 = vpack.c.b16 %v1888, %v1885
    %v2060 = vpack.c.b16 %v1889, %v1886
    %v2061 = vpack.c.b16 %v1890, %v1887
    %v2062 = vpack.c.b16 %v1894, %v1891
    %v2063 = vpack.c.b16 %v1895, %v1892
    %v2064 = vpack.c.b16 %v1896, %v1893
    %v2065 = vpack.c.b16 %v1900, %v1897
    %v2066 = vpack.c.b16 %v1901, %v1898
    %v2067 = vpack.c.b16 %v1902, %v1899
    %v2068 = vpack.c.b16 %v1906, %v1903
    %v2069 = vpack.c.b16 %v1907, %v1904
    %v2070 = vpack.c.b16 %v1908, %v1905
    %v2071 = vpack.c.b16 %v1912, %v1909
    %v2072 = vpack.c.b16 %v1913, %v1910
    %v2073 = vpack.c.b16 %v1914, %v1911
    %v2074 = vpack.c.b16 %v1918, %v1915
    %v2075 = vpack.c.b16 %v1919, %v1916
    %v2076 = vpack.c.b16 %v1920, %v1917
    %v2077 = vpack.c.b16 %v1924, %v1921
    %v2078 = vpack.c.b16 %v1925, %v1922
    %v2079 = vpack.c.b16 %v1926, %v1923
    %v2080 = vpack.c.b16 %v1930, %v1927
    %v2081 = vpack.c.b16 %v1931, %v1928
    %v2082 = vpack.c.b16 %v1932, %v1929
    %v2083 = vpack.c.b16 %v1936, %v1933
    %v2084 = vpack.c.b16 %v1937, %v1934
    %v2085 = vpack.c.b16 %v1938, %v1935
    %v2086 = vpack.c.b16 %v1942, %v1939
    %v2087 = vpack.c.b16 %v1943, %v1940
    %v2088 = vpack.c.b16 %v1944, %v1941
    %v2089 = vpack.c.b16 %v1948, %v1945
    %v2090 = vpack.c.b16 %v1949, %v1946
    %v2091 = vpack.c.b16 %v1950, %v1947
    %v2092 = vpack.c.b16 %v1954, %v1951
    %v2093 = vpack.c.b16 %v1955, %v1952
    %v2094 = vpack.c.b16 %v1956, %v1953
    %v2095 = vpack.c.b16 %v1960, %v1957
    %v2096 = vpack.c.b16 %v1961, %v1958
    %v2097 = vpack.c.b16 %v1962, %v1959
    %v2098 = vpack.c.b16 %v1966, %v1963
    %v2099 = vpack.c.b16 %v1967, %v1964
    %v2100 = vpack.c.b16 %v1968, %v1965
    %v2101 = vpack.c.b16 %v1972, %v1969
    %v2102 = vpack.c.b16 %v1973, %v1970
    %v2103 = vpack.c.b16 %v1974, %v1971
    %v2104 = vpack.c.b16 %v1978, %v1975
    %v2105 = vpack.c.b16 %v1979, %v1976
    %v2106 = vpack.c.b16 %v1980, %v1977
    %v2107 = vpack.c.b16 %v1984, %v1981
    %v2108 = vpack.c.b16 %v1985, %v1982
    %v2109 = vpack.c.b16 %v1986, %v1983
    %v2110 = vpack.c.b16 %v1990, %v1987
    %v2111 = vpack.c.b16 %v1991, %v1988
    %v2112 = vpack.c.b16 %v1992, %v1989
    %2233 = vmatpush.bf16.msra.mxu0 %v2014
    %2234 = vmatpush.bf16.msra.mxu0 %v2011
    %2235 = vmatpush.bf16.msra.mxu0 %v2008
    %2236 = vmatpush.bf16.msra.mxu0 %v2005
    %2237 = vmatpush.bf16.msra.mxu0 %v2002
    %2238 = vmatpush.bf16.msra.mxu0 %v1999
    %2239 = vmatpush.bf16.msra.mxu0 %v1996
    %2240 = vmatpush.bf16.msra.mxu0 %v1993
    %2241 = vmatmul.bf16.gmra.mxu0 %v1419
    %v2242 = vpop.f32.mrf.mxu0
    %v2243 = vadd.f32 %v1587, %v2242
    %v2244 = vpop.f32.mrf.mxu0
    %2245 = vdwg.mxu0
    %2246 = vmatpush.bf16.msra.mxu0 %v2038
    %2247 = vmatpush.bf16.msra.mxu0 %v2035
    %2248 = vmatpush.bf16.msra.mxu0 %v2032
    %2249 = vmatpush.bf16.msra.mxu0 %v2029
    %2250 = vmatpush.bf16.msra.mxu0 %v2026
    %2251 = vmatpush.bf16.msra.mxu0 %v2023
    %2252 = vmatpush.bf16.msra.mxu0 %v2020
    %2253 = vmatpush.bf16.msra.mxu0 %v2017
    %2254 = vmatmul.bf16.gmra.mxu0 %v1420
    %v2255 = vpop.f32.mrf.mxu0
    %v2256 = vadd.f32 %v2243, %v2255
    %v2257 = vpop.f32.mrf.mxu0
    %2258 = vdwg.mxu0
    %2259 = vmatpush.bf16.msra.mxu0 %v2062
    %2260 = vmatpush.bf16.msra.mxu0 %v2059
    %2261 = vmatpush.bf16.msra.mxu0 %v2056
    %2262 = vmatpush.bf16.msra.mxu0 %v2053
    %2263 = vmatpush.bf16.msra.mxu0 %v2050
    %2264 = vmatpush.bf16.msra.mxu0 %v2047
    %2265 = vmatpush.bf16.msra.mxu0 %v2044
    %2266 = vmatpush.bf16.msra.mxu0 %v2041
    %2267 = vmatmul.bf16.gmra.mxu0 %v1421
    %v2268 = vpop.f32.mrf.mxu0
    %v2269 = vadd.f32 %v2256, %v2268
    %v2270 = vpop.f32.mrf.mxu0
    %2271 = vdwg.mxu0
    %2272 = vmatpush.bf16.msra.mxu0 %v2086
    %2273 = vmatpush.bf16.msra.mxu0 %v2083
    %2274 = vmatpush.bf16.msra.mxu0 %v2080
    %2275 = vmatpush.bf16.msra.mxu0 %v2077
    %2276 = vmatpush.bf16.msra.mxu0 %v2074
    %2277 = vmatpush.bf16.msra.mxu0 %v2071
    %2278 = vmatpush.bf16.msra.mxu0 %v2068
    %2279 = vmatpush.bf16.msra.mxu0 %v2065
    %2280 = vmatmul.bf16.gmra.mxu0 %v1422
    %v2281 = vpop.f32.mrf.mxu0
    %v2282 = vadd.f32 %v2269, %v2281
    %v2283 = vpop.f32.mrf.mxu0
    %2284 = vdwg.mxu0
    %2285 = vmatpush.bf16.msra.mxu0 %v2110
    %2286 = vmatpush.bf16.msra.mxu0 %v2107
    %2287 = vmatpush.bf16.msra.mxu0 %v2104
    %2288 = vmatpush.bf16.msra.mxu0 %v2101
    %2289 = vmatpush.bf16.msra.mxu0 %v2098
    %2290 = vmatpush.bf16.msra.mxu0 %v2095
    %2291 = vmatpush.bf16.msra.mxu0 %v2092
    %2292 = vmatpush.bf16.msra.mxu0 %v2089
    %2293 = vmatmul.bf16.gmra.mxu0 %v1423
    %v2294 = vpop.f32.mrf.mxu0
    %v2295 = vadd.f32 %v2282, %v2294
    %v2296 = vpop.f32.mrf.mxu0
    %2297 = vdwg.mxu0
    %2298 = vmatpush.bf16.msra.mxu0 %v2015
    %2299 = vmatpush.bf16.msra.mxu0 %v2012
    %2300 = vmatpush.bf16.msra.mxu0 %v2009
    %2301 = vmatpush.bf16.msra.mxu0 %v2006
    %2302 = vmatpush.bf16.msra.mxu0 %v2003
    %2303 = vmatpush.bf16.msra.mxu0 %v2000
    %2304 = vmatpush.bf16.msra.mxu0 %v1997
    %2305 = vmatpush.bf16.msra.mxu0 %v1994
    %2306 = vmatmul.bf16.gmra.mxu0 %v1419
    %v2307 = vpop.f32.mrf.mxu0
    %v2308 = vadd.f32 %v1588, %v2307
    %v2309 = vpop.f32.mrf.mxu0
    %2310 = vdwg.mxu0
    %2311 = vmatpush.bf16.msra.mxu0 %v2039
    %2312 = vmatpush.bf16.msra.mxu0 %v2036
    %2313 = vmatpush.bf16.msra.mxu0 %v2033
    %2314 = vmatpush.bf16.msra.mxu0 %v2030
    %2315 = vmatpush.bf16.msra.mxu0 %v2027
    %2316 = vmatpush.bf16.msra.mxu0 %v2024
    %2317 = vmatpush.bf16.msra.mxu0 %v2021
    %2318 = vmatpush.bf16.msra.mxu0 %v2018
    %2319 = vmatmul.bf16.gmra.mxu0 %v1420
    %v2320 = vpop.f32.mrf.mxu0
    %v2321 = vadd.f32 %v2308, %v2320
    %v2322 = vpop.f32.mrf.mxu0
    %2323 = vdwg.mxu0
    %2324 = vmatpush.bf16.msra.mxu0 %v2063
    %2325 = vmatpush.bf16.msra.mxu0 %v2060
    %2326 = vmatpush.bf16.msra.mxu0 %v2057
    %2327 = vmatpush.bf16.msra.mxu0 %v2054
    %2328 = vmatpush.bf16.msra.mxu0 %v2051
    %2329 = vmatpush.bf16.msra.mxu0 %v2048
    %2330 = vmatpush.bf16.msra.mxu0 %v2045
    %2331 = vmatpush.bf16.msra.mxu0 %v2042
    %2332 = vmatmul.bf16.gmra.mxu0 %v1421
    %v2333 = vpop.f32.mrf.mxu0
    %v2334 = vadd.f32 %v2321, %v2333
    %v2335 = vpop.f32.mrf.mxu0
    %2336 = vdwg.mxu0
    %2337 = vmatpush.bf16.msra.mxu0 %v2087
    %2338 = vmatpush.bf16.msra.mxu0 %v2084
    %2339 = vmatpush.bf16.msra.mxu0 %v2081
    %2340 = vmatpush.bf16.msra.mxu0 %v2078
    %2341 = vmatpush.bf16.msra.mxu0 %v2075
    %2342 = vmatpush.bf16.msra.mxu0 %v2072
    %2343 = vmatpush.bf16.msra.mxu0 %v2069
    %2344 = vmatpush.bf16.msra.mxu0 %v2066
    %2345 = vmatmul.bf16.gmra.mxu0 %v1422
    %v2346 = vpop.f32.mrf.mxu0
    %v2347 = vadd.f32 %v2334, %v2346
    %v2348 = vpop.f32.mrf.mxu0
    %2349 = vdwg.mxu0
    %2350 = vmatpush.bf16.msra.mxu0 %v2111
    %2351 = vmatpush.bf16.msra.mxu0 %v2108
    %2352 = vmatpush.bf16.msra.mxu0 %v2105
    %2353 = vmatpush.bf16.msra.mxu0 %v2102
    %2354 = vmatpush.bf16.msra.mxu0 %v2099
    %2355 = vmatpush.bf16.msra.mxu0 %v2096
    %2356 = vmatpush.bf16.msra.mxu0 %v2093
    %2357 = vmatpush.bf16.msra.mxu0 %v2090
    %2358 = vmatmul.bf16.gmra.mxu0 %v1423
    %v2359 = vpop.f32.mrf.mxu0
    %v2360 = vadd.f32 %v2347, %v2359
    %v2361 = vpop.f32.mrf.mxu0
    %2362 = vdwg.mxu0
    %2363 = vmatpush.bf16.msra.mxu0 %v2016
    %2364 = vmatpush.bf16.msra.mxu0 %v2013
    %2365 = vmatpush.bf16.msra.mxu0 %v2010
    %2366 = vmatpush.bf16.msra.mxu0 %v2007
    %2367 = vmatpush.bf16.msra.mxu0 %v2004
    %2368 = vmatpush.bf16.msra.mxu0 %v2001
    %2369 = vmatpush.bf16.msra.mxu0 %v1998
    %2370 = vmatpush.bf16.msra.mxu0 %v1995
    %2371 = vmatmul.bf16.gmra.mxu0 %v1419
    %v2372 = vpop.f32.mrf.mxu0
    %v2373 = vadd.f32 %v1589, %v2372
    %v2374 = vpop.f32.mrf.mxu0
    %2375 = vdwg.mxu0
    %2376 = vmatpush.bf16.msra.mxu0 %v2040
    %2377 = vmatpush.bf16.msra.mxu0 %v2037
    %2378 = vmatpush.bf16.msra.mxu0 %v2034
    %2379 = vmatpush.bf16.msra.mxu0 %v2031
    %2380 = vmatpush.bf16.msra.mxu0 %v2028
    %2381 = vmatpush.bf16.msra.mxu0 %v2025
    %2382 = vmatpush.bf16.msra.mxu0 %v2022
    %2383 = vmatpush.bf16.msra.mxu0 %v2019
    %2384 = vmatmul.bf16.gmra.mxu0 %v1420
    %v2385 = vpop.f32.mrf.mxu0
    %v2386 = vadd.f32 %v2373, %v2385
    %v2387 = vpop.f32.mrf.mxu0
    %2388 = vdwg.mxu0
    %2389 = vmatpush.bf16.msra.mxu0 %v2064
    %2390 = vmatpush.bf16.msra.mxu0 %v2061
    %2391 = vmatpush.bf16.msra.mxu0 %v2058
    %2392 = vmatpush.bf16.msra.mxu0 %v2055
    %2393 = vmatpush.bf16.msra.mxu0 %v2052
    %2394 = vmatpush.bf16.msra.mxu0 %v2049
    %2395 = vmatpush.bf16.msra.mxu0 %v2046
    %2396 = vmatpush.bf16.msra.mxu0 %v2043
    %2397 = vmatmul.bf16.gmra.mxu0 %v1421
    %v2398 = vpop.f32.mrf.mxu0
    %v2399 = vadd.f32 %v2386, %v2398
    %v2400 = vpop.f32.mrf.mxu0
    %2401 = vdwg.mxu0
    %2402 = vmatpush.bf16.msra.mxu0 %v2088
    %2403 = vmatpush.bf16.msra.mxu0 %v2085
    %2404 = vmatpush.bf16.msra.mxu0 %v2082
    %2405 = vmatpush.bf16.msra.mxu0 %v2079
    %2406 = vmatpush.bf16.msra.mxu0 %v2076
    %2407 = vmatpush.bf16.msra.mxu0 %v2073
    %2408 = vmatpush.bf16.msra.mxu0 %v2070
    %2409 = vmatpush.bf16.msra.mxu0 %v2067
    %2410 = vmatmul.bf16.gmra.mxu0 %v1422
    %v2411 = vpop.f32.mrf.mxu0
    %v2412 = vadd.f32 %v2399, %v2411
    %v2413 = vpop.f32.mrf.mxu0
    %2414 = vdwg.mxu0
    %2415 = vmatpush.bf16.msra.mxu0 %v2112
    %2416 = vmatpush.bf16.msra.mxu0 %v2109
    %2417 = vmatpush.bf16.msra.mxu0 %v2106
    %2418 = vmatpush.bf16.msra.mxu0 %v2103
    %2419 = vmatpush.bf16.msra.mxu0 %v2100
    %2420 = vmatpush.bf16.msra.mxu0 %v2097
    %2421 = vmatpush.bf16.msra.mxu0 %v2094
    %2422 = vmatpush.bf16.msra.mxu0 %v2091
    %2423 = vmatmul.bf16.gmra.mxu0 %v1423
    %v2424 = vpop.f32.mrf.mxu0
    %v2425 = vadd.f32 %v2412, %v2424
    %v2426 = vpop.f32.mrf.mxu0
    %2427 = vdwg.mxu0
    %v2428 = vmul.f32 %v2295, 0.01
    %v2429 = vmul.f32 %v2360, 0.01
    %v2430 = vmul.f32 %v2425, 0.01
    %v2431 = vmax.f32 %v2295, %v2428
    %v2432 = vmax.f32 %v2360, %v2429
    %v2433 = vmax.f32 %v2425, %v2430
    %v2434 = vpack.c.bf16 %v2431, %v2431
    %v2435 = vpack.c.bf16 %v2432, %v2432
    %v2436 = vpack.c.bf16 %v2433, %v2433
    %v2437 = vld [vmem:[#allocation11] sm:$0xf]
    %v2438 = vld [vmem:[#allocation11 + $0x4] sm:$0xf]
    %v2439 = vld [vmem:[#allocation11 + $0x8] sm:$0xf]
    %v2440 = vld [vmem:[#allocation11 + $0xc] sm:$0xf]
    %v2441 = vld [vmem:[#allocation11 + $0x10] sm:$0xf]
    %v2442 = vld [vmem:[#allocation11 + $0x14] sm:$0xf]
    %v2443 = vld [vmem:[#allocation11 + $0x18] sm:$0xf]
    %v2444 = vld [vmem:[#allocation11 + $0x1c] sm:$0xf]
    %v2445 = vld [vmem:[#allocation11 + $0x20] sm:$0xf]
    %v2446 = vld [vmem:[#allocation11 + $0x24] sm:$0xf]
    %v2447 = vld [vmem:[#allocation11 + $0x28] sm:$0xf]
    %v2448 = vld [vmem:[#allocation11 + $0x2c] sm:$0xf]
    %v2449 = vld [vmem:[#allocation11 + $0x30] sm:$0xf]
    %v2450 = vld [vmem:[#allocation11 + $0x34] sm:$0xf]
    %v2451 = vld [vmem:[#allocation11 + $0x38] sm:$0xf]
    %v2452 = vld [vmem:[#allocation11 + $0x3c] sm:$0xf]
    %v2453 = vld [vmem:[#allocation11 + $0x40] sm:$0xf]
    %v2454 = vld [vmem:[#allocation11 + $0x44] sm:$0xf]
    %v2455 = vld [vmem:[#allocation11 + $0x48] sm:$0xf]
    %v2456 = vld [vmem:[#allocation11 + $0x4c] sm:$0xf]
    %v2457 = vld [vmem:[#allocation11 + $0x50] sm:$0xf]
    %v2458 = vld [vmem:[#allocation11 + $0x54] sm:$0xf]
    %v2459 = vld [vmem:[#allocation11 + $0x58] sm:$0xf]
    %v2460 = vld [vmem:[#allocation11 + $0x5c] sm:$0xf]
    %v2461 = vld [vmem:[#allocation11 + $0x60] sm:$0xf]
    %v2462 = vld [vmem:[#allocation11 + $0x64] sm:$0xf]
    %v2463 = vld [vmem:[#allocation11 + $0x68] sm:$0xf]
    %v2464 = vld [vmem:[#allocation11 + $0x6c] sm:$0xf]
    %v2465 = vld [vmem:[#allocation11 + $0x70] sm:$0xf]
    %v2466 = vld [vmem:[#allocation11 + $0x74] sm:$0xf]
    %v2467 = vld [vmem:[#allocation11 + $0x78] sm:$0xf]
    %v2468 = vld [vmem:[#allocation11 + $0x7c] sm:$0xf]
    %v2469 = vld [vmem:[#allocation11 + $0x80] sm:$0xf]
    %v2470 = vld [vmem:[#allocation11 + $0x84] sm:$0xf]
    %v2471 = vld [vmem:[#allocation11 + $0x88] sm:$0xf]
    %v2472 = vld [vmem:[#allocation11 + $0x8c] sm:$0xf]
    %v2473 = vld [vmem:[#allocation11 + $0x90] sm:$0xf]
    %v2474 = vld [vmem:[#allocation11 + $0x94] sm:$0xf]
    %v2475 = vld [vmem:[#allocation11 + $0x98] sm:$0xf]
    %v2476 = vld [vmem:[#allocation11 + $0x9c] sm:$0xf]
    %v2477 = vld [vmem:[#allocation11 + $0xa0] sm:$0xf]
    %v2478 = vld [vmem:[#allocation11 + $0xa4] sm:$0xf]
    %v2479 = vld [vmem:[#allocation11 + $0xa8] sm:$0xf]
    %v2480 = vld [vmem:[#allocation11 + $0xac] sm:$0xf]
    %v2481 = vld [vmem:[#allocation11 + $0xb0] sm:$0xf]
    %v2482 = vld [vmem:[#allocation11 + $0xb4] sm:$0xf]
    %v2483 = vld [vmem:[#allocation11 + $0xb8] sm:$0xf]
    %v2484 = vld [vmem:[#allocation11 + $0xbc] sm:$0xf]
    %v2485 = vld [vmem:[#allocation13 + $0x4] ss:$0 sm:$0xff]
    %v2534 = vunpack.c.l.b16 %v2437
    %v2535 = vunpack.c.l.b16 %v2438
    %v2536 = vunpack.c.l.b16 %v2439
    %v2537 = vunpack.c.l.b16 %v2440
    %v2538 = vunpack.c.l.b16 %v2441
    %v2539 = vunpack.c.l.b16 %v2442
    %v2540 = vunpack.c.l.b16 %v2443
    %v2541 = vunpack.c.l.b16 %v2444
    %v2542 = vunpack.c.l.b16 %v2445
    %v2543 = vunpack.c.l.b16 %v2446
    %v2544 = vunpack.c.l.b16 %v2447
    %v2545 = vunpack.c.l.b16 %v2448
    %v2546 = vunpack.c.l.b16 %v2449
    %v2547 = vunpack.c.l.b16 %v2450
    %v2548 = vunpack.c.l.b16 %v2451
    %v2549 = vunpack.c.l.b16 %v2452
    %v2550 = vunpack.c.l.b16 %v2453
    %v2551 = vunpack.c.l.b16 %v2454
    %v2552 = vunpack.c.l.b16 %v2455
    %v2553 = vunpack.c.l.b16 %v2456
    %v2554 = vunpack.c.l.b16 %v2457
    %v2555 = vunpack.c.l.b16 %v2458
    %v2556 = vunpack.c.l.b16 %v2459
    %v2557 = vunpack.c.l.b16 %v2460
    %v2558 = vunpack.c.l.b16 %v2461
    %v2559 = vunpack.c.l.b16 %v2462
    %v2560 = vunpack.c.l.b16 %v2463
    %v2561 = vunpack.c.l.b16 %v2464
    %v2562 = vunpack.c.l.b16 %v2465
    %v2563 = vunpack.c.l.b16 %v2466
    %v2564 = vunpack.c.l.b16 %v2467
    %v2565 = vunpack.c.l.b16 %v2468
    %v2566 = vunpack.c.l.b16 %v2469
    %v2567 = vunpack.c.l.b16 %v2470
    %v2568 = vunpack.c.l.b16 %v2471
    %v2569 = vunpack.c.l.b16 %v2472
    %v2570 = vunpack.c.l.b16 %v2473
    %v2571 = vunpack.c.l.b16 %v2474
    %v2572 = vunpack.c.l.b16 %v2475
    %v2573 = vunpack.c.l.b16 %v2476
    %v2574 = vunpack.c.l.b16 %v2477
    %v2575 = vunpack.c.l.b16 %v2478
    %v2576 = vunpack.c.l.b16 %v2479
    %v2577 = vunpack.c.l.b16 %v2480
    %v2578 = vunpack.c.l.b16 %v2481
    %v2579 = vunpack.c.l.b16 %v2482
    %v2580 = vunpack.c.l.b16 %v2483
    %v2581 = vunpack.c.l.b16 %v2484
    %v2582 = vpack.c.b16 %v2535, %v2534
    %v2583 = vpack.c.b16 %v2537, %v2536
    %v2584 = vpack.c.b16 %v2539, %v2538
    %v2585 = vpack.c.b16 %v2541, %v2540
    %v2586 = vpack.c.b16 %v2543, %v2542
    %v2587 = vpack.c.b16 %v2545, %v2544
    %v2588 = vpack.c.b16 %v2547, %v2546
    %v2589 = vpack.c.b16 %v2549, %v2548
    %v2590 = vpack.c.b16 %v2551, %v2550
    %v2591 = vpack.c.b16 %v2553, %v2552
    %v2592 = vpack.c.b16 %v2555, %v2554
    %v2593 = vpack.c.b16 %v2557, %v2556
    %v2594 = vpack.c.b16 %v2559, %v2558
    %v2595 = vpack.c.b16 %v2561, %v2560
    %v2596 = vpack.c.b16 %v2563, %v2562
    %v2597 = vpack.c.b16 %v2565, %v2564
    %v2598 = vpack.c.b16 %v2567, %v2566
    %v2599 = vpack.c.b16 %v2569, %v2568
    %v2600 = vpack.c.b16 %v2571, %v2570
    %v2601 = vpack.c.b16 %v2573, %v2572
    %v2602 = vpack.c.b16 %v2575, %v2574
    %v2603 = vpack.c.b16 %v2577, %v2576
    %v2604 = vpack.c.b16 %v2579, %v2578
    %v2605 = vpack.c.b16 %v2581, %v2580
    %2630 = vmatpush.bf16.msra.mxu0 %v2589
    %2631 = vmatpush.bf16.msra.mxu0 %v2588
    %2632 = vmatpush.bf16.msra.mxu0 %v2587
    %2633 = vmatpush.bf16.msra.mxu0 %v2586
    %2634 = vmatpush.bf16.msra.mxu0 %v2585
    %2635 = vmatpush.bf16.msra.mxu0 %v2584
    %2636 = vmatpush.bf16.msra.mxu0 %v2583
    %2637 = vmatpush.bf16.msra.mxu0 %v2582
    %2638 = vmatmul.bf16.gmra.mxu0 %v2434
    %v2639 = vpop.f32.mrf.mxu0
    %v2640 = vadd.f32 %v2485, %v2639
    %v2641 = vpop.f32.mrf.mxu0
    %2642 = vdwg.mxu0
    %2643 = vmatpush.bf16.msra.mxu0 %v2597
    %2644 = vmatpush.bf16.msra.mxu0 %v2596
    %2645 = vmatpush.bf16.msra.mxu0 %v2595
    %2646 = vmatpush.bf16.msra.mxu0 %v2594
    %2647 = vmatpush.bf16.msra.mxu0 %v2593
    %2648 = vmatpush.bf16.msra.mxu0 %v2592
    %2649 = vmatpush.bf16.msra.mxu0 %v2591
    %2650 = vmatpush.bf16.msra.mxu0 %v2590
    %2651 = vmatmul.bf16.gmra.mxu0 %v2435
    %v2652 = vpop.f32.mrf.mxu0
    %v2653 = vadd.f32 %v2640, %v2652
    %v2654 = vpop.f32.mrf.mxu0
    %2655 = vdwg.mxu0
    %2656 = vmatpush.bf16.msra.mxu0 %v2605
    %2657 = vmatpush.bf16.msra.mxu0 %v2604
    %2658 = vmatpush.bf16.msra.mxu0 %v2603
    %2659 = vmatpush.bf16.msra.mxu0 %v2602
    %2660 = vmatpush.bf16.msra.mxu0 %v2601
    %2661 = vmatpush.bf16.msra.mxu0 %v2600
    %2662 = vmatpush.bf16.msra.mxu0 %v2599
    %2663 = vmatpush.bf16.msra.mxu0 %v2598
    %2664 = vmatmul.bf16.gmra.mxu0 %v2436
    %v2665 = vpop.f32.mrf.mxu0
    %v2666 = vadd.f32 %v2653, %v2665
    %v2667 = vpop.f32.mrf.mxu0
    %2668 = vdwg.mxu0
    %2669 = vst [vmem:[#allocation14] sm:$0xff] %v2666
    // Predicated region
    $region58: #{tpu_custom_call.1} parent=1 // pred_check
      _
    $region59: #{tpu_custom_call.1} parent=1 // pred_check_branch
      %2671 = sbr.rel (0) target = $region61
    $region60: #{tpu_custom_call.1} parent=1 // pred_region
      %2673 = vsyncadd [#allocation4], 0
      %s2675 = sshll.u32 [#allocation14], 4
      %s2676 = int_to_ptr.vmem [resolvable:$true] %s2675
      %s2677 = sshll.u32 %s7, 4
      %s2678 = int_to_ptr.hbm [resolvable:$true] %s2677
      %2680 = dma.vmem_to_hbm [thread:$0]  %s2676, 128, %s2678, [#allocation4]
    $region61: #{tpu_custom_call.1} parent=1 // pred_fallthru
      _
    // Predicated region
    $region62: #{tpu_custom_call.1} parent=1 // pred_check
      _
    $region63: #{tpu_custom_call.1} parent=1 // pred_check_branch
      %2682 = sbr.rel (0) target = $region65
    $region64: #{tpu_custom_call.1} parent=1 // pred_region
      %2684 = dma.done [#allocation4], 128
    $region65: #{tpu_custom_call.1} parent=1 // pred_fallthru
      _
    %2685 = vsyncpa [#allocation3], 1
    %2686 = vsyncpa [#allocation6], 1
    %2687 = vsyncpa [#allocation9], 1
    %2688 = vsyncpa [#allocation12], 1
    %2689 = vsyncpa [#allocation4], 1

</llo_original>
